<compile_context>
chip_gen: v7x
topology: tpu7x:2x2x1
jax: 0.10.0
libtpu: 0.0.40
codegen_flags: <defaults>
</compile_context>

<pallas_src>
import math
from functools import partial

import jax
import jax.numpy as jnp
from jax.experimental import pallas as pl
from jax.experimental.pallas import tpu as pltpu

_VMEM_LIMIT = 32 * 1024 * 1024          # safe on v5e/v6e/v7x scoped-VMEM budgets
_NEG_INF = -1e9


def _round_up(x, m):
    return ((x + m - 1) // m) * m


def _pick_tile(dim, target):
    for t in (target, 512, 256, 128, 64, 32, 16, 8):
        if t <= dim and dim % t == 0:
            return t
    return dim


def _cparams(dims):
    return pltpu.CompilerParams(dimension_semantics=dims,
                                vmem_limit_bytes=_VMEM_LIMIT)


# ----------------------------- Pallas kernels -----------------------------

def _norm_stats(x, d):
    # statistics over the first `d` (un-padded) lanes only
    lane = jax.lax.broadcasted_iota(jnp.int32, x.shape, x.ndim - 1)
    valid = lane < d
    xm = jnp.where(valid, x, 0.0)
    mean = jnp.sum(xm, axis=-1, keepdims=True) * (1.0 / d)
    diff = jnp.where(valid, x - mean, 0.0)
    var = jnp.sum(diff * diff, axis=-1, keepdims=True) * (1.0 / (d - 1))  # unbiased
    return mean, var


def _norm_kernel(x_ref, a_ref, g_ref, o_ref, *, d, eps):
    x = x_ref[...]
    mean, var = _norm_stats(x, d)
    inv = pl.reciprocal(jnp.sqrt(var) + eps, approx=True)
    o_ref[...] = a_ref[...] * (x - mean) * inv + g_ref[...]


def _linear2d_kernel(x_ref, w_ref, b_ref, o_ref, *, relu):
    # single-K-block matmul: no accumulator / reduction grid axis needed
    r = jnp.dot(x_ref[...].astype(jnp.bfloat16), w_ref[...],
                preferred_element_type=jnp.float32) + b_ref[...]
    if relu:
        r = jnp.maximum(r, 0.0)
    o_ref[...] = r.astype(o_ref.dtype)


def _linear2d_residual_kernel(x_ref, w_ref, b_ref, res_ref, o_ref):
    r = jnp.dot(x_ref[...].astype(jnp.bfloat16), w_ref[...],
                preferred_element_type=jnp.float32) + b_ref[...]
    o_ref[...] = (res_ref[...] + r).astype(o_ref.dtype)


def _linear_acc_kernel(x_ref, w_ref, b_ref, o_ref, acc_ref, *, relu):
    @pl.when(pl.program_id(2) == 0)
    def _():
        acc_ref[...] = jnp.zeros_like(acc_ref)

    acc_ref[...] += jnp.dot(x_ref[...].astype(jnp.bfloat16), w_ref[...],
                            preferred_element_type=jnp.float32)

    @pl.when(pl.program_id(2) == pl.num_programs(2) - 1)
    def _():
        r = acc_ref[...] + b_ref[...]
        if relu:
            r = jnp.maximum(r, 0.0)
        o_ref[...] = r.astype(o_ref.dtype)


def _linear_acc_residual_kernel(x_ref, w_ref, b_ref, res_ref, o_ref, acc_ref):
    @pl.when(pl.program_id(2) == 0)
    def _():
        acc_ref[...] = jnp.zeros_like(acc_ref)

    acc_ref[...] += jnp.dot(x_ref[...].astype(jnp.bfloat16), w_ref[...],
                            preferred_element_type=jnp.float32)

    @pl.when(pl.program_id(2) == pl.num_programs(2) - 1)
    def _():
        o_ref[...] = (res_ref[...] + acc_ref[...] + b_ref[...]).astype(o_ref.dtype)


def _prenorm_linear_kernel(x_ref, a_ref, g_ref, w_ref, b_ref, o_ref, *, d, eps):
    # out = norm(x) @ W + b     (norm fused into the projection)
    x = x_ref[...]
    mean, var = _norm_stats(x, d)
    inv = pl.reciprocal(jnp.sqrt(var) + eps, approx=True)
    x2 = a_ref[...] * (x - mean) * inv + g_ref[...]
    r = jnp.dot(x2.astype(jnp.bfloat16), w_ref[...],
                preferred_element_type=jnp.float32) + b_ref[...]
    o_ref[...] = r.astype(o_ref.dtype)


def _prenorm_ffn_kernel(x_ref, a_ref, g_ref, w1_ref, b1_ref, w2_ref, b2_ref,
                        o_ref, *, d, eps):
    # out = x + W2 @ relu(W1 @ norm(x) + b1) + b2   (dropout = identity)
    x = x_ref[...]
    mean, var = _norm_stats(x, d)
    inv = pl.reciprocal(jnp.sqrt(var) + eps, approx=True)
    x2 = a_ref[...] * (x - mean) * inv + g_ref[...]
    h = jnp.dot(x2.astype(jnp.bfloat16), w1_ref[...],
                preferred_element_type=jnp.float32) + b1_ref[...]
    h = jnp.maximum(h, 0.0)
    y = jnp.dot(h.astype(jnp.bfloat16), w2_ref[...],
                preferred_element_type=jnp.float32) + b2_ref[...]
    o_ref[...] = (x + y).astype(o_ref.dtype)


def _mha_kernel(q_ref, k_ref, v_ref, bias_ref, o_ref, m_sc, l_sc, acc_sc, *, scale):
    ki = pl.program_id(3)

    @pl.when(ki == 0)
    def _():
        m_sc[...] = jnp.full_like(m_sc, -jnp.inf)
        l_sc[...] = jnp.zeros_like(l_sc)
        acc_sc[...] = jnp.zeros_like(acc_sc)

    q = (q_ref[...] * scale).astype(jnp.bfloat16)            # (1, tq, dkp)
    s = jnp.einsum('bqd,bkd->bqk', q, k_ref[...].astype(jnp.bfloat16),
                   preferred_element_type=jnp.float32)       # (1, tq, tk)
    s = s + bias_ref[...]                                    # (1, 1|tq, tk) additive mask

    m_prev = m_sc[...]
    m_new = jnp.maximum(m_prev, jnp.max(s, axis=-1, keepdims=True))
    a = jnp.exp(m_prev - m_new)
    p = jnp.exp(s - m_new)
    l_sc[...] = a * l_sc[...] + jnp.sum(p, axis=-1, keepdims=True)
    acc_sc[...] = a * acc_sc[...] + jnp.einsum(
        'bqk,bkd->bqd', p.astype(jnp.bfloat16), v_ref[...].astype(jnp.bfloat16),
        preferred_element_type=jnp.float32)
    m_sc[...] = m_new

    @pl.when(ki == pl.num_programs(3) - 1)
    def _():
        o_ref[...] = (acc_sc[...] *
                      pl.reciprocal(l_sc[...], approx=True)).astype(o_ref.dtype)


# ----------------------------- kernel wrappers -----------------------------

def linear(x, w, b, *, residual=None, relu=False):
    """x:(M,K) f32, w:(K,N) bf16, b:(1,N) f32 -> (M,N) f32; optional fused residual."""
    M, K = x.shape
    N = w.shape[1]
    tm = _pick_tile(M, 256)
    tn = _pick_tile(N, 512)
    out_shape = jax.ShapeDtypeStruct((M, N), jnp.float32)

    if K <= 1024:
        # K resident in one block -> no accumulator / reduction grid axis.
        grid = (M // tm, N // tn)
        x_spec = pl.BlockSpec((tm, K), lambda i, j: (i, 0))
        w_spec = pl.BlockSpec((K, tn), lambda i, j: (0, j))
        b_spec = pl.BlockSpec((1, tn), lambda i, j: (0, j))
        o_spec = pl.BlockSpec((tm, tn), lambda i, j: (i, j))
        cp = _cparams(("parallel", "parallel"))
        if residual is None:
            return pl.pallas_call(
                partial(_linear2d_kernel, relu=relu), grid=grid,
                out_shape=out_shape, in_specs=[x_spec, w_spec, b_spec],
                out_specs=o_spec, compiler_params=cp)(x, w, b)
        r_spec = pl.BlockSpec((tm, tn), lambda i, j: (i, j))
        return pl.pallas_call(
            _linear2d_residual_kernel, grid=grid, out_shape=out_shape,
            in_specs=[x_spec, w_spec, b_spec, r_spec], out_specs=o_spec,
            compiler_params=cp)(x, w, b, residual)

    # Large-K path: tile the reduction dim with an f32 VMEM accumulator.
    tk = _pick_tile(K, 512)
    grid = (M // tm, N // tn, K // tk)
    x_spec = pl.BlockSpec((tm, tk), lambda i, j, k: (i, k))
    w_spec = pl.BlockSpec((tk, tn), lambda i, j, k: (k, j))
    b_spec = pl.BlockSpec((1, tn), lambda i, j, k: (0, j))
    o_spec = pl.BlockSpec((tm, tn), lambda i, j, k: (i, j))
    scratch = [pltpu.VMEM((tm, tn), jnp.float32)]
    cp = _cparams(("parallel", "parallel", "arbitrary"))
    if residual is None:
        return pl.pallas_call(
            partial(_linear_acc_kernel, relu=relu), grid=grid, out_shape=out_shape,
            in_specs=[x_spec, w_spec, b_spec], out_specs=o_spec,
            scratch_shapes=scratch, compiler_params=cp)(x, w, b)
    r_spec = pl.BlockSpec((tm, tn), lambda i, j, k: (i, j))
    return pl.pallas_call(
        _linear_acc_residual_kernel, grid=grid, out_shape=out_shape,
        in_specs=[x_spec, w_spec, b_spec, r_spec], out_specs=o_spec,
        scratch_shapes=scratch, compiler_params=cp)(x, w, b, residual)


def prenorm_linear(x2d, norm_p, w, b, *, d, eps=1e-6):
    """out = norm(x) @ w + b, with the pre-norm fused into the projection kernel."""
    M, K = x2d.shape
    N = w.shape[1]
    tm = _pick_tile(M, 256)
    tn = _pick_tile(N, 512)
    grid = (M // tm, N // tn)
    return pl.pallas_call(
        partial(_prenorm_linear_kernel, d=d, eps=eps), grid=grid,
        out_shape=jax.ShapeDtypeStruct((M, N), jnp.float32),
        in_specs=[pl.BlockSpec((tm, K), lambda i, j: (i, 0)),
                  pl.BlockSpec((1, K), lambda i, j: (0, 0)),
                  pl.BlockSpec((1, K), lambda i, j: (0, 0)),
                  pl.BlockSpec((K, tn), lambda i, j: (0, j)),
                  pl.BlockSpec((1, tn), lambda i, j: (0, j))],
        out_specs=pl.BlockSpec((tm, tn), lambda i, j: (i, j)),
        compiler_params=_cparams(("parallel", "parallel")),
    )(x2d, norm_p['alpha'], norm_p['bias'], w, b)


def norm_apply(x2d, p, *, d, eps=1e-6):
    M, Dp = x2d.shape
    tm = _pick_tile(M, 256)
    return pl.pallas_call(
        partial(_norm_kernel, d=d, eps=eps), grid=(M // tm,),
        out_shape=jax.ShapeDtypeStruct((M, Dp), jnp.float32),
        in_specs=[pl.BlockSpec((tm, Dp), lambda i: (i, 0)),
                  pl.BlockSpec((1, Dp), lambda i: (0, 0)),
                  pl.BlockSpec((1, Dp), lambda i: (0, 0))],
        out_specs=pl.BlockSpec((tm, Dp), lambda i: (i, 0)),
        compiler_params=_cparams(("parallel",)),
    )(x2d, p['alpha'], p['bias'])


def prenorm_ffn(x2d, norm_p, ff_p, *, d, eps=1e-6):
    M, Dp = x2d.shape
    Dffp = ff_p['w1'].shape[1]
    tm = _pick_tile(M, 256)
    return pl.pallas_call(
        partial(_prenorm_ffn_kernel, d=d, eps=eps), grid=(M // tm,),
        out_shape=jax.ShapeDtypeStruct((M, Dp), jnp.float32),
        in_specs=[pl.BlockSpec((tm, Dp), lambda i: (i, 0)),
                  pl.BlockSpec((1, Dp), lambda i: (0, 0)),
                  pl.BlockSpec((1, Dp), lambda i: (0, 0)),
                  pl.BlockSpec((Dp, Dffp), lambda i: (0, 0)),
                  pl.BlockSpec((1, Dffp), lambda i: (0, 0)),
                  pl.BlockSpec((Dffp, Dp), lambda i: (0, 0)),
                  pl.BlockSpec((1, Dp), lambda i: (0, 0))],
        out_specs=pl.BlockSpec((tm, Dp), lambda i: (i, 0)),
        compiler_params=_cparams(("parallel",)),
    )(x2d, norm_p['alpha'], norm_p['bias'],
      ff_p['w1'], ff_p['b1'], ff_p['w2'], ff_p['b2'])


def flash_attention(q_arr, k_arr, v_arr, bias, *, heads, dkp, scale,
                    q_off, k_off, v_off):
    """q_arr:(B,Sq,*), k_arr/v_arr:(B,Sk,*) with heads packed as dkp-wide column
    blocks starting at q_off/k_off/v_off (in block units). bias:(B,1|Sq,Sk) additive."""
    B, Sq, _ = q_arr.shape
    Sk = k_arr.shape[1]
    tq = _pick_tile(Sq, 128)
    tk = _pick_tile(Sk, 128)
    per_query = bias.shape[1] != 1
    if per_query:
        bias_spec = pl.BlockSpec((1, tq, tk), lambda b, h, i, j: (b, i, j))
    else:
        bias_spec = pl.BlockSpec((1, 1, tk), lambda b, h, i, j: (b, 0, j))
    return pl.pallas_call(
        partial(_mha_kernel, scale=scale),
        grid=(B, heads, Sq // tq, Sk // tk),
        out_shape=jax.ShapeDtypeStruct((B, Sq, heads * dkp), jnp.float32),
        in_specs=[
            pl.BlockSpec((1, tq, dkp), lambda b, h, i, j: (b, i, q_off + h)),
            pl.BlockSpec((1, tk, dkp), lambda b, h, i, j: (b, j, k_off + h)),
            pl.BlockSpec((1, tk, dkp), lambda b, h, i, j: (b, j, v_off + h)),
            bias_spec,
        ],
        out_specs=pl.BlockSpec((1, tq, dkp), lambda b, h, i, j: (b, i, h)),
        scratch_shapes=[pltpu.VMEM((1, tq, 1), jnp.float32),
                        pltpu.VMEM((1, tq, 1), jnp.float32),
                        pltpu.VMEM((1, tq, dkp), jnp.float32)],
        compiler_params=_cparams(("parallel", "parallel", "parallel", "arbitrary")),
    )(q_arr, k_arr, v_arr, bias)


# ----------------------------- model (glue) -----------------------------

def positional_encoding(seq, d_model, d_pad):
    pos = jnp.arange(seq, dtype=jnp.float32)[:, None]
    i = jnp.arange(d_model // 2, dtype=jnp.float32)[None, :]
    angle = pos / jnp.power(10000.0, (2.0 * i) / d_model)
    pe = jnp.zeros((seq, d_pad), jnp.float32)
    pe = pe.at[:, 0:d_model:2].set(jnp.sin(angle))
    pe = pe.at[:, 1:d_model:2].set(jnp.cos(angle))
    return pe


def _mask_to_bias(mask, sq_pad, sk_pad):
    # mask: (B, 1 or Sq, Sk); 0 => masked.  Returns additive bias padded so that
    # padded key positions are always masked out.
    mask = mask.astype(jnp.float32)
    _, R, Sk = mask.shape
    bias = jnp.where(mask == 0.0, _NEG_INF, 0.0).astype(jnp.float32)
    pad_r = 0 if R == 1 else sq_pad - R
    return jnp.pad(bias, ((0, 0), (0, pad_r), (0, sk_pad - Sk)),
                   constant_values=_NEG_INF)


def self_attention(p, norm_p, x2d, bias, cfg, B, S):
    # norm(x) fused into the QKV projection; residual (x2d) fused into out-proj.
    H, dkp = cfg['heads'], cfg['dkp']
    qkv = prenorm_linear(x2d, norm_p, p['wqkv'], p['bqkv'], d=cfg['d_model'])
    qkv = qkv.reshape(B, S, 3 * H * dkp)
    o = flash_attention(qkv, qkv, qkv, bias, heads=H, dkp=dkp,
                        scale=1.0 / math.sqrt(cfg['dk']),
                        q_off=0, k_off=H, v_off=2 * H)           # (B, S, H*dkp)
    return linear(o.reshape(B * S, H * dkp), p['wo'], p['bo'], residual=x2d)


def cross_attention(p, norm_p, x2d, kv2d, bias, cfg, B, Sq, Sk):
    H, dkp = cfg['heads'], cfg['dkp']
    q = prenorm_linear(x2d, norm_p, p['wq'], p['bq'],
                       d=cfg['d_model']).reshape(B, Sq, H * dkp)
    kv = linear(kv2d, p['wkv'], p['bkv']).reshape(B, Sk, 2 * H * dkp)
    o = flash_attention(q, kv, kv, bias, heads=H, dkp=dkp,
                        scale=1.0 / math.sqrt(cfg['dk']),
                        q_off=0, k_off=0, v_off=H)
    return linear(o.reshape(B * Sq, H * dkp), p['wo'], p['bo'], residual=x2d)


def encoder_layer(lp, x, bias, cfg):
    B, S, Dp = x.shape
    x2d = x.reshape(B * S, Dp)
    x2d = self_attention(lp['attn'], lp['norm1'], x2d, bias, cfg, B, S)
    x2d = prenorm_ffn(x2d, lp['norm2'], lp['ff'], d=cfg['d_model'])
    return x2d.reshape(B, S, Dp)


def decoder_layer(lp, x, e_out, src_bias, tgt_bias, cfg):
    B, St, Dp = x.shape
    Ss = e_out.shape[1]
    x2d = x.reshape(B * St, Dp)
    x2d = self_attention(lp['attn1'], lp['norm1'], x2d, tgt_bias, cfg, B, St)
    x2d = cross_attention(lp['attn2'], lp['norm2'], x2d,
                          e_out.reshape(B * Ss, Dp), src_bias, cfg, B, St, Ss)
    x2d = prenorm_ffn(x2d, lp['norm3'], lp['ff'], d=cfg['d_model'])
    return x2d.reshape(B, St, Dp)


def encode(p, src, src_bias, cfg):
    B, Ss = src.shape
    Dp = cfg['d_pad']
    S_pad = _round_up(Ss, 8)
    x = jnp.take(p['embed'], src, axis=0)                        # embedding lookup (glue)
    x = x * math.sqrt(cfg['d_model']) + positional_encoding(Ss, cfg['d_model'], Dp)[None]
    x = jnp.pad(x, ((0, 0), (0, S_pad - Ss), (0, 0)))
    for lp in p['layers']:
        x = encoder_layer(lp, x, src_bias, cfg)
    out = norm_apply(x.reshape(B * S_pad, Dp), p['norm'], d=cfg['d_model'])
    return out.reshape(B, S_pad, Dp)


def decode(p, tgt, e_out, src_bias, tgt_bias, cfg):
    B, St = tgt.shape
    Dp = cfg['d_pad']
    S_pad = _round_up(St, 8)
    x = jnp.take(p['embed'], tgt, axis=0)
    x = x * math.sqrt(cfg['d_model']) + positional_encoding(St, cfg['d_model'], Dp)[None]
    x = jnp.pad(x, ((0, 0), (0, S_pad - St), (0, 0)))
    for lp in p['layers']:
        x = decoder_layer(lp, x, e_out, src_bias, tgt_bias, cfg)
    return x                                                     # final norm fused downstream


def transformer_forward(params, src, tgt, src_mask, tgt_mask, cfg):
    # TODO(synk): dropout layers are identity here (eval-mode forward).
    B, Ss = src.shape
    _, St = tgt.shape
    Ss_pad, St_pad = _round_up(Ss, 8), _round_up(St, 8)
    enc_bias = _mask_to_bias(src_mask, Ss_pad, Ss_pad)
    dec_self_bias = _mask_to_bias(tgt_mask, St_pad, St_pad)
    dec_cross_bias = _mask_to_bias(src_mask, St_pad, Ss_pad)
    e_out = encode(params['encoder'], src, enc_bias, cfg)
    d_pre = decode(params['decoder'], tgt, e_out, dec_cross_bias, dec_self_bias, cfg)
    # decoder final norm fused into the output vocab projection
    logits = prenorm_linear(d_pre.reshape(B * St_pad, cfg['d_pad']),
                            params['decoder']['norm'],
                            params['out']['w'], params['out']['b'],
                            d=cfg['d_model'])
    logits = logits.reshape(B, St_pad, -1)
    return logits[:, :St, :cfg['tgt_vocab']]


# ----------------------------- deterministic init -----------------------------

def _dense_w(key, d_in, d_out):
    return jax.random.normal(key, (d_in, d_out), jnp.float32) * 0.02


def _pack_head_cols(w, b, d_in, heads, dk, d_in_pad, dkp):
    wp = jnp.zeros((d_in_pad, heads * dkp), jnp.float32)
    bp = jnp.zeros((heads * dkp,), jnp.float32)
    for h in range(heads):
        wp = wp.at[:d_in, h * dkp:h * dkp + dk].set(w[:, h * dk:(h + 1) * dk])
        bp = bp.at[h * dkp:h * dkp + dk].set(b[h * dk:(h + 1) * dk])
    return wp, bp


def _pack_head_rows(w, b, d_out, heads, dk, d_out_pad, dkp):
    wp = jnp.zeros((heads * dkp, d_out_pad), jnp.float32)
    for h in range(heads):
        wp = wp.at[h * dkp:h * dkp + dk, :d_out].set(w[h * dk:(h + 1) * dk, :])
    bp = jnp.zeros((d_out_pad,), jnp.float32).at[:d_out].set(b)
    return wp, bp


def _init_self_attn(key, cfg):
    D, Dp, H, dk, dkp = (cfg['d_model'], cfg['d_pad'], cfg['heads'],
                         cfg['dk'], cfg['dkp'])
    kq, kk, kv, ko = jax.random.split(key, 4)
    packs = [_pack_head_cols(_dense_w(k, D, D), jnp.zeros((D,), jnp.float32),
                             D, H, dk, Dp, dkp) for k in (kq, kk, kv)]
    wqkv = jnp.concatenate([p[0] for p in packs], axis=1)
    bqkv = jnp.concatenate([p[1] for p in packs])
    wo, bo = _pack_head_rows(_dense_w(ko, D, D), jnp.zeros((D,), jnp.float32),
                             D, H, dk, Dp, dkp)
    return {'wqkv': wqkv.astype(jnp.bfloat16), 'bqkv': bqkv.reshape(1, -1),
            'wo': wo.astype(jnp.bfloat16), 'bo': bo.reshape(1, -1)}


def _init_cross_attn(key, cfg):
    D, Dp, H, dk, dkp = (cfg['d_model'], cfg['d_pad'], cfg['heads'],
                         cfg['dk'], cfg['dkp'])
    kq, kk, kv, ko = jax.random.split(key, 4)
    wq, bq = _pack_head_cols(_dense_w(kq, D, D), jnp.zeros((D,), jnp.float32),
                             D, H, dk, Dp, dkp)
    wk, bk = _pack_head_cols(_dense_w(kk, D, D), jnp.zeros((D,), jnp.float32),
                             D, H, dk, Dp, dkp)
    wv, bv = _pack_head_cols(_dense_w(kv, D, D), jnp.zeros((D,), jnp.float32),
                             D, H, dk, Dp, dkp)
    wo, bo = _pack_head_rows(_dense_w(ko, D, D), jnp.zeros((D,), jnp.float32),
                             D, H, dk, Dp, dkp)
    return {'wq': wq.astype(jnp.bfloat16), 'bq': bq.reshape(1, -1),
            'wkv': jnp.concatenate([wk, wv], axis=1).astype(jnp.bfloat16),
            'bkv': jnp.concatenate([bk, bv]).reshape(1, -1),
            'wo': wo.astype(jnp.bfloat16), 'bo': bo.reshape(1, -1)}


def _init_ff(key, cfg):
    D, Dp, Dff, Dffp = cfg['d_model'], cfg['d_pad'], cfg['d_ff'], cfg['dff_pad']
    k1, k2 = jax.random.split(key)
    w1 = jnp.zeros((Dp, Dffp), jnp.float32).at[:D, :Dff].set(_dense_w(k1, D, Dff))
    w2 = jnp.zeros((Dffp, Dp), jnp.float32).at[:Dff, :D].set(_dense_w(k2, Dff, D))
    return {'w1': w1.astype(jnp.bfloat16), 'b1': jnp.zeros((1, Dffp), jnp.float32),
            'w2': w2.astype(jnp.bfloat16), 'b2': jnp.zeros((1, Dp), jnp.float32)}


def _init_norm(cfg):
    D, Dp = cfg['d_model'], cfg['d_pad']
    return {'alpha': jnp.zeros((1, Dp), jnp.float32).at[:, :D].set(1.0),
            'bias': jnp.zeros((1, Dp), jnp.float32)}


def _init_embed(key, vocab, cfg):
    D, Dp = cfg['d_model'], cfg['d_pad']
    e = jnp.zeros((vocab, Dp), jnp.float32)
    return e.at[:, :D].set(jax.random.normal(key, (vocab, D), jnp.float32) * 0.02)


def _init_enc_layer(key, cfg):
    k1, k2 = jax.random.split(key)
    return {'norm1': _init_norm(cfg), 'norm2': _init_norm(cfg),
            'attn': _init_self_attn(k1, cfg), 'ff': _init_ff(k2, cfg)}


def _init_dec_layer(key, cfg):
    k1, k2, k3 = jax.random.split(key, 3)
    return {'norm1': _init_norm(cfg), 'norm2': _init_norm(cfg), 'norm3': _init_norm(cfg),
            'attn1': _init_self_attn(k1, cfg), 'attn2': _init_cross_attn(k2, cfg),
            'ff': _init_ff(k3, cfg)}


def init_transformer(key, cfg):
    ke, kd, ko, kee, kde = jax.random.split(key, 5)
    D, Dp, Vt, Vp = cfg['d_model'], cfg['d_pad'], cfg['tgt_vocab'], cfg['tgt_vocab_pad']
    enc = {'embed': _init_embed(kee, cfg['src_vocab'], cfg),
           'layers': [_init_enc_layer(jax.random.fold_in(ke, i), cfg)
                      for i in range(cfg['n_enc'])],
           'norm': _init_norm(cfg)}
    dec = {'embed': _init_embed(kde, Vt, cfg),
           'layers': [_init_dec_layer(jax.random.fold_in(kd, i), cfg)
                      for i in range(cfg['n_dec'])],
           'norm': _init_norm(cfg)}
    wout = jnp.zeros((Dp, Vp), jnp.float32).at[:D, :Vt].set(_dense_w(ko, D, Vt))
    out = {'w': wout.astype(jnp.bfloat16), 'b': jnp.zeros((1, Vp), jnp.float32)}
    return {'encoder': enc, 'decoder': dec, 'out': out}


# ----------------------------- main -----------------------------

if __name__ == "__main__":
    src_vocab, tgt_vocab = 13, 11
    d_model, heads = 32, 4
    n_enc, n_dec = 2, 2
    d_ff = 64
    B, Ss, St = 2, 8, 8

    dk = d_model // heads
    cfg = dict(d_model=d_model, heads=heads, dk=dk, d_ff=d_ff,
               d_pad=_round_up(d_model, 128),
               dff_pad=_round_up(d_ff, 128),
               dkp=_round_up(dk, 128),
               src_vocab=src_vocab, tgt_vocab=tgt_vocab,
               tgt_vocab_pad=_round_up(tgt_vocab, 128),
               n_enc=n_enc, n_dec=n_dec)

    params = init_transformer(jax.random.PRNGKey(0), cfg)

    ks, kt = jax.random.split(jax.random.PRNGKey(0), 2)
    src = jax.random.randint(ks, (B, Ss), 0, src_vocab)
    tgt = jax.random.randint(kt, (B, St), 0, tgt_vocab)
    src_mask = jnp.ones((B, 1, Ss), jnp.float32)                           # padding mask
    tgt_mask = jnp.broadcast_to(jnp.tril(jnp.ones((St, St), jnp.float32))[None],
                                (B, St, St))                               # causal mask

    fwd = jax.jit(partial(transformer_forward, cfg=cfg))
    out = fwd(params, src, tgt, src_mask, tgt_mask)
    jax.block_until_ready(out)
    assert out.shape == (B, St, tgt_vocab) and out.dtype == jnp.float32
    print("KERNEL_OK")
</pallas_src>

<mosaic_0001>
module attributes {stable_mosaic.version = 11 : i64} {
  func.func @_prenorm_linear_kernel(%arg0: i32, %arg1: i32, %arg2: memref<16x128xf32, #tpu.memory_space<vmem>>, %arg3: memref<1x128xf32, #tpu.memory_space<vmem>>, %arg4: memref<1x128xf32, #tpu.memory_space<vmem>>, %arg5: memref<128x512xbf16, #tpu.memory_space<vmem>>, %arg6: memref<1x512xf32, #tpu.memory_space<vmem>>, %arg7: memref<16x512xf32, #tpu.memory_space<vmem>>) attributes {dimension_semantics = [#tpu.dimension_semantics<parallel>, #tpu.dimension_semantics<parallel>], iteration_bounds = array<i64: 1, 3>, scalar_prefetch = 0 : i64, scratch_operands = 0 : i64, tpu.core_type = #tpu.core_type<tc>, window_params = [{transform_indices = @transform_0, window_bounds = array<i64: 16, 128>}, {pipeline_mode = #tpu.pipeline_mode<synchronous>, transform_indices = @transform_1, window_bounds = array<i64: 1, 128>}, {pipeline_mode = #tpu.pipeline_mode<synchronous>, transform_indices = @transform_2, window_bounds = array<i64: 1, 128>}, {transform_indices = @transform_3, window_bounds = array<i64: 128, 512>}, {transform_indices = @transform_4, window_bounds = array<i64: 1, 512>}, {transform_indices = @transform_5, window_bounds = array<i64: 16, 512>}]} {
    %c0 = arith.constant 0 : index
    %c0_0 = arith.constant 0 : index
    %0 = vector.load %arg2[%c0, %c0_0] : memref<16x128xf32, #tpu.memory_space<vmem>>, vector<16x128xf32>
    %1 = tpu.iota {dimensions = array<i32: 1>} : vector<16x128xi32>
    %c32_i32 = arith.constant 32 : i32
    %2 = vector.broadcast %c32_i32 : i32 to vector<16x128xi32>
    %3 = arith.cmpi slt, %1, %2 : vector<16x128xi32>
    %cst = arith.constant 0.000000e+00 : f32
    %4 = vector.broadcast %cst : f32 to vector<16x128xf32>
    %5 = arith.select %3, %0, %4 : vector<16x128xi1>, vector<16x128xf32>
    %cst_1 = arith.constant dense<0.000000e+00> : vector<16xf32>
    %6 = vector.multi_reduction <add>, %5, %cst_1 [1] : vector<16x128xf32> to vector<16xf32>
    %7 = vector.shape_cast %6 : vector<16xf32> to vector<16x1xf32>
    %cst_2 = arith.constant 3.125000e-02 : f32
    %8 = vector.broadcast %cst_2 : f32 to vector<16x1xf32>
    %9 = arith.mulf %7, %8 : vector<16x1xf32>
    %10 = vector.broadcast %9 : vector<16x1xf32> to vector<16x128xf32>
    %11 = arith.subf %0, %10 : vector<16x128xf32>
    %cst_3 = arith.constant 0.000000e+00 : f32
    %12 = vector.broadcast %cst_3 : f32 to vector<16x128xf32>
    %13 = arith.select %3, %11, %12 : vector<16x128xi1>, vector<16x128xf32>
    %14 = arith.mulf %13, %13 : vector<16x128xf32>
    %cst_4 = arith.constant dense<0.000000e+00> : vector<16xf32>
    %15 = vector.multi_reduction <add>, %14, %cst_4 [1] : vector<16x128xf32> to vector<16xf32>
    %16 = vector.shape_cast %15 : vector<16xf32> to vector<16x1xf32>
    %cst_5 = arith.constant 0.0322580636 : f32
    %17 = vector.broadcast %cst_5 : f32 to vector<16x1xf32>
    %18 = arith.mulf %16, %17 : vector<16x1xf32>
    %19 = math.sqrt %18 : vector<16x1xf32>
    %cst_6 = arith.constant 9.99999997E-7 : f32
    %20 = vector.broadcast %cst_6 : f32 to vector<16x1xf32>
    %21 = arith.addf %19, %20 : vector<16x1xf32>
    %22 = tpu.reciprocal %21 {approx = true} : vector<16x1xf32> -> vector<16x1xf32>
    %c0_7 = arith.constant 0 : index
    %c0_8 = arith.constant 0 : index
    %23 = vector.load %arg3[%c0_7, %c0_8] : memref<1x128xf32, #tpu.memory_space<vmem>>, vector<1x128xf32>
    %24 = vector.broadcast %9 : vector<16x1xf32> to vector<16x128xf32>
    %25 = arith.subf %0, %24 : vector<16x128xf32>
    %26 = vector.broadcast %23 : vector<1x128xf32> to vector<16x128xf32>
    %27 = arith.mulf %26, %25 : vector<16x128xf32>
    %28 = vector.broadcast %22 : vector<16x1xf32> to vector<16x128xf32>
    %29 = arith.mulf %27, %28 : vector<16x128xf32>
    %c0_9 = arith.constant 0 : index
    %c0_10 = arith.constant 0 : index
    %30 = vector.load %arg4[%c0_9, %c0_10] : memref<1x128xf32, #tpu.memory_space<vmem>>, vector<1x128xf32>
    %31 = vector.broadcast %30 : vector<1x128xf32> to vector<16x128xf32>
    %32 = arith.addf %29, %31 : vector<16x128xf32>
    %33 = arith.truncf %32 : vector<16x128xf32> to vector<16x128xbf16>
    %c0_11 = arith.constant 0 : index
    %c0_12 = arith.constant 0 : index
    %34 = vector.load %arg5[%c0_11, %c0_12] : memref<128x512xbf16, #tpu.memory_space<vmem>>, vector<128x512xbf16>
    %cst_13 = arith.constant dense<0.000000e+00> : vector<16x512xf32>
    %35 = tpu.matmul %33, %34, %cst_13 {dimension_numbers = #tpu.dot_dimension_numbers<[1], [0], [0], [1], [0, 0, 1, 1], [], []>} : vector<16x128xbf16>, vector<128x512xbf16>, vector<16x512xf32> -> vector<16x512xf32>
    %c0_14 = arith.constant 0 : index
    %c0_15 = arith.constant 0 : index
    %36 = vector.load %arg6[%c0_14, %c0_15] : memref<1x512xf32, #tpu.memory_space<vmem>>, vector<1x512xf32>
    %37 = vector.broadcast %36 : vector<1x512xf32> to vector<16x512xf32>
    %38 = arith.addf %35, %37 : vector<16x512xf32>
    %c0_16 = arith.constant 0 : index
    %c0_17 = arith.constant 0 : index
    %39 = vector.load %arg7[%c0_16, %c0_17] : memref<16x512xf32, #tpu.memory_space<vmem>>, vector<16x512xf32>
    tpu.vector_store %arg7[%c0_16, %c0_17], %38 {strides = array<i32>} : memref<16x512xf32, #tpu.memory_space<vmem>>, vector<16x512xf32>,
    return
  }
  func.func @transform_0(%arg0: i32, %arg1: i32) -> (i32, i32) {
    %c0_i32 = arith.constant 0 : i32
    %c0_i32_0 = arith.constant 0 : i32
    return %arg0, %c0_i32 : i32, i32
  }
  func.func @transform_1(%arg0: i32, %arg1: i32) -> (i32, i32) {
    %c0_i32 = arith.constant 0 : i32
    %c0_i32_0 = arith.constant 0 : i32
    %c0_i32_1 = arith.constant 0 : i32
    return %c0_i32, %c0_i32_0 : i32, i32
  }
  func.func @transform_2(%arg0: i32, %arg1: i32) -> (i32, i32) {
    %c0_i32 = arith.constant 0 : i32
    %c0_i32_0 = arith.constant 0 : i32
    %c0_i32_1 = arith.constant 0 : i32
    return %c0_i32, %c0_i32_0 : i32, i32
  }
  func.func @transform_3(%arg0: i32, %arg1: i32) -> (i32, i32) {
    %c0_i32 = arith.constant 0 : i32
    %c0_i32_0 = arith.constant 0 : i32
    return %c0_i32, %arg1 : i32, i32
  }
  func.func @transform_4(%arg0: i32, %arg1: i32) -> (i32, i32) {
    %c0_i32 = arith.constant 0 : i32
    %c0_i32_0 = arith.constant 0 : i32
    return %c0_i32, %arg1 : i32, i32
  }
  func.func @transform_5(%arg0: i32, %arg1: i32) -> (i32, i32) {
    %c0_i32 = arith.constant 0 : i32
    return %arg0, %arg1 : i32, i32
  }
}

module attributes {stable_mosaic.version = 11 : i64} {
  func.func @_mha_kernel(%arg0: i32, %arg1: i32, %arg2: i32, %arg3: i32, %arg4: memref<1x8x128xf32, #tpu.memory_space<vmem>>, %arg5: memref<1x8x128xf32, #tpu.memory_space<vmem>>, %arg6: memref<1x8x128xf32, #tpu.memory_space<vmem>>, %arg7: memref<1x8x8xf32, #tpu.memory_space<vmem>>, %arg8: memref<1x8x128xf32, #tpu.memory_space<vmem>>, %arg9: memref<1x8x1xf32, #tpu.memory_space<vmem>>, %arg10: memref<1x8x1xf32, #tpu.memory_space<vmem>>, %arg11: memref<1x8x128xf32, #tpu.memory_space<vmem>>) attributes {dimension_semantics = [#tpu.dimension_semantics<parallel>, #tpu.dimension_semantics<parallel>, #tpu.dimension_semantics<parallel>, #tpu.dimension_semantics<arbitrary>], iteration_bounds = array<i64: 2, 4, 1, 1>, scalar_prefetch = 0 : i64, scratch_operands = 3 : i64, tpu.core_type = #tpu.core_type<tc>, window_params = [{transform_indices = @transform_0, window_bounds = array<i64: 1, 8, 128>}, {transform_indices = @transform_1, window_bounds = array<i64: 1, 8, 128>}, {transform_indices = @transform_2, window_bounds = array<i64: 1, 8, 128>}, {transform_indices = @transform_3, window_bounds = array<i64: 1, 8, 8>}, {transform_indices = @transform_4, window_bounds = array<i64: 1, 8, 128>}]} {
    %c0_i32 = arith.constant 0 : i32
    %0 = arith.cmpi eq, %arg3, %c0_i32 : i32
    %1 = arith.extui %0 : i1 to i32
    %c0_i32_0 = arith.constant 0 : i32
    %2 = arith.cmpi ne, %1, %c0_i32_0 : i32
    scf.if %2 {
      %cst_36 = arith.constant 0xFF800000 : f32
      %40 = vector.broadcast %cst_36 : f32 to vector<1x8x1xf32>
      %c0_37 = arith.constant 0 : index
      %c0_38 = arith.constant 0 : index
      %c0_39 = arith.constant 0 : index
      %41 = vector.load %arg9[%c0_37, %c0_38, %c0_39] : memref<1x8x1xf32, #tpu.memory_space<vmem>>, vector<1x8x1xf32>
      tpu.vector_store %arg9[%c0_37, %c0_38, %c0_39], %40 {strides = array<i32>} : memref<1x8x1xf32, #tpu.memory_space<vmem>>, vector<1x8x1xf32>,
      %cst_40 = arith.constant 0.000000e+00 : f32
      %42 = vector.broadcast %cst_40 : f32 to vector<1x8x1xf32>
      %c0_41 = arith.constant 0 : index
      %c0_42 = arith.constant 0 : index
      %c0_43 = arith.constant 0 : index
      %43 = vector.load %arg10[%c0_41, %c0_42, %c0_43] : memref<1x8x1xf32, #tpu.memory_space<vmem>>, vector<1x8x1xf32>
      tpu.vector_store %arg10[%c0_41, %c0_42, %c0_43], %42 {strides = array<i32>} : memref<1x8x1xf32, #tpu.memory_space<vmem>>, vector<1x8x1xf32>,
      %cst_44 = arith.constant 0.000000e+00 : f32
      %44 = vector.broadcast %cst_44 : f32 to vector<1x8x128xf32>
      %c0_45 = arith.constant 0 : index
      %c0_46 = arith.constant 0 : index
      %c0_47 = arith.constant 0 : index
      %45 = vector.load %arg11[%c0_45, %c0_46, %c0_47] : memref<1x8x128xf32, #tpu.memory_space<vmem>>, vector<1x8x128xf32>
      tpu.vector_store %arg11[%c0_45, %c0_46, %c0_47], %44 {strides = array<i32>} : memref<1x8x128xf32, #tpu.memory_space<vmem>>, vector<1x8x128xf32>,
    } else {
    }
    %c0 = arith.constant 0 : index
    %c0_1 = arith.constant 0 : index
    %c0_2 = arith.constant 0 : index
    %3 = vector.load %arg4[%c0, %c0_1, %c0_2] : memref<1x8x128xf32, #tpu.memory_space<vmem>>, vector<1x8x128xf32>
    %cst = arith.constant 0.353553385 : f32
    %4 = vector.broadcast %cst : f32 to vector<1x8x128xf32>
    %5 = arith.mulf %3, %4 : vector<1x8x128xf32>
    %6 = arith.truncf %5 : vector<1x8x128xf32> to vector<1x8x128xbf16>
    %c0_3 = arith.constant 0 : index
    %c0_4 = arith.constant 0 : index
    %c0_5 = arith.constant 0 : index
    %7 = vector.load %arg5[%c0_3, %c0_4, %c0_5] : memref<1x8x128xf32, #tpu.memory_space<vmem>>, vector<1x8x128xf32>
    %8 = arith.truncf %7 : vector<1x8x128xf32> to vector<1x8x128xbf16>
    "tpu.trace_start"() <{level = 10 : i32, message = "bqd,bkd->bqk"}> : () -> ()
    %cst_6 = arith.constant dense<0.000000e+00> : vector<1x8x8xf32>
    %9 = tpu.matmul %6, %8, %cst_6 {dimension_numbers = #tpu.dot_dimension_numbers<[2], [2], [1], [1], [0, 0, 0, 1, 1, 1], [0], [0]>} : vector<1x8x128xbf16>, vector<1x8x128xbf16>, vector<1x8x8xf32> -> vector<1x8x8xf32>
    "tpu.trace_stop"() : () -> ()
    %c0_7 = arith.constant 0 : index
    %c0_8 = arith.constant 0 : index
    %c0_9 = arith.constant 0 : index
    %10 = vector.load %arg7[%c0_7, %c0_8, %c0_9] : memref<1x8x8xf32, #tpu.memory_space<vmem>>, vector<1x8x8xf32>
    %11 = arith.addf %9, %10 : vector<1x8x8xf32>
    %c0_10 = arith.constant 0 : index
    %c0_11 = arith.constant 0 : index
    %c0_12 = arith.constant 0 : index
    %12 = vector.load %arg9[%c0_10, %c0_11, %c0_12] : memref<1x8x1xf32, #tpu.memory_space<vmem>>, vector<1x8x1xf32>
    %cst_13 = arith.constant dense<0xFF800000> : vector<1x8xf32>
    %13 = vector.multi_reduction <maximumf>, %11, %cst_13 [2] : vector<1x8x8xf32> to vector<1x8xf32>
    %14 = vector.shape_cast %13 : vector<1x8xf32> to vector<1x8x1xf32>
    %15 = arith.maximumf %12, %14 : vector<1x8x1xf32>
    %16 = arith.subf %12, %15 : vector<1x8x1xf32>
    %17 = math.exp %16 : vector<1x8x1xf32>
    %18 = vector.broadcast %15 : vector<1x8x1xf32> to vector<1x8x8xf32>
    %19 = arith.subf %11, %18 : vector<1x8x8xf32>
    %20 = math.exp %19 : vector<1x8x8xf32>
    %c0_14 = arith.constant 0 : index
    %c0_15 = arith.constant 0 : index
    %c0_16 = arith.constant 0 : index
    %21 = vector.load %arg10[%c0_14, %c0_15, %c0_16] : memref<1x8x1xf32, #tpu.memory_space<vmem>>, vector<1x8x1xf32>
    %22 = arith.mulf %17, %21 : vector<1x8x1xf32>
    %cst_17 = arith.constant dense<0.000000e+00> : vector<1x8xf32>
    %23 = vector.multi_reduction <add>, %20, %cst_17 [2] : vector<1x8x8xf32> to vector<1x8xf32>
    %24 = vector.shape_cast %23 : vector<1x8xf32> to vector<1x8x1xf32>
    %25 = arith.addf %22, %24 : vector<1x8x1xf32>
    %c0_18 = arith.constant 0 : index
    %c0_19 = arith.constant 0 : index
    %c0_20 = arith.constant 0 : index
    %26 = vector.load %arg10[%c0_18, %c0_19, %c0_20] : memref<1x8x1xf32, #tpu.memory_space<vmem>>, vector<1x8x1xf32>
    tpu.vector_store %arg10[%c0_18, %c0_19, %c0_20], %25 {strides = array<i32>} : memref<1x8x1xf32, #tpu.memory_space<vmem>>, vector<1x8x1xf32>,
    %c0_21 = arith.constant 0 : index
    %c0_22 = arith.constant 0 : index
    %c0_23 = arith.constant 0 : index
    %27 = vector.load %arg11[%c0_21, %c0_22, %c0_23] : memref<1x8x128xf32, #tpu.memory_space<vmem>>, vector<1x8x128xf32>
    %28 = vector.broadcast %17 : vector<1x8x1xf32> to vector<1x8x128xf32>
    %29 = arith.mulf %28, %27 : vector<1x8x128xf32>
    %30 = arith.truncf %20 : vector<1x8x8xf32> to vector<1x8x8xbf16>
    %c0_24 = arith.constant 0 : index
    %c0_25 = arith.constant 0 : index
    %c0_26 = arith.constant 0 : index
    %31 = vector.load %arg6[%c0_24, %c0_25, %c0_26] : memref<1x8x128xf32, #tpu.memory_space<vmem>>, vector<1x8x128xf32>
    %32 = arith.truncf %31 : vector<1x8x128xf32> to vector<1x8x128xbf16>
    "tpu.trace_start"() <{level = 10 : i32, message = "bqk,bkd->bqd"}> : () -> ()
    %cst_27 = arith.constant dense<0.000000e+00> : vector<1x8x128xf32>
    %33 = tpu.matmul %30, %32, %cst_27 {dimension_numbers = #tpu.dot_dimension_numbers<[2], [1], [1], [2], [0, 0, 0, 1, 1, 2], [0], [0]>} : vector<1x8x8xbf16>, vector<1x8x128xbf16>, vector<1x8x128xf32> -> vector<1x8x128xf32>
    "tpu.trace_stop"() : () -> ()
    %34 = arith.addf %29, %33 : vector<1x8x128xf32>
    %c0_28 = arith.constant 0 : index
    %c0_29 = arith.constant 0 : index
    %c0_30 = arith.constant 0 : index
    %35 = vector.load %arg11[%c0_28, %c0_29, %c0_30] : memref<1x8x128xf32, #tpu.memory_space<vmem>>, vector<1x8x128xf32>
    tpu.vector_store %arg11[%c0_28, %c0_29, %c0_30], %34 {strides = array<i32>} : memref<1x8x128xf32, #tpu.memory_space<vmem>>, vector<1x8x128xf32>,
    %c0_31 = arith.constant 0 : index
    %c0_32 = arith.constant 0 : index
    %c0_33 = arith.constant 0 : index
    %36 = vector.load %arg9[%c0_31, %c0_32, %c0_33] : memref<1x8x1xf32, #tpu.memory_space<vmem>>, vector<1x8x1xf32>
    tpu.vector_store %arg9[%c0_31, %c0_32, %c0_33], %15 {strides = array<i32>} : memref<1x8x1xf32, #tpu.memory_space<vmem>>, vector<1x8x1xf32>,
    %c0_i32_34 = arith.constant 0 : i32
    %37 = arith.cmpi eq, %arg3, %c0_i32_34 : i32
    %38 = arith.extui %37 : i1 to i32
    %c0_i32_35 = arith.constant 0 : i32
    %39 = arith.cmpi ne, %38, %c0_i32_35 : i32
    scf.if %39 {
      %c0_36 = arith.constant 0 : index
      %c0_37 = arith.constant 0 : index
      %c0_38 = arith.constant 0 : index
      %40 = vector.load %arg11[%c0_36, %c0_37, %c0_38] : memref<1x8x128xf32, #tpu.memory_space<vmem>>, vector<1x8x128xf32>
      %c0_39 = arith.constant 0 : index
      %c0_40 = arith.constant 0 : index
      %c0_41 = arith.constant 0 : index
      %41 = vector.load %arg10[%c0_39, %c0_40, %c0_41] : memref<1x8x1xf32, #tpu.memory_space<vmem>>, vector<1x8x1xf32>
      %42 = tpu.reciprocal %41 {approx = true} : vector<1x8x1xf32> -> vector<1x8x1xf32>
      %43 = vector.broadcast %42 : vector<1x8x1xf32> to vector<1x8x128xf32>
      %44 = arith.mulf %40, %43 : vector<1x8x128xf32>
      %c0_42 = arith.constant 0 : index
      %c0_43 = arith.constant 0 : index
      %c0_44 = arith.constant 0 : index
      %45 = vector.load %arg8[%c0_42, %c0_43, %c0_44] : memref<1x8x128xf32, #tpu.memory_space<vmem>>, vector<1x8x128xf32>
      tpu.vector_store %arg8[%c0_42, %c0_43, %c0_44], %44 {strides = array<i32>} : memref<1x8x128xf32, #tpu.memory_space<vmem>>, vector<1x8x128xf32>,
    } else {
    }
    return
  }
  func.func @transform_0(%arg0: i32, %arg1: i32, %arg2: i32, %arg3: i32) -> (i32, i32, i32) {
    %c0_i32 = arith.constant 0 : i32
    %0 = arith.addi %c0_i32, %arg1 : i32
    %c0_i32_0 = arith.constant 0 : i32
    return %arg0, %arg2, %0 : i32, i32, i32
  }
  func.func @transform_1(%arg0: i32, %arg1: i32, %arg2: i32, %arg3: i32) -> (i32, i32, i32) {
    %c4_i32 = arith.constant 4 : i32
    %0 = arith.addi %c4_i32, %arg1 : i32
    %c0_i32 = arith.constant 0 : i32
    return %arg0, %arg3, %0 : i32, i32, i32
  }
  func.func @transform_2(%arg0: i32, %arg1: i32, %arg2: i32, %arg3: i32) -> (i32, i32, i32) {
    %c8_i32 = arith.constant 8 : i32
    %0 = arith.addi %c8_i32, %arg1 : i32
    %c0_i32 = arith.constant 0 : i32
    return %arg0, %arg3, %0 : i32, i32, i32
  }
  func.func @transform_3(%arg0: i32, %arg1: i32, %arg2: i32, %arg3: i32) -> (i32, i32, i32) {
    %c0_i32 = arith.constant 0 : i32
    return %arg0, %arg2, %arg3 : i32, i32, i32
  }
  func.func @transform_4(%arg0: i32, %arg1: i32, %arg2: i32, %arg3: i32) -> (i32, i32, i32) {
    %c0_i32 = arith.constant 0 : i32
    return %arg0, %arg2, %arg1 : i32, i32, i32
  }
}

module attributes {stable_mosaic.version = 11 : i64} {
  func.func @_linear2d_residual_kernel(%arg0: i32, %arg1: i32, %arg2: memref<16x512xf32, #tpu.memory_space<vmem>>, %arg3: memref<512x128xbf16, #tpu.memory_space<vmem>>, %arg4: memref<1x128xf32, #tpu.memory_space<vmem>>, %arg5: memref<16x128xf32, #tpu.memory_space<vmem>>, %arg6: memref<16x128xf32, #tpu.memory_space<vmem>>) attributes {dimension_semantics = [#tpu.dimension_semantics<parallel>, #tpu.dimension_semantics<parallel>], iteration_bounds = array<i64: 1, 1>, scalar_prefetch = 0 : i64, scratch_operands = 0 : i64, tpu.core_type = #tpu.core_type<tc>, window_params = [{transform_indices = @transform_0, window_bounds = array<i64: 16, 512>}, {transform_indices = @transform_1, window_bounds = array<i64: 512, 128>}, {transform_indices = @transform_2, window_bounds = array<i64: 1, 128>}, {transform_indices = @transform_3, window_bounds = array<i64: 16, 128>}, {transform_indices = @transform_4, window_bounds = array<i64: 16, 128>}]} {
    %c0 = arith.constant 0 : index
    %c0_0 = arith.constant 0 : index
    %0 = vector.load %arg2[%c0, %c0_0] : memref<16x512xf32, #tpu.memory_space<vmem>>, vector<16x512xf32>
    %1 = arith.truncf %0 : vector<16x512xf32> to vector<16x512xbf16>
    %c0_1 = arith.constant 0 : index
    %c0_2 = arith.constant 0 : index
    %2 = vector.load %arg3[%c0_1, %c0_2] : memref<512x128xbf16, #tpu.memory_space<vmem>>, vector<512x128xbf16>
    %cst = arith.constant dense<0.000000e+00> : vector<16x128xf32>
    %3 = tpu.matmul %1, %2, %cst {dimension_numbers = #tpu.dot_dimension_numbers<[1], [0], [0], [1], [0, 0, 1, 1], [], []>} : vector<16x512xbf16>, vector<512x128xbf16>, vector<16x128xf32> -> vector<16x128xf32>
    %c0_3 = arith.constant 0 : index
    %c0_4 = arith.constant 0 : index
    %4 = vector.load %arg4[%c0_3, %c0_4] : memref<1x128xf32, #tpu.memory_space<vmem>>, vector<1x128xf32>
    %5 = vector.broadcast %4 : vector<1x128xf32> to vector<16x128xf32>
    %6 = arith.addf %3, %5 : vector<16x128xf32>
    %c0_5 = arith.constant 0 : index
    %c0_6 = arith.constant 0 : index
    %7 = vector.load %arg5[%c0_5, %c0_6] : memref<16x128xf32, #tpu.memory_space<vmem>>, vector<16x128xf32>
    %8 = arith.addf %7, %6 : vector<16x128xf32>
    %c0_7 = arith.constant 0 : index
    %c0_8 = arith.constant 0 : index
    %9 = vector.load %arg6[%c0_7, %c0_8] : memref<16x128xf32, #tpu.memory_space<vmem>>, vector<16x128xf32>
    tpu.vector_store %arg6[%c0_7, %c0_8], %8 {strides = array<i32>} : memref<16x128xf32, #tpu.memory_space<vmem>>, vector<16x128xf32>,
    return
  }
  func.func @transform_0(%arg0: i32, %arg1: i32) -> (i32, i32) {
    %c0_i32 = arith.constant 0 : i32
    %c0_i32_0 = arith.constant 0 : i32
    return %arg0, %c0_i32 : i32, i32
  }
  func.func @transform_1(%arg0: i32, %arg1: i32) -> (i32, i32) {
    %c0_i32 = arith.constant 0 : i32
    %c0_i32_0 = arith.constant 0 : i32
    return %c0_i32, %arg1 : i32, i32
  }
  func.func @transform_2(%arg0: i32, %arg1: i32) -> (i32, i32) {
    %c0_i32 = arith.constant 0 : i32
    %c0_i32_0 = arith.constant 0 : i32
    return %c0_i32, %arg1 : i32, i32
  }
  func.func @transform_3(%arg0: i32, %arg1: i32) -> (i32, i32) {
    %c0_i32 = arith.constant 0 : i32
    return %arg0, %arg1 : i32, i32
  }
  func.func @transform_4(%arg0: i32, %arg1: i32) -> (i32, i32) {
    %c0_i32 = arith.constant 0 : i32
    return %arg0, %arg1 : i32, i32
  }
}

module attributes {stable_mosaic.version = 11 : i64} {
  func.func @_prenorm_linear_kernel(%arg0: i32, %arg1: i32, %arg2: memref<16x128xf32, #tpu.memory_space<vmem>>, %arg3: memref<1x128xf32, #tpu.memory_space<vmem>>, %arg4: memref<1x128xf32, #tpu.memory_space<vmem>>, %arg5: memref<128x512xbf16, #tpu.memory_space<vmem>>, %arg6: memref<1x512xf32, #tpu.memory_space<vmem>>, %arg7: memref<16x512xf32, #tpu.memory_space<vmem>>) attributes {dimension_semantics = [#tpu.dimension_semantics<parallel>, #tpu.dimension_semantics<parallel>], iteration_bounds = array<i64: 1, 1>, scalar_prefetch = 0 : i64, scratch_operands = 0 : i64, tpu.core_type = #tpu.core_type<tc>, window_params = [{transform_indices = @transform_0, window_bounds = array<i64: 16, 128>}, {pipeline_mode = #tpu.pipeline_mode<synchronous>, transform_indices = @transform_1, window_bounds = array<i64: 1, 128>}, {pipeline_mode = #tpu.pipeline_mode<synchronous>, transform_indices = @transform_2, window_bounds = array<i64: 1, 128>}, {transform_indices = @transform_3, window_bounds = array<i64: 128, 512>}, {transform_indices = @transform_4, window_bounds = array<i64: 1, 512>}, {transform_indices = @transform_5, window_bounds = array<i64: 16, 512>}]} {
    %c0 = arith.constant 0 : index
    %c0_0 = arith.constant 0 : index
    %0 = vector.load %arg2[%c0, %c0_0] : memref<16x128xf32, #tpu.memory_space<vmem>>, vector<16x128xf32>
    %1 = tpu.iota {dimensions = array<i32: 1>} : vector<16x128xi32>
    %c32_i32 = arith.constant 32 : i32
    %2 = vector.broadcast %c32_i32 : i32 to vector<16x128xi32>
    %3 = arith.cmpi slt, %1, %2 : vector<16x128xi32>
    %cst = arith.constant 0.000000e+00 : f32
    %4 = vector.broadcast %cst : f32 to vector<16x128xf32>
    %5 = arith.select %3, %0, %4 : vector<16x128xi1>, vector<16x128xf32>
    %cst_1 = arith.constant dense<0.000000e+00> : vector<16xf32>
    %6 = vector.multi_reduction <add>, %5, %cst_1 [1] : vector<16x128xf32> to vector<16xf32>
    %7 = vector.shape_cast %6 : vector<16xf32> to vector<16x1xf32>
    %cst_2 = arith.constant 3.125000e-02 : f32
    %8 = vector.broadcast %cst_2 : f32 to vector<16x1xf32>
    %9 = arith.mulf %7, %8 : vector<16x1xf32>
    %10 = vector.broadcast %9 : vector<16x1xf32> to vector<16x128xf32>
    %11 = arith.subf %0, %10 : vector<16x128xf32>
    %cst_3 = arith.constant 0.000000e+00 : f32
    %12 = vector.broadcast %cst_3 : f32 to vector<16x128xf32>
    %13 = arith.select %3, %11, %12 : vector<16x128xi1>, vector<16x128xf32>
    %14 = arith.mulf %13, %13 : vector<16x128xf32>
    %cst_4 = arith.constant dense<0.000000e+00> : vector<16xf32>
    %15 = vector.multi_reduction <add>, %14, %cst_4 [1] : vector<16x128xf32> to vector<16xf32>
    %16 = vector.shape_cast %15 : vector<16xf32> to vector<16x1xf32>
    %cst_5 = arith.constant 0.0322580636 : f32
    %17 = vector.broadcast %cst_5 : f32 to vector<16x1xf32>
    %18 = arith.mulf %16, %17 : vector<16x1xf32>
    %19 = math.sqrt %18 : vector<16x1xf32>
    %cst_6 = arith.constant 9.99999997E-7 : f32
    %20 = vector.broadcast %cst_6 : f32 to vector<16x1xf32>
    %21 = arith.addf %19, %20 : vector<16x1xf32>
    %22 = tpu.reciprocal %21 {approx = true} : vector<16x1xf32> -> vector<16x1xf32>
    %c0_7 = arith.constant 0 : index
    %c0_8 = arith.constant 0 : index
    %23 = vector.load %arg3[%c0_7, %c0_8] : memref<1x128xf32, #tpu.memory_space<vmem>>, vector<1x128xf32>
    %24 = vector.broadcast %9 : vector<16x1xf32> to vector<16x128xf32>
    %25 = arith.subf %0, %24 : vector<16x128xf32>
    %26 = vector.broadcast %23 : vector<1x128xf32> to vector<16x128xf32>
    %27 = arith.mulf %26, %25 : vector<16x128xf32>
    %28 = vector.broadcast %22 : vector<16x1xf32> to vector<16x128xf32>
    %29 = arith.mulf %27, %28 : vector<16x128xf32>
    %c0_9 = arith.constant 0 : index
    %c0_10 = arith.constant 0 : index
    %30 = vector.load %arg4[%c0_9, %c0_10] : memref<1x128xf32, #tpu.memory_space<vmem>>, vector<1x128xf32>
    %31 = vector.broadcast %30 : vector<1x128xf32> to vector<16x128xf32>
    %32 = arith.addf %29, %31 : vector<16x128xf32>
    %33 = arith.truncf %32 : vector<16x128xf32> to vector<16x128xbf16>
    %c0_11 = arith.constant 0 : index
    %c0_12 = arith.constant 0 : index
    %34 = vector.load %arg5[%c0_11, %c0_12] : memref<128x512xbf16, #tpu.memory_space<vmem>>, vector<128x512xbf16>
    %cst_13 = arith.constant dense<0.000000e+00> : vector<16x512xf32>
    %35 = tpu.matmul %33, %34, %cst_13 {dimension_numbers = #tpu.dot_dimension_numbers<[1], [0], [0], [1], [0, 0, 1, 1], [], []>} : vector<16x128xbf16>, vector<128x512xbf16>, vector<16x512xf32> -> vector<16x512xf32>
    %c0_14 = arith.constant 0 : index
    %c0_15 = arith.constant 0 : index
    %36 = vector.load %arg6[%c0_14, %c0_15] : memref<1x512xf32, #tpu.memory_space<vmem>>, vector<1x512xf32>
    %37 = vector.broadcast %36 : vector<1x512xf32> to vector<16x512xf32>
    %38 = arith.addf %35, %37 : vector<16x512xf32>
    %c0_16 = arith.constant 0 : index
    %c0_17 = arith.constant 0 : index
    %39 = vector.load %arg7[%c0_16, %c0_17] : memref<16x512xf32, #tpu.memory_space<vmem>>, vector<16x512xf32>
    tpu.vector_store %arg7[%c0_16, %c0_17], %38 {strides = array<i32>} : memref<16x512xf32, #tpu.memory_space<vmem>>, vector<16x512xf32>,
    return
  }
  func.func @transform_0(%arg0: i32, %arg1: i32) -> (i32, i32) {
    %c0_i32 = arith.constant 0 : i32
    %c0_i32_0 = arith.constant 0 : i32
    return %arg0, %c0_i32 : i32, i32
  }
  func.func @transform_1(%arg0: i32, %arg1: i32) -> (i32, i32) {
    %c0_i32 = arith.constant 0 : i32
    %c0_i32_0 = arith.constant 0 : i32
    %c0_i32_1 = arith.constant 0 : i32
    return %c0_i32, %c0_i32_0 : i32, i32
  }
  func.func @transform_2(%arg0: i32, %arg1: i32) -> (i32, i32) {
    %c0_i32 = arith.constant 0 : i32
    %c0_i32_0 = arith.constant 0 : i32
    %c0_i32_1 = arith.constant 0 : i32
    return %c0_i32, %c0_i32_0 : i32, i32
  }
  func.func @transform_3(%arg0: i32, %arg1: i32) -> (i32, i32) {
    %c0_i32 = arith.constant 0 : i32
    %c0_i32_0 = arith.constant 0 : i32
    return %c0_i32, %arg1 : i32, i32
  }
  func.func @transform_4(%arg0: i32, %arg1: i32) -> (i32, i32) {
    %c0_i32 = arith.constant 0 : i32
    %c0_i32_0 = arith.constant 0 : i32
    return %c0_i32, %arg1 : i32, i32
  }
  func.func @transform_5(%arg0: i32, %arg1: i32) -> (i32, i32) {
    %c0_i32 = arith.constant 0 : i32
    return %arg0, %arg1 : i32, i32
  }
}

module attributes {stable_mosaic.version = 11 : i64} {
  func.func @_mha_kernel(%arg0: i32, %arg1: i32, %arg2: i32, %arg3: i32, %arg4: memref<1x8x128xf32, #tpu.memory_space<vmem>>, %arg5: memref<1x8x128xf32, #tpu.memory_space<vmem>>, %arg6: memref<1x8x128xf32, #tpu.memory_space<vmem>>, %arg7: memref<1x1x8xf32, #tpu.memory_space<vmem>>, %arg8: memref<1x8x128xf32, #tpu.memory_space<vmem>>, %arg9: memref<1x8x1xf32, #tpu.memory_space<vmem>>, %arg10: memref<1x8x1xf32, #tpu.memory_space<vmem>>, %arg11: memref<1x8x128xf32, #tpu.memory_space<vmem>>) attributes {dimension_semantics = [#tpu.dimension_semantics<parallel>, #tpu.dimension_semantics<parallel>, #tpu.dimension_semantics<parallel>, #tpu.dimension_semantics<arbitrary>], iteration_bounds = array<i64: 2, 4, 1, 1>, scalar_prefetch = 0 : i64, scratch_operands = 3 : i64, tpu.core_type = #tpu.core_type<tc>, window_params = [{transform_indices = @transform_0, window_bounds = array<i64: 1, 8, 128>}, {transform_indices = @transform_1, window_bounds = array<i64: 1, 8, 128>}, {transform_indices = @transform_2, window_bounds = array<i64: 1, 8, 128>}, {transform_indices = @transform_3, window_bounds = array<i64: 1, 1, 8>}, {transform_indices = @transform_4, window_bounds = array<i64: 1, 8, 128>}]} {
    %c0_i32 = arith.constant 0 : i32
    %0 = arith.cmpi eq, %arg3, %c0_i32 : i32
    %1 = arith.extui %0 : i1 to i32
    %c0_i32_0 = arith.constant 0 : i32
    %2 = arith.cmpi ne, %1, %c0_i32_0 : i32
    scf.if %2 {
      %cst_36 = arith.constant 0xFF800000 : f32
      %41 = vector.broadcast %cst_36 : f32 to vector<1x8x1xf32>
      %c0_37 = arith.constant 0 : index
      %c0_38 = arith.constant 0 : index
      %c0_39 = arith.constant 0 : index
      %42 = vector.load %arg9[%c0_37, %c0_38, %c0_39] : memref<1x8x1xf32, #tpu.memory_space<vmem>>, vector<1x8x1xf32>
      tpu.vector_store %arg9[%c0_37, %c0_38, %c0_39], %41 {strides = array<i32>} : memref<1x8x1xf32, #tpu.memory_space<vmem>>, vector<1x8x1xf32>,
      %cst_40 = arith.constant 0.000000e+00 : f32
      %43 = vector.broadcast %cst_40 : f32 to vector<1x8x1xf32>
      %c0_41 = arith.constant 0 : index
      %c0_42 = arith.constant 0 : index
      %c0_43 = arith.constant 0 : index
      %44 = vector.load %arg10[%c0_41, %c0_42, %c0_43] : memref<1x8x1xf32, #tpu.memory_space<vmem>>, vector<1x8x1xf32>
      tpu.vector_store %arg10[%c0_41, %c0_42, %c0_43], %43 {strides = array<i32>} : memref<1x8x1xf32, #tpu.memory_space<vmem>>, vector<1x8x1xf32>,
      %cst_44 = arith.constant 0.000000e+00 : f32
      %45 = vector.broadcast %cst_44 : f32 to vector<1x8x128xf32>
      %c0_45 = arith.constant 0 : index
      %c0_46 = arith.constant 0 : index
      %c0_47 = arith.constant 0 : index
      %46 = vector.load %arg11[%c0_45, %c0_46, %c0_47] : memref<1x8x128xf32, #tpu.memory_space<vmem>>, vector<1x8x128xf32>
      tpu.vector_store %arg11[%c0_45, %c0_46, %c0_47], %45 {strides = array<i32>} : memref<1x8x128xf32, #tpu.memory_space<vmem>>, vector<1x8x128xf32>,
    } else {
    }
    %c0 = arith.constant 0 : index
    %c0_1 = arith.constant 0 : index
    %c0_2 = arith.constant 0 : index
    %3 = vector.load %arg4[%c0, %c0_1, %c0_2] : memref<1x8x128xf32, #tpu.memory_space<vmem>>, vector<1x8x128xf32>
    %cst = arith.constant 0.353553385 : f32
    %4 = vector.broadcast %cst : f32 to vector<1x8x128xf32>
    %5 = arith.mulf %3, %4 : vector<1x8x128xf32>
    %6 = arith.truncf %5 : vector<1x8x128xf32> to vector<1x8x128xbf16>
    %c0_3 = arith.constant 0 : index
    %c0_4 = arith.constant 0 : index
    %c0_5 = arith.constant 0 : index
    %7 = vector.load %arg5[%c0_3, %c0_4, %c0_5] : memref<1x8x128xf32, #tpu.memory_space<vmem>>, vector<1x8x128xf32>
    %8 = arith.truncf %7 : vector<1x8x128xf32> to vector<1x8x128xbf16>
    "tpu.trace_start"() <{level = 10 : i32, message = "bqd,bkd->bqk"}> : () -> ()
    %cst_6 = arith.constant dense<0.000000e+00> : vector<1x8x8xf32>
    %9 = tpu.matmul %6, %8, %cst_6 {dimension_numbers = #tpu.dot_dimension_numbers<[2], [2], [1], [1], [0, 0, 0, 1, 1, 1], [0], [0]>} : vector<1x8x128xbf16>, vector<1x8x128xbf16>, vector<1x8x8xf32> -> vector<1x8x8xf32>
    "tpu.trace_stop"() : () -> ()
    %c0_7 = arith.constant 0 : index
    %c0_8 = arith.constant 0 : index
    %c0_9 = arith.constant 0 : index
    %10 = vector.load %arg7[%c0_7, %c0_8, %c0_9] : memref<1x1x8xf32, #tpu.memory_space<vmem>>, vector<1x1x8xf32>
    %11 = vector.broadcast %10 : vector<1x1x8xf32> to vector<1x8x8xf32>
    %12 = arith.addf %9, %11 : vector<1x8x8xf32>
    %c0_10 = arith.constant 0 : index
    %c0_11 = arith.constant 0 : index
    %c0_12 = arith.constant 0 : index
    %13 = vector.load %arg9[%c0_10, %c0_11, %c0_12] : memref<1x8x1xf32, #tpu.memory_space<vmem>>, vector<1x8x1xf32>
    %cst_13 = arith.constant dense<0xFF800000> : vector<1x8xf32>
    %14 = vector.multi_reduction <maximumf>, %12, %cst_13 [2] : vector<1x8x8xf32> to vector<1x8xf32>
    %15 = vector.shape_cast %14 : vector<1x8xf32> to vector<1x8x1xf32>
    %16 = arith.maximumf %13, %15 : vector<1x8x1xf32>
    %17 = arith.subf %13, %16 : vector<1x8x1xf32>
    %18 = math.exp %17 : vector<1x8x1xf32>
    %19 = vector.broadcast %16 : vector<1x8x1xf32> to vector<1x8x8xf32>
    %20 = arith.subf %12, %19 : vector<1x8x8xf32>
    %21 = math.exp %20 : vector<1x8x8xf32>
    %c0_14 = arith.constant 0 : index
    %c0_15 = arith.constant 0 : index
    %c0_16 = arith.constant 0 : index
    %22 = vector.load %arg10[%c0_14, %c0_15, %c0_16] : memref<1x8x1xf32, #tpu.memory_space<vmem>>, vector<1x8x1xf32>
    %23 = arith.mulf %18, %22 : vector<1x8x1xf32>
    %cst_17 = arith.constant dense<0.000000e+00> : vector<1x8xf32>
    %24 = vector.multi_reduction <add>, %21, %cst_17 [2] : vector<1x8x8xf32> to vector<1x8xf32>
    %25 = vector.shape_cast %24 : vector<1x8xf32> to vector<1x8x1xf32>
    %26 = arith.addf %23, %25 : vector<1x8x1xf32>
    %c0_18 = arith.constant 0 : index
    %c0_19 = arith.constant 0 : index
    %c0_20 = arith.constant 0 : index
    %27 = vector.load %arg10[%c0_18, %c0_19, %c0_20] : memref<1x8x1xf32, #tpu.memory_space<vmem>>, vector<1x8x1xf32>
    tpu.vector_store %arg10[%c0_18, %c0_19, %c0_20], %26 {strides = array<i32>} : memref<1x8x1xf32, #tpu.memory_space<vmem>>, vector<1x8x1xf32>,
    %c0_21 = arith.constant 0 : index
    %c0_22 = arith.constant 0 : index
    %c0_23 = arith.constant 0 : index
    %28 = vector.load %arg11[%c0_21, %c0_22, %c0_23] : memref<1x8x128xf32, #tpu.memory_space<vmem>>, vector<1x8x128xf32>
    %29 = vector.broadcast %18 : vector<1x8x1xf32> to vector<1x8x128xf32>
    %30 = arith.mulf %29, %28 : vector<1x8x128xf32>
    %31 = arith.truncf %21 : vector<1x8x8xf32> to vector<1x8x8xbf16>
    %c0_24 = arith.constant 0 : index
    %c0_25 = arith.constant 0 : index
    %c0_26 = arith.constant 0 : index
    %32 = vector.load %arg6[%c0_24, %c0_25, %c0_26] : memref<1x8x128xf32, #tpu.memory_space<vmem>>, vector<1x8x128xf32>
    %33 = arith.truncf %32 : vector<1x8x128xf32> to vector<1x8x128xbf16>
    "tpu.trace_start"() <{level = 10 : i32, message = "bqk,bkd->bqd"}> : () -> ()
    %cst_27 = arith.constant dense<0.000000e+00> : vector<1x8x128xf32>
    %34 = tpu.matmul %31, %33, %cst_27 {dimension_numbers = #tpu.dot_dimension_numbers<[2], [1], [1], [2], [0, 0, 0, 1, 1, 2], [0], [0]>} : vector<1x8x8xbf16>, vector<1x8x128xbf16>, vector<1x8x128xf32> -> vector<1x8x128xf32>
    "tpu.trace_stop"() : () -> ()
    %35 = arith.addf %30, %34 : vector<1x8x128xf32>
    %c0_28 = arith.constant 0 : index
    %c0_29 = arith.constant 0 : index
    %c0_30 = arith.constant 0 : index
    %36 = vector.load %arg11[%c0_28, %c0_29, %c0_30] : memref<1x8x128xf32, #tpu.memory_space<vmem>>, vector<1x8x128xf32>
    tpu.vector_store %arg11[%c0_28, %c0_29, %c0_30], %35 {strides = array<i32>} : memref<1x8x128xf32, #tpu.memory_space<vmem>>, vector<1x8x128xf32>,
    %c0_31 = arith.constant 0 : index
    %c0_32 = arith.constant 0 : index
    %c0_33 = arith.constant 0 : index
    %37 = vector.load %arg9[%c0_31, %c0_32, %c0_33] : memref<1x8x1xf32, #tpu.memory_space<vmem>>, vector<1x8x1xf32>
    tpu.vector_store %arg9[%c0_31, %c0_32, %c0_33], %16 {strides = array<i32>} : memref<1x8x1xf32, #tpu.memory_space<vmem>>, vector<1x8x1xf32>,
    %c0_i32_34 = arith.constant 0 : i32
    %38 = arith.cmpi eq, %arg3, %c0_i32_34 : i32
    %39 = arith.extui %38 : i1 to i32
    %c0_i32_35 = arith.constant 0 : i32
    %40 = arith.cmpi ne, %39, %c0_i32_35 : i32
    scf.if %40 {
      %c0_36 = arith.constant 0 : index
      %c0_37 = arith.constant 0 : index
      %c0_38 = arith.constant 0 : index
      %41 = vector.load %arg11[%c0_36, %c0_37, %c0_38] : memref<1x8x128xf32, #tpu.memory_space<vmem>>, vector<1x8x128xf32>
      %c0_39 = arith.constant 0 : index
      %c0_40 = arith.constant 0 : index
      %c0_41 = arith.constant 0 : index
      %42 = vector.load %arg10[%c0_39, %c0_40, %c0_41] : memref<1x8x1xf32, #tpu.memory_space<vmem>>, vector<1x8x1xf32>
      %43 = tpu.reciprocal %42 {approx = true} : vector<1x8x1xf32> -> vector<1x8x1xf32>
      %44 = vector.broadcast %43 : vector<1x8x1xf32> to vector<1x8x128xf32>
      %45 = arith.mulf %41, %44 : vector<1x8x128xf32>
      %c0_42 = arith.constant 0 : index
      %c0_43 = arith.constant 0 : index
      %c0_44 = arith.constant 0 : index
      %46 = vector.load %arg8[%c0_42, %c0_43, %c0_44] : memref<1x8x128xf32, #tpu.memory_space<vmem>>, vector<1x8x128xf32>
      tpu.vector_store %arg8[%c0_42, %c0_43, %c0_44], %45 {strides = array<i32>} : memref<1x8x128xf32, #tpu.memory_space<vmem>>, vector<1x8x128xf32>,
    } else {
    }
    return
  }
  func.func @transform_0(%arg0: i32, %arg1: i32, %arg2: i32, %arg3: i32) -> (i32, i32, i32) {
    %c0_i32 = arith.constant 0 : i32
    %0 = arith.addi %c0_i32, %arg1 : i32
    %c0_i32_0 = arith.constant 0 : i32
    return %arg0, %arg2, %0 : i32, i32, i32
  }
  func.func @transform_1(%arg0: i32, %arg1: i32, %arg2: i32, %arg3: i32) -> (i32, i32, i32) {
    %c4_i32 = arith.constant 4 : i32
    %0 = arith.addi %c4_i32, %arg1 : i32
    %c0_i32 = arith.constant 0 : i32
    return %arg0, %arg3, %0 : i32, i32, i32
  }
  func.func @transform_2(%arg0: i32, %arg1: i32, %arg2: i32, %arg3: i32) -> (i32, i32, i32) {
    %c8_i32 = arith.constant 8 : i32
    %0 = arith.addi %c8_i32, %arg1 : i32
    %c0_i32 = arith.constant 0 : i32
    return %arg0, %arg3, %0 : i32, i32, i32
  }
  func.func @transform_3(%arg0: i32, %arg1: i32, %arg2: i32, %arg3: i32) -> (i32, i32, i32) {
    %c0_i32 = arith.constant 0 : i32
    %c0_i32_0 = arith.constant 0 : i32
    return %arg0, %c0_i32, %arg3 : i32, i32, i32
  }
  func.func @transform_4(%arg0: i32, %arg1: i32, %arg2: i32, %arg3: i32) -> (i32, i32, i32) {
    %c0_i32 = arith.constant 0 : i32
    return %arg0, %arg2, %arg1 : i32, i32, i32
  }
}

module attributes {stable_mosaic.version = 11 : i64} {
  func.func @_prenorm_ffn_kernel(%arg0: i32, %arg1: memref<16x128xf32, #tpu.memory_space<vmem>>, %arg2: memref<1x128xf32, #tpu.memory_space<vmem>>, %arg3: memref<1x128xf32, #tpu.memory_space<vmem>>, %arg4: memref<128x128xbf16, #tpu.memory_space<vmem>>, %arg5: memref<1x128xf32, #tpu.memory_space<vmem>>, %arg6: memref<128x128xbf16, #tpu.memory_space<vmem>>, %arg7: memref<1x128xf32, #tpu.memory_space<vmem>>, %arg8: memref<16x128xf32, #tpu.memory_space<vmem>>) attributes {dimension_semantics = [#tpu.dimension_semantics<parallel>], iteration_bounds = array<i64: 1>, scalar_prefetch = 0 : i64, scratch_operands = 0 : i64, tpu.core_type = #tpu.core_type<tc>, window_params = [{transform_indices = @transform_0, window_bounds = array<i64: 16, 128>}, {pipeline_mode = #tpu.pipeline_mode<synchronous>, transform_indices = @transform_1, window_bounds = array<i64: 1, 128>}, {pipeline_mode = #tpu.pipeline_mode<synchronous>, transform_indices = @transform_2, window_bounds = array<i64: 1, 128>}, {pipeline_mode = #tpu.pipeline_mode<synchronous>, transform_indices = @transform_3, window_bounds = array<i64: 128, 128>}, {pipeline_mode = #tpu.pipeline_mode<synchronous>, transform_indices = @transform_4, window_bounds = array<i64: 1, 128>}, {pipeline_mode = #tpu.pipeline_mode<synchronous>, transform_indices = @transform_5, window_bounds = array<i64: 128, 128>}, {pipeline_mode = #tpu.pipeline_mode<synchronous>, transform_indices = @transform_6, window_bounds = array<i64: 1, 128>}, {transform_indices = @transform_7, window_bounds = array<i64: 16, 128>}]} {
    %c0 = arith.constant 0 : index
    %c0_0 = arith.constant 0 : index
    %0 = vector.load %arg1[%c0, %c0_0] : memref<16x128xf32, #tpu.memory_space<vmem>>, vector<16x128xf32>
    %1 = tpu.iota {dimensions = array<i32: 1>} : vector<16x128xi32>
    %c32_i32 = arith.constant 32 : i32
    %2 = vector.broadcast %c32_i32 : i32 to vector<16x128xi32>
    %3 = arith.cmpi slt, %1, %2 : vector<16x128xi32>
    %cst = arith.constant 0.000000e+00 : f32
    %4 = vector.broadcast %cst : f32 to vector<16x128xf32>
    %5 = arith.select %3, %0, %4 : vector<16x128xi1>, vector<16x128xf32>
    %cst_1 = arith.constant dense<0.000000e+00> : vector<16xf32>
    %6 = vector.multi_reduction <add>, %5, %cst_1 [1] : vector<16x128xf32> to vector<16xf32>
    %7 = vector.shape_cast %6 : vector<16xf32> to vector<16x1xf32>
    %cst_2 = arith.constant 3.125000e-02 : f32
    %8 = vector.broadcast %cst_2 : f32 to vector<16x1xf32>
    %9 = arith.mulf %7, %8 : vector<16x1xf32>
    %10 = vector.broadcast %9 : vector<16x1xf32> to vector<16x128xf32>
    %11 = arith.subf %0, %10 : vector<16x128xf32>
    %cst_3 = arith.constant 0.000000e+00 : f32
    %12 = vector.broadcast %cst_3 : f32 to vector<16x128xf32>
    %13 = arith.select %3, %11, %12 : vector<16x128xi1>, vector<16x128xf32>
    %14 = arith.mulf %13, %13 : vector<16x128xf32>
    %cst_4 = arith.constant dense<0.000000e+00> : vector<16xf32>
    %15 = vector.multi_reduction <add>, %14, %cst_4 [1] : vector<16x128xf32> to vector<16xf32>
    %16 = vector.shape_cast %15 : vector<16xf32> to vector<16x1xf32>
    %cst_5 = arith.constant 0.0322580636 : f32
    %17 = vector.broadcast %cst_5 : f32 to vector<16x1xf32>
    %18 = arith.mulf %16, %17 : vector<16x1xf32>
    %19 = math.sqrt %18 : vector<16x1xf32>
    %cst_6 = arith.constant 9.99999997E-7 : f32
    %20 = vector.broadcast %cst_6 : f32 to vector<16x1xf32>
    %21 = arith.addf %19, %20 : vector<16x1xf32>
    %22 = tpu.reciprocal %21 {approx = true} : vector<16x1xf32> -> vector<16x1xf32>
    %c0_7 = arith.constant 0 : index
    %c0_8 = arith.constant 0 : index
    %23 = vector.load %arg2[%c0_7, %c0_8] : memref<1x128xf32, #tpu.memory_space<vmem>>, vector<1x128xf32>
    %24 = vector.broadcast %9 : vector<16x1xf32> to vector<16x128xf32>
    %25 = arith.subf %0, %24 : vector<16x128xf32>
    %26 = vector.broadcast %23 : vector<1x128xf32> to vector<16x128xf32>
    %27 = arith.mulf %26, %25 : vector<16x128xf32>
    %28 = vector.broadcast %22 : vector<16x1xf32> to vector<16x128xf32>
    %29 = arith.mulf %27, %28 : vector<16x128xf32>
    %c0_9 = arith.constant 0 : index
    %c0_10 = arith.constant 0 : index
    %30 = vector.load %arg3[%c0_9, %c0_10] : memref<1x128xf32, #tpu.memory_space<vmem>>, vector<1x128xf32>
    %31 = vector.broadcast %30 : vector<1x128xf32> to vector<16x128xf32>
    %32 = arith.addf %29, %31 : vector<16x128xf32>
    %33 = arith.truncf %32 : vector<16x128xf32> to vector<16x128xbf16>
    %c0_11 = arith.constant 0 : index
    %c0_12 = arith.constant 0 : index
    %34 = vector.load %arg4[%c0_11, %c0_12] : memref<128x128xbf16, #tpu.memory_space<vmem>>, vector<128x128xbf16>
    %cst_13 = arith.constant dense<0.000000e+00> : vector<16x128xf32>
    %35 = tpu.matmul %33, %34, %cst_13 {dimension_numbers = #tpu.dot_dimension_numbers<[1], [0], [0], [1], [0, 0, 1, 1], [], []>} : vector<16x128xbf16>, vector<128x128xbf16>, vector<16x128xf32> -> vector<16x128xf32>
    %c0_14 = arith.constant 0 : index
    %c0_15 = arith.constant 0 : index
    %36 = vector.load %arg5[%c0_14, %c0_15] : memref<1x128xf32, #tpu.memory_space<vmem>>, vector<1x128xf32>
    %37 = vector.broadcast %36 : vector<1x128xf32> to vector<16x128xf32>
    %38 = arith.addf %35, %37 : vector<16x128xf32>
    %cst_16 = arith.constant 0.000000e+00 : f32
    %39 = vector.broadcast %cst_16 : f32 to vector<16x128xf32>
    %40 = arith.maximumf %38, %39 : vector<16x128xf32>
    %41 = arith.truncf %40 : vector<16x128xf32> to vector<16x128xbf16>
    %c0_17 = arith.constant 0 : index
    %c0_18 = arith.constant 0 : index
    %42 = vector.load %arg6[%c0_17, %c0_18] : memref<128x128xbf16, #tpu.memory_space<vmem>>, vector<128x128xbf16>
    %cst_19 = arith.constant dense<0.000000e+00> : vector<16x128xf32>
    %43 = tpu.matmul %41, %42, %cst_19 {dimension_numbers = #tpu.dot_dimension_numbers<[1], [0], [0], [1], [0, 0, 1, 1], [], []>} : vector<16x128xbf16>, vector<128x128xbf16>, vector<16x128xf32> -> vector<16x128xf32>
    %c0_20 = arith.constant 0 : index
    %c0_21 = arith.constant 0 : index
    %44 = vector.load %arg7[%c0_20, %c0_21] : memref<1x128xf32, #tpu.memory_space<vmem>>, vector<1x128xf32>
    %45 = vector.broadcast %44 : vector<1x128xf32> to vector<16x128xf32>
    %46 = arith.addf %43, %45 : vector<16x128xf32>
    %47 = arith.addf %0, %46 : vector<16x128xf32>
    %c0_22 = arith.constant 0 : index
    %c0_23 = arith.constant 0 : index
    %48 = vector.load %arg8[%c0_22, %c0_23] : memref<16x128xf32, #tpu.memory_space<vmem>>, vector<16x128xf32>
    tpu.vector_store %arg8[%c0_22, %c0_23], %47 {strides = array<i32>} : memref<16x128xf32, #tpu.memory_space<vmem>>, vector<16x128xf32>,
    return
  }
  func.func @transform_0(%arg0: i32) -> (i32, i32) {
    %c0_i32 = arith.constant 0 : i32
    %c0_i32_0 = arith.constant 0 : i32
    return %arg0, %c0_i32 : i32, i32
  }
  func.func @transform_1(%arg0: i32) -> (i32, i32) {
    %c0_i32 = arith.constant 0 : i32
    %c0_i32_0 = arith.constant 0 : i32
    %c0_i32_1 = arith.constant 0 : i32
    return %c0_i32, %c0_i32_0 : i32, i32
  }
  func.func @transform_2(%arg0: i32) -> (i32, i32) {
    %c0_i32 = arith.constant 0 : i32
    %c0_i32_0 = arith.constant 0 : i32
    %c0_i32_1 = arith.constant 0 : i32
    return %c0_i32, %c0_i32_0 : i32, i32
  }
  func.func @transform_3(%arg0: i32) -> (i32, i32) {
    %c0_i32 = arith.constant 0 : i32
    %c0_i32_0 = arith.constant 0 : i32
    %c0_i32_1 = arith.constant 0 : i32
    return %c0_i32, %c0_i32_0 : i32, i32
  }
  func.func @transform_4(%arg0: i32) -> (i32, i32) {
    %c0_i32 = arith.constant 0 : i32
    %c0_i32_0 = arith.constant 0 : i32
    %c0_i32_1 = arith.constant 0 : i32
    return %c0_i32, %c0_i32_0 : i32, i32
  }
  func.func @transform_5(%arg0: i32) -> (i32, i32) {
    %c0_i32 = arith.constant 0 : i32
    %c0_i32_0 = arith.constant 0 : i32
    %c0_i32_1 = arith.constant 0 : i32
    return %c0_i32, %c0_i32_0 : i32, i32
  }
  func.func @transform_6(%arg0: i32) -> (i32, i32) {
    %c0_i32 = arith.constant 0 : i32
    %c0_i32_0 = arith.constant 0 : i32
    %c0_i32_1 = arith.constant 0 : i32
    return %c0_i32, %c0_i32_0 : i32, i32
  }
  func.func @transform_7(%arg0: i32) -> (i32, i32) {
    %c0_i32 = arith.constant 0 : i32
    %c0_i32_0 = arith.constant 0 : i32
    return %arg0, %c0_i32 : i32, i32
  }
}

module attributes {stable_mosaic.version = 11 : i64} {
  func.func @_linear2d_kernel(%arg0: i32, %arg1: i32, %arg2: memref<16x128xf32, #tpu.memory_space<vmem>>, %arg3: memref<128x512xbf16, #tpu.memory_space<vmem>>, %arg4: memref<1x512xf32, #tpu.memory_space<vmem>>, %arg5: memref<16x512xf32, #tpu.memory_space<vmem>>) attributes {dimension_semantics = [#tpu.dimension_semantics<parallel>, #tpu.dimension_semantics<parallel>], iteration_bounds = array<i64: 1, 2>, scalar_prefetch = 0 : i64, scratch_operands = 0 : i64, tpu.core_type = #tpu.core_type<tc>, window_params = [{transform_indices = @transform_0, window_bounds = array<i64: 16, 128>}, {transform_indices = @transform_1, window_bounds = array<i64: 128, 512>}, {transform_indices = @transform_2, window_bounds = array<i64: 1, 512>}, {transform_indices = @transform_3, window_bounds = array<i64: 16, 512>}]} {
    %c0 = arith.constant 0 : index
    %c0_0 = arith.constant 0 : index
    %0 = vector.load %arg2[%c0, %c0_0] : memref<16x128xf32, #tpu.memory_space<vmem>>, vector<16x128xf32>
    %1 = arith.truncf %0 : vector<16x128xf32> to vector<16x128xbf16>
    %c0_1 = arith.constant 0 : index
    %c0_2 = arith.constant 0 : index
    %2 = vector.load %arg3[%c0_1, %c0_2] : memref<128x512xbf16, #tpu.memory_space<vmem>>, vector<128x512xbf16>
    %cst = arith.constant dense<0.000000e+00> : vector<16x512xf32>
    %3 = tpu.matmul %1, %2, %cst {dimension_numbers = #tpu.dot_dimension_numbers<[1], [0], [0], [1], [0, 0, 1, 1], [], []>} : vector<16x128xbf16>, vector<128x512xbf16>, vector<16x512xf32> -> vector<16x512xf32>
    %c0_3 = arith.constant 0 : index
    %c0_4 = arith.constant 0 : index
    %4 = vector.load %arg4[%c0_3, %c0_4] : memref<1x512xf32, #tpu.memory_space<vmem>>, vector<1x512xf32>
    %5 = vector.broadcast %4 : vector<1x512xf32> to vector<16x512xf32>
    %6 = arith.addf %3, %5 : vector<16x512xf32>
    %c0_5 = arith.constant 0 : index
    %c0_6 = arith.constant 0 : index
    %7 = vector.load %arg5[%c0_5, %c0_6] : memref<16x512xf32, #tpu.memory_space<vmem>>, vector<16x512xf32>
    tpu.vector_store %arg5[%c0_5, %c0_6], %6 {strides = array<i32>} : memref<16x512xf32, #tpu.memory_space<vmem>>, vector<16x512xf32>,
    return
  }
  func.func @transform_0(%arg0: i32, %arg1: i32) -> (i32, i32) {
    %c0_i32 = arith.constant 0 : i32
    %c0_i32_0 = arith.constant 0 : i32
    return %arg0, %c0_i32 : i32, i32
  }
  func.func @transform_1(%arg0: i32, %arg1: i32) -> (i32, i32) {
    %c0_i32 = arith.constant 0 : i32
    %c0_i32_0 = arith.constant 0 : i32
    return %c0_i32, %arg1 : i32, i32
  }
  func.func @transform_2(%arg0: i32, %arg1: i32) -> (i32, i32) {
    %c0_i32 = arith.constant 0 : i32
    %c0_i32_0 = arith.constant 0 : i32
    return %c0_i32, %arg1 : i32, i32
  }
  func.func @transform_3(%arg0: i32, %arg1: i32) -> (i32, i32) {
    %c0_i32 = arith.constant 0 : i32
    return %arg0, %arg1 : i32, i32
  }
}

module attributes {stable_mosaic.version = 11 : i64} {
  func.func @_norm_kernel(%arg0: i32, %arg1: memref<16x128xf32, #tpu.memory_space<vmem>>, %arg2: memref<1x128xf32, #tpu.memory_space<vmem>>, %arg3: memref<1x128xf32, #tpu.memory_space<vmem>>, %arg4: memref<16x128xf32, #tpu.memory_space<vmem>>) attributes {dimension_semantics = [#tpu.dimension_semantics<parallel>], iteration_bounds = array<i64: 1>, scalar_prefetch = 0 : i64, scratch_operands = 0 : i64, tpu.core_type = #tpu.core_type<tc>, window_params = [{transform_indices = @transform_0, window_bounds = array<i64: 16, 128>}, {pipeline_mode = #tpu.pipeline_mode<synchronous>, transform_indices = @transform_1, window_bounds = array<i64: 1, 128>}, {pipeline_mode = #tpu.pipeline_mode<synchronous>, transform_indices = @transform_2, window_bounds = array<i64: 1, 128>}, {transform_indices = @transform_3, window_bounds = array<i64: 16, 128>}]} {
    %c0 = arith.constant 0 : index
    %c0_0 = arith.constant 0 : index
    %0 = vector.load %arg1[%c0, %c0_0] : memref<16x128xf32, #tpu.memory_space<vmem>>, vector<16x128xf32>
    %1 = tpu.iota {dimensions = array<i32: 1>} : vector<16x128xi32>
    %c32_i32 = arith.constant 32 : i32
    %2 = vector.broadcast %c32_i32 : i32 to vector<16x128xi32>
    %3 = arith.cmpi slt, %1, %2 : vector<16x128xi32>
    %cst = arith.constant 0.000000e+00 : f32
    %4 = vector.broadcast %cst : f32 to vector<16x128xf32>
    %5 = arith.select %3, %0, %4 : vector<16x128xi1>, vector<16x128xf32>
    %cst_1 = arith.constant dense<0.000000e+00> : vector<16xf32>
    %6 = vector.multi_reduction <add>, %5, %cst_1 [1] : vector<16x128xf32> to vector<16xf32>
    %7 = vector.shape_cast %6 : vector<16xf32> to vector<16x1xf32>
    %cst_2 = arith.constant 3.125000e-02 : f32
    %8 = vector.broadcast %cst_2 : f32 to vector<16x1xf32>
    %9 = arith.mulf %7, %8 : vector<16x1xf32>
    %10 = vector.broadcast %9 : vector<16x1xf32> to vector<16x128xf32>
    %11 = arith.subf %0, %10 : vector<16x128xf32>
    %cst_3 = arith.constant 0.000000e+00 : f32
    %12 = vector.broadcast %cst_3 : f32 to vector<16x128xf32>
    %13 = arith.select %3, %11, %12 : vector<16x128xi1>, vector<16x128xf32>
    %14 = arith.mulf %13, %13 : vector<16x128xf32>
    %cst_4 = arith.constant dense<0.000000e+00> : vector<16xf32>
    %15 = vector.multi_reduction <add>, %14, %cst_4 [1] : vector<16x128xf32> to vector<16xf32>
    %16 = vector.shape_cast %15 : vector<16xf32> to vector<16x1xf32>
    %cst_5 = arith.constant 0.0322580636 : f32
    %17 = vector.broadcast %cst_5 : f32 to vector<16x1xf32>
    %18 = arith.mulf %16, %17 : vector<16x1xf32>
    %19 = math.sqrt %18 : vector<16x1xf32>
    %cst_6 = arith.constant 9.99999997E-7 : f32
    %20 = vector.broadcast %cst_6 : f32 to vector<16x1xf32>
    %21 = arith.addf %19, %20 : vector<16x1xf32>
    %22 = tpu.reciprocal %21 {approx = true} : vector<16x1xf32> -> vector<16x1xf32>
    %c0_7 = arith.constant 0 : index
    %c0_8 = arith.constant 0 : index
    %23 = vector.load %arg2[%c0_7, %c0_8] : memref<1x128xf32, #tpu.memory_space<vmem>>, vector<1x128xf32>
    %24 = vector.broadcast %9 : vector<16x1xf32> to vector<16x128xf32>
    %25 = arith.subf %0, %24 : vector<16x128xf32>
    %26 = vector.broadcast %23 : vector<1x128xf32> to vector<16x128xf32>
    %27 = arith.mulf %26, %25 : vector<16x128xf32>
    %28 = vector.broadcast %22 : vector<16x1xf32> to vector<16x128xf32>
    %29 = arith.mulf %27, %28 : vector<16x128xf32>
    %c0_9 = arith.constant 0 : index
    %c0_10 = arith.constant 0 : index
    %30 = vector.load %arg3[%c0_9, %c0_10] : memref<1x128xf32, #tpu.memory_space<vmem>>, vector<1x128xf32>
    %31 = vector.broadcast %30 : vector<1x128xf32> to vector<16x128xf32>
    %32 = arith.addf %29, %31 : vector<16x128xf32>
    %c0_11 = arith.constant 0 : index
    %c0_12 = arith.constant 0 : index
    %33 = vector.load %arg4[%c0_11, %c0_12] : memref<16x128xf32, #tpu.memory_space<vmem>>, vector<16x128xf32>
    tpu.vector_store %arg4[%c0_11, %c0_12], %32 {strides = array<i32>} : memref<16x128xf32, #tpu.memory_space<vmem>>, vector<16x128xf32>,
    return
  }
  func.func @transform_0(%arg0: i32) -> (i32, i32) {
    %c0_i32 = arith.constant 0 : i32
    %c0_i32_0 = arith.constant 0 : i32
    return %arg0, %c0_i32 : i32, i32
  }
  func.func @transform_1(%arg0: i32) -> (i32, i32) {
    %c0_i32 = arith.constant 0 : i32
    %c0_i32_0 = arith.constant 0 : i32
    %c0_i32_1 = arith.constant 0 : i32
    return %c0_i32, %c0_i32_0 : i32, i32
  }
  func.func @transform_2(%arg0: i32) -> (i32, i32) {
    %c0_i32 = arith.constant 0 : i32
    %c0_i32_0 = arith.constant 0 : i32
    %c0_i32_1 = arith.constant 0 : i32
    return %c0_i32, %c0_i32_0 : i32, i32
  }
  func.func @transform_3(%arg0: i32) -> (i32, i32) {
    %c0_i32 = arith.constant 0 : i32
    %c0_i32_0 = arith.constant 0 : i32
    return %arg0, %c0_i32 : i32, i32
  }
}

module attributes {stable_mosaic.version = 11 : i64} {
  func.func @_prenorm_linear_kernel(%arg0: i32, %arg1: i32, %arg2: memref<16x128xf32, #tpu.memory_space<vmem>>, %arg3: memref<1x128xf32, #tpu.memory_space<vmem>>, %arg4: memref<1x128xf32, #tpu.memory_space<vmem>>, %arg5: memref<128x128xbf16, #tpu.memory_space<vmem>>, %arg6: memref<1x128xf32, #tpu.memory_space<vmem>>, %arg7: memref<16x128xf32, #tpu.memory_space<vmem>>) attributes {dimension_semantics = [#tpu.dimension_semantics<parallel>, #tpu.dimension_semantics<parallel>], iteration_bounds = array<i64: 1, 1>, scalar_prefetch = 0 : i64, scratch_operands = 0 : i64, tpu.core_type = #tpu.core_type<tc>, window_params = [{transform_indices = @transform_0, window_bounds = array<i64: 16, 128>}, {pipeline_mode = #tpu.pipeline_mode<synchronous>, transform_indices = @transform_1, window_bounds = array<i64: 1, 128>}, {pipeline_mode = #tpu.pipeline_mode<synchronous>, transform_indices = @transform_2, window_bounds = array<i64: 1, 128>}, {transform_indices = @transform_3, window_bounds = array<i64: 128, 128>}, {transform_indices = @transform_4, window_bounds = array<i64: 1, 128>}, {transform_indices = @transform_5, window_bounds = array<i64: 16, 128>}]} {
    %c0 = arith.constant 0 : index
    %c0_0 = arith.constant 0 : index
    %0 = vector.load %arg2[%c0, %c0_0] : memref<16x128xf32, #tpu.memory_space<vmem>>, vector<16x128xf32>
    %1 = tpu.iota {dimensions = array<i32: 1>} : vector<16x128xi32>
    %c32_i32 = arith.constant 32 : i32
    %2 = vector.broadcast %c32_i32 : i32 to vector<16x128xi32>
    %3 = arith.cmpi slt, %1, %2 : vector<16x128xi32>
    %cst = arith.constant 0.000000e+00 : f32
    %4 = vector.broadcast %cst : f32 to vector<16x128xf32>
    %5 = arith.select %3, %0, %4 : vector<16x128xi1>, vector<16x128xf32>
    %cst_1 = arith.constant dense<0.000000e+00> : vector<16xf32>
    %6 = vector.multi_reduction <add>, %5, %cst_1 [1] : vector<16x128xf32> to vector<16xf32>
    %7 = vector.shape_cast %6 : vector<16xf32> to vector<16x1xf32>
    %cst_2 = arith.constant 3.125000e-02 : f32
    %8 = vector.broadcast %cst_2 : f32 to vector<16x1xf32>
    %9 = arith.mulf %7, %8 : vector<16x1xf32>
    %10 = vector.broadcast %9 : vector<16x1xf32> to vector<16x128xf32>
    %11 = arith.subf %0, %10 : vector<16x128xf32>
    %cst_3 = arith.constant 0.000000e+00 : f32
    %12 = vector.broadcast %cst_3 : f32 to vector<16x128xf32>
    %13 = arith.select %3, %11, %12 : vector<16x128xi1>, vector<16x128xf32>
    %14 = arith.mulf %13, %13 : vector<16x128xf32>
    %cst_4 = arith.constant dense<0.000000e+00> : vector<16xf32>
    %15 = vector.multi_reduction <add>, %14, %cst_4 [1] : vector<16x128xf32> to vector<16xf32>
    %16 = vector.shape_cast %15 : vector<16xf32> to vector<16x1xf32>
    %cst_5 = arith.constant 0.0322580636 : f32
    %17 = vector.broadcast %cst_5 : f32 to vector<16x1xf32>
    %18 = arith.mulf %16, %17 : vector<16x1xf32>
    %19 = math.sqrt %18 : vector<16x1xf32>
    %cst_6 = arith.constant 9.99999997E-7 : f32
    %20 = vector.broadcast %cst_6 : f32 to vector<16x1xf32>
    %21 = arith.addf %19, %20 : vector<16x1xf32>
    %22 = tpu.reciprocal %21 {approx = true} : vector<16x1xf32> -> vector<16x1xf32>
    %c0_7 = arith.constant 0 : index
    %c0_8 = arith.constant 0 : index
    %23 = vector.load %arg3[%c0_7, %c0_8] : memref<1x128xf32, #tpu.memory_space<vmem>>, vector<1x128xf32>
    %24 = vector.broadcast %9 : vector<16x1xf32> to vector<16x128xf32>
    %25 = arith.subf %0, %24 : vector<16x128xf32>
    %26 = vector.broadcast %23 : vector<1x128xf32> to vector<16x128xf32>
    %27 = arith.mulf %26, %25 : vector<16x128xf32>
    %28 = vector.broadcast %22 : vector<16x1xf32> to vector<16x128xf32>
    %29 = arith.mulf %27, %28 : vector<16x128xf32>
    %c0_9 = arith.constant 0 : index
    %c0_10 = arith.constant 0 : index
    %30 = vector.load %arg4[%c0_9, %c0_10] : memref<1x128xf32, #tpu.memory_space<vmem>>, vector<1x128xf32>
    %31 = vector.broadcast %30 : vector<1x128xf32> to vector<16x128xf32>
    %32 = arith.addf %29, %31 : vector<16x128xf32>
    %33 = arith.truncf %32 : vector<16x128xf32> to vector<16x128xbf16>
    %c0_11 = arith.constant 0 : index
    %c0_12 = arith.constant 0 : index
    %34 = vector.load %arg5[%c0_11, %c0_12] : memref<128x128xbf16, #tpu.memory_space<vmem>>, vector<128x128xbf16>
    %cst_13 = arith.constant dense<0.000000e+00> : vector<16x128xf32>
    %35 = tpu.matmul %33, %34, %cst_13 {dimension_numbers = #tpu.dot_dimension_numbers<[1], [0], [0], [1], [0, 0, 1, 1], [], []>} : vector<16x128xbf16>, vector<128x128xbf16>, vector<16x128xf32> -> vector<16x128xf32>
    %c0_14 = arith.constant 0 : index
    %c0_15 = arith.constant 0 : index
    %36 = vector.load %arg6[%c0_14, %c0_15] : memref<1x128xf32, #tpu.memory_space<vmem>>, vector<1x128xf32>
    %37 = vector.broadcast %36 : vector<1x128xf32> to vector<16x128xf32>
    %38 = arith.addf %35, %37 : vector<16x128xf32>
    %c0_16 = arith.constant 0 : index
    %c0_17 = arith.constant 0 : index
    %39 = vector.load %arg7[%c0_16, %c0_17] : memref<16x128xf32, #tpu.memory_space<vmem>>, vector<16x128xf32>
    tpu.vector_store %arg7[%c0_16, %c0_17], %38 {strides = array<i32>} : memref<16x128xf32, #tpu.memory_space<vmem>>, vector<16x128xf32>,
    return
  }
  func.func @transform_0(%arg0: i32, %arg1: i32) -> (i32, i32) {
    %c0_i32 = arith.constant 0 : i32
    %c0_i32_0 = arith.constant 0 : i32
    return %arg0, %c0_i32 : i32, i32
  }
  func.func @transform_1(%arg0: i32, %arg1: i32) -> (i32, i32) {
    %c0_i32 = arith.constant 0 : i32
    %c0_i32_0 = arith.constant 0 : i32
    %c0_i32_1 = arith.constant 0 : i32
    return %c0_i32, %c0_i32_0 : i32, i32
  }
  func.func @transform_2(%arg0: i32, %arg1: i32) -> (i32, i32) {
    %c0_i32 = arith.constant 0 : i32
    %c0_i32_0 = arith.constant 0 : i32
    %c0_i32_1 = arith.constant 0 : i32
    return %c0_i32, %c0_i32_0 : i32, i32
  }
  func.func @transform_3(%arg0: i32, %arg1: i32) -> (i32, i32) {
    %c0_i32 = arith.constant 0 : i32
    %c0_i32_0 = arith.constant 0 : i32
    return %c0_i32, %arg1 : i32, i32
  }
  func.func @transform_4(%arg0: i32, %arg1: i32) -> (i32, i32) {
    %c0_i32 = arith.constant 0 : i32
    %c0_i32_0 = arith.constant 0 : i32
    return %c0_i32, %arg1 : i32, i32
  }
  func.func @transform_5(%arg0: i32, %arg1: i32) -> (i32, i32) {
    %c0_i32 = arith.constant 0 : i32
    return %arg0, %arg1 : i32, i32
  }
}

module attributes {stable_mosaic.version = 11 : i64} {
  func.func @_mha_kernel(%arg0: i32, %arg1: i32, %arg2: i32, %arg3: i32, %arg4: memref<1x8x128xf32, #tpu.memory_space<vmem>>, %arg5: memref<1x8x128xf32, #tpu.memory_space<vmem>>, %arg6: memref<1x8x128xf32, #tpu.memory_space<vmem>>, %arg7: memref<1x1x8xf32, #tpu.memory_space<vmem>>, %arg8: memref<1x8x128xf32, #tpu.memory_space<vmem>>, %arg9: memref<1x8x1xf32, #tpu.memory_space<vmem>>, %arg10: memref<1x8x1xf32, #tpu.memory_space<vmem>>, %arg11: memref<1x8x128xf32, #tpu.memory_space<vmem>>) attributes {dimension_semantics = [#tpu.dimension_semantics<parallel>, #tpu.dimension_semantics<parallel>, #tpu.dimension_semantics<parallel>, #tpu.dimension_semantics<arbitrary>], iteration_bounds = array<i64: 2, 4, 1, 1>, scalar_prefetch = 0 : i64, scratch_operands = 3 : i64, tpu.core_type = #tpu.core_type<tc>, window_params = [{transform_indices = @transform_0, window_bounds = array<i64: 1, 8, 128>}, {transform_indices = @transform_1, window_bounds = array<i64: 1, 8, 128>}, {transform_indices = @transform_2, window_bounds = array<i64: 1, 8, 128>}, {transform_indices = @transform_3, window_bounds = array<i64: 1, 1, 8>}, {transform_indices = @transform_4, window_bounds = array<i64: 1, 8, 128>}]} {
    %c0_i32 = arith.constant 0 : i32
    %0 = arith.cmpi eq, %arg3, %c0_i32 : i32
    %1 = arith.extui %0 : i1 to i32
    %c0_i32_0 = arith.constant 0 : i32
    %2 = arith.cmpi ne, %1, %c0_i32_0 : i32
    scf.if %2 {
      %cst_36 = arith.constant 0xFF800000 : f32
      %41 = vector.broadcast %cst_36 : f32 to vector<1x8x1xf32>
      %c0_37 = arith.constant 0 : index
      %c0_38 = arith.constant 0 : index
      %c0_39 = arith.constant 0 : index
      %42 = vector.load %arg9[%c0_37, %c0_38, %c0_39] : memref<1x8x1xf32, #tpu.memory_space<vmem>>, vector<1x8x1xf32>
      tpu.vector_store %arg9[%c0_37, %c0_38, %c0_39], %41 {strides = array<i32>} : memref<1x8x1xf32, #tpu.memory_space<vmem>>, vector<1x8x1xf32>,
      %cst_40 = arith.constant 0.000000e+00 : f32
      %43 = vector.broadcast %cst_40 : f32 to vector<1x8x1xf32>
      %c0_41 = arith.constant 0 : index
      %c0_42 = arith.constant 0 : index
      %c0_43 = arith.constant 0 : index
      %44 = vector.load %arg10[%c0_41, %c0_42, %c0_43] : memref<1x8x1xf32, #tpu.memory_space<vmem>>, vector<1x8x1xf32>
      tpu.vector_store %arg10[%c0_41, %c0_42, %c0_43], %43 {strides = array<i32>} : memref<1x8x1xf32, #tpu.memory_space<vmem>>, vector<1x8x1xf32>,
      %cst_44 = arith.constant 0.000000e+00 : f32
      %45 = vector.broadcast %cst_44 : f32 to vector<1x8x128xf32>
      %c0_45 = arith.constant 0 : index
      %c0_46 = arith.constant 0 : index
      %c0_47 = arith.constant 0 : index
      %46 = vector.load %arg11[%c0_45, %c0_46, %c0_47] : memref<1x8x128xf32, #tpu.memory_space<vmem>>, vector<1x8x128xf32>
      tpu.vector_store %arg11[%c0_45, %c0_46, %c0_47], %45 {strides = array<i32>} : memref<1x8x128xf32, #tpu.memory_space<vmem>>, vector<1x8x128xf32>,
    } else {
    }
    %c0 = arith.constant 0 : index
    %c0_1 = arith.constant 0 : index
    %c0_2 = arith.constant 0 : index
    %3 = vector.load %arg4[%c0, %c0_1, %c0_2] : memref<1x8x128xf32, #tpu.memory_space<vmem>>, vector<1x8x128xf32>
    %cst = arith.constant 0.353553385 : f32
    %4 = vector.broadcast %cst : f32 to vector<1x8x128xf32>
    %5 = arith.mulf %3, %4 : vector<1x8x128xf32>
    %6 = arith.truncf %5 : vector<1x8x128xf32> to vector<1x8x128xbf16>
    %c0_3 = arith.constant 0 : index
    %c0_4 = arith.constant 0 : index
    %c0_5 = arith.constant 0 : index
    %7 = vector.load %arg5[%c0_3, %c0_4, %c0_5] : memref<1x8x128xf32, #tpu.memory_space<vmem>>, vector<1x8x128xf32>
    %8 = arith.truncf %7 : vector<1x8x128xf32> to vector<1x8x128xbf16>
    "tpu.trace_start"() <{level = 10 : i32, message = "bqd,bkd->bqk"}> : () -> ()
    %cst_6 = arith.constant dense<0.000000e+00> : vector<1x8x8xf32>
    %9 = tpu.matmul %6, %8, %cst_6 {dimension_numbers = #tpu.dot_dimension_numbers<[2], [2], [1], [1], [0, 0, 0, 1, 1, 1], [0], [0]>} : vector<1x8x128xbf16>, vector<1x8x128xbf16>, vector<1x8x8xf32> -> vector<1x8x8xf32>
    "tpu.trace_stop"() : () -> ()
    %c0_7 = arith.constant 0 : index
    %c0_8 = arith.constant 0 : index
    %c0_9 = arith.constant 0 : index
    %10 = vector.load %arg7[%c0_7, %c0_8, %c0_9] : memref<1x1x8xf32, #tpu.memory_space<vmem>>, vector<1x1x8xf32>
    %11 = vector.broadcast %10 : vector<1x1x8xf32> to vector<1x8x8xf32>
    %12 = arith.addf %9, %11 : vector<1x8x8xf32>
    %c0_10 = arith.constant 0 : index
    %c0_11 = arith.constant 0 : index
    %c0_12 = arith.constant 0 : index
    %13 = vector.load %arg9[%c0_10, %c0_11, %c0_12] : memref<1x8x1xf32, #tpu.memory_space<vmem>>, vector<1x8x1xf32>
    %cst_13 = arith.constant dense<0xFF800000> : vector<1x8xf32>
    %14 = vector.multi_reduction <maximumf>, %12, %cst_13 [2] : vector<1x8x8xf32> to vector<1x8xf32>
    %15 = vector.shape_cast %14 : vector<1x8xf32> to vector<1x8x1xf32>
    %16 = arith.maximumf %13, %15 : vector<1x8x1xf32>
    %17 = arith.subf %13, %16 : vector<1x8x1xf32>
    %18 = math.exp %17 : vector<1x8x1xf32>
    %19 = vector.broadcast %16 : vector<1x8x1xf32> to vector<1x8x8xf32>
    %20 = arith.subf %12, %19 : vector<1x8x8xf32>
    %21 = math.exp %20 : vector<1x8x8xf32>
    %c0_14 = arith.constant 0 : index
    %c0_15 = arith.constant 0 : index
    %c0_16 = arith.constant 0 : index
    %22 = vector.load %arg10[%c0_14, %c0_15, %c0_16] : memref<1x8x1xf32, #tpu.memory_space<vmem>>, vector<1x8x1xf32>
    %23 = arith.mulf %18, %22 : vector<1x8x1xf32>
    %cst_17 = arith.constant dense<0.000000e+00> : vector<1x8xf32>
    %24 = vector.multi_reduction <add>, %21, %cst_17 [2] : vector<1x8x8xf32> to vector<1x8xf32>
    %25 = vector.shape_cast %24 : vector<1x8xf32> to vector<1x8x1xf32>
    %26 = arith.addf %23, %25 : vector<1x8x1xf32>
    %c0_18 = arith.constant 0 : index
    %c0_19 = arith.constant 0 : index
    %c0_20 = arith.constant 0 : index
    %27 = vector.load %arg10[%c0_18, %c0_19, %c0_20] : memref<1x8x1xf32, #tpu.memory_space<vmem>>, vector<1x8x1xf32>
    tpu.vector_store %arg10[%c0_18, %c0_19, %c0_20], %26 {strides = array<i32>} : memref<1x8x1xf32, #tpu.memory_space<vmem>>, vector<1x8x1xf32>,
    %c0_21 = arith.constant 0 : index
    %c0_22 = arith.constant 0 : index
    %c0_23 = arith.constant 0 : index
    %28 = vector.load %arg11[%c0_21, %c0_22, %c0_23] : memref<1x8x128xf32, #tpu.memory_space<vmem>>, vector<1x8x128xf32>
    %29 = vector.broadcast %18 : vector<1x8x1xf32> to vector<1x8x128xf32>
    %30 = arith.mulf %29, %28 : vector<1x8x128xf32>
    %31 = arith.truncf %21 : vector<1x8x8xf32> to vector<1x8x8xbf16>
    %c0_24 = arith.constant 0 : index
    %c0_25 = arith.constant 0 : index
    %c0_26 = arith.constant 0 : index
    %32 = vector.load %arg6[%c0_24, %c0_25, %c0_26] : memref<1x8x128xf32, #tpu.memory_space<vmem>>, vector<1x8x128xf32>
    %33 = arith.truncf %32 : vector<1x8x128xf32> to vector<1x8x128xbf16>
    "tpu.trace_start"() <{level = 10 : i32, message = "bqk,bkd->bqd"}> : () -> ()
    %cst_27 = arith.constant dense<0.000000e+00> : vector<1x8x128xf32>
    %34 = tpu.matmul %31, %33, %cst_27 {dimension_numbers = #tpu.dot_dimension_numbers<[2], [1], [1], [2], [0, 0, 0, 1, 1, 2], [0], [0]>} : vector<1x8x8xbf16>, vector<1x8x128xbf16>, vector<1x8x128xf32> -> vector<1x8x128xf32>
    "tpu.trace_stop"() : () -> ()
    %35 = arith.addf %30, %34 : vector<1x8x128xf32>
    %c0_28 = arith.constant 0 : index
    %c0_29 = arith.constant 0 : index
    %c0_30 = arith.constant 0 : index
    %36 = vector.load %arg11[%c0_28, %c0_29, %c0_30] : memref<1x8x128xf32, #tpu.memory_space<vmem>>, vector<1x8x128xf32>
    tpu.vector_store %arg11[%c0_28, %c0_29, %c0_30], %35 {strides = array<i32>} : memref<1x8x128xf32, #tpu.memory_space<vmem>>, vector<1x8x128xf32>,
    %c0_31 = arith.constant 0 : index
    %c0_32 = arith.constant 0 : index
    %c0_33 = arith.constant 0 : index
    %37 = vector.load %arg9[%c0_31, %c0_32, %c0_33] : memref<1x8x1xf32, #tpu.memory_space<vmem>>, vector<1x8x1xf32>
    tpu.vector_store %arg9[%c0_31, %c0_32, %c0_33], %16 {strides = array<i32>} : memref<1x8x1xf32, #tpu.memory_space<vmem>>, vector<1x8x1xf32>,
    %c0_i32_34 = arith.constant 0 : i32
    %38 = arith.cmpi eq, %arg3, %c0_i32_34 : i32
    %39 = arith.extui %38 : i1 to i32
    %c0_i32_35 = arith.constant 0 : i32
    %40 = arith.cmpi ne, %39, %c0_i32_35 : i32
    scf.if %40 {
      %c0_36 = arith.constant 0 : index
      %c0_37 = arith.constant 0 : index
      %c0_38 = arith.constant 0 : index
      %41 = vector.load %arg11[%c0_36, %c0_37, %c0_38] : memref<1x8x128xf32, #tpu.memory_space<vmem>>, vector<1x8x128xf32>
      %c0_39 = arith.constant 0 : index
      %c0_40 = arith.constant 0 : index
      %c0_41 = arith.constant 0 : index
      %42 = vector.load %arg10[%c0_39, %c0_40, %c0_41] : memref<1x8x1xf32, #tpu.memory_space<vmem>>, vector<1x8x1xf32>
      %43 = tpu.reciprocal %42 {approx = true} : vector<1x8x1xf32> -> vector<1x8x1xf32>
      %44 = vector.broadcast %43 : vector<1x8x1xf32> to vector<1x8x128xf32>
      %45 = arith.mulf %41, %44 : vector<1x8x128xf32>
      %c0_42 = arith.constant 0 : index
      %c0_43 = arith.constant 0 : index
      %c0_44 = arith.constant 0 : index
      %46 = vector.load %arg8[%c0_42, %c0_43, %c0_44] : memref<1x8x128xf32, #tpu.memory_space<vmem>>, vector<1x8x128xf32>
      tpu.vector_store %arg8[%c0_42, %c0_43, %c0_44], %45 {strides = array<i32>} : memref<1x8x128xf32, #tpu.memory_space<vmem>>, vector<1x8x128xf32>,
    } else {
    }
    return
  }
  func.func @transform_0(%arg0: i32, %arg1: i32, %arg2: i32, %arg3: i32) -> (i32, i32, i32) {
    %c0_i32 = arith.constant 0 : i32
    %0 = arith.addi %c0_i32, %arg1 : i32
    %c0_i32_0 = arith.constant 0 : i32
    return %arg0, %arg2, %0 : i32, i32, i32
  }
  func.func @transform_1(%arg0: i32, %arg1: i32, %arg2: i32, %arg3: i32) -> (i32, i32, i32) {
    %c0_i32 = arith.constant 0 : i32
    %0 = arith.addi %c0_i32, %arg1 : i32
    %c0_i32_0 = arith.constant 0 : i32
    return %arg0, %arg3, %0 : i32, i32, i32
  }
  func.func @transform_2(%arg0: i32, %arg1: i32, %arg2: i32, %arg3: i32) -> (i32, i32, i32) {
    %c4_i32 = arith.constant 4 : i32
    %0 = arith.addi %c4_i32, %arg1 : i32
    %c0_i32 = arith.constant 0 : i32
    return %arg0, %arg3, %0 : i32, i32, i32
  }
  func.func @transform_3(%arg0: i32, %arg1: i32, %arg2: i32, %arg3: i32) -> (i32, i32, i32) {
    %c0_i32 = arith.constant 0 : i32
    %c0_i32_0 = arith.constant 0 : i32
    return %arg0, %c0_i32, %arg3 : i32, i32, i32
  }
  func.func @transform_4(%arg0: i32, %arg1: i32, %arg2: i32, %arg3: i32) -> (i32, i32, i32) {
    %c0_i32 = arith.constant 0 : i32
    return %arg0, %arg2, %arg1 : i32, i32, i32
  }
}

</mosaic_0001>

<llo_original>
// kernel: transformer_forward.36
$region0: #{transformer_forward.36}
  #allocation0 [shape = 'u32[]', space=smem, size = 0x4, offset = 0x4, fixed_abs, tag = 'smem constant byte address 0x4 - core index']
  #allocation1 [shape = 'u32[144,128]{1,0:T(1,128)}', space=vmem, size = 0x12000, scoped, tag = 'internal scratch']
  #allocation2 [shape = 'f32[1,8,1]{2,1,0:T(8,128)}', space=vmem, size = 0x1000, scoped, tag = 'scratch operand']
  #allocation3 [shape = 'f32[1,8,1]{2,1,0:T(8,128)}', space=vmem, size = 0x1000, scoped, tag = 'scratch operand']
  #allocation4 [shape = 'f32[1,8,128]{2,1,0:T(8,128)}', space=vmem, size = 0x1000, scoped, tag = 'scratch operand']
  %s0 = inlined_call_operand.vmem [shape: f32[2,8,1536], index: 0, kind: input, shape index: {}, may-alias: {0,1,2}]
  %s1 = inlined_call_operand.vmem [shape: f32[2,8,1536], index: 1, kind: input, shape index: {}, may-alias: {0,1,2}]
  %s2 = inlined_call_operand.vmem [shape: f32[2,8,1536], index: 2, kind: input, shape index: {}, may-alias: {0,1,2}]
  %s3 = inlined_call_operand.vmem [shape: f32[2,8,8], index: 3, kind: input, shape index: {}]
  %s4 = inlined_call_operand.vmem [shape: f32[2,8,512], index: 4, kind: output, shape index: {}]
  %s5 = sld [smem:[#allocation0]]
  $region57: #{transformer_forward.36} parent=0
    _
  %s7 = ssub.s32 1, %s5
  %s8 = scalar_select 0, %s7, %s5
  loop: start=0, step=1, limit=10
  $region2: #{transformer_forward.36} parent=0 // loop_pre_header
    _
  $region3: #{transformer_forward.36} parent=0 // loop_header
    %s10 = sphi 0, %s14
    %p11 = scmp.ge.s32.totalorder %s10, 10
    %s17 = sphi 0, %s43
    %s18 = sphi 0, %s39
    %s19 = sphi 0, %s35
    %s20 = sphi 0, %s31
    %s21 = sphi 0, %s17
    %s22 = sphi 0, %s18
    %s23 = sphi 0, %s19
    %s24 = sphi 0, %s20
    %s25 = sphi 0, %s21
    %s26 = sphi 0, %s22
    %s27 = sphi 0, %s23
    %s28 = sphi 0, %s24
    %s50 = sphi 0, %s52
    %s53 = sphi 0, %s50
    %s54 = sphi 0, %s53
    %s70 = sphi 0, %s54
    %s82 = sphi 0, %s84
    %s85 = sphi 0, %s82
    %s86 = sphi 0, %s85
    %s102 = sphi 0, %s86
    %s114 = sphi 0, %s116
    %s117 = sphi 0, %s114
    %s118 = sphi 0, %s117
    %s134 = sphi 0, %s118
    %s144 = sphi 0, %s146
    %s147 = sphi 0, %s144
    %s148 = sphi 0, %s147
    %s164 = sphi 0, %s148
    %s174 = sphi 0, %s176
    %s177 = sphi 0, %s174
    %s178 = sphi 0, %s177
    %s194 = sphi 0, %s178
  $region4: #{transformer_forward.36} parent=0 // loop_header_branch
    %13 = sbr.rel (%p11) target = $region8
  $region5: #{transformer_forward.36} parent=0 // loop_body
    %s15 = ssub.s32 %s10, 1
    %s16 = ssub.s32 %s10, 2
    %s29 = sadd.s32 1, %s20
    %p30 = scmp.ge.s32.totalorder %s29, 1
    %s31 = scalar_select %p30, 0, %s29
    %s32 = sadd.s32 1, %s19
    %s33 = scalar_select %p30, %s32, %s19
    %p34 = scmp.ge.s32.totalorder %s33, 1
    %s35 = scalar_select %p34, 0, %s33
    %s36 = sadd.s32 1, %s18
    %s37 = scalar_select %p34, %s36, %s18
    %p38 = scmp.ge.s32.totalorder %s37, 4
    %s39 = scalar_select %p38, 0, %s37
    %s40 = sadd.s32 1, %s17
    %s41 = scalar_select %p38, %s40, %s17
    %p42 = scmp.ge.s32.totalorder %s41, 2
    %s43 = scalar_select %p42, 0, %s41
    %s44 = ssub.s32 %s17, %s43
    %s45 = ssub.s32 %s19, %s35
    %s46 = sor.u32 %s44, %s45
    %s47 = ssub.s32 %s18, %s39
    %s48 = sor.u32 %s46, %s47
    %p49 = scmp.eq.s32.totalorder %s48, 0
    %s51 = sadd.s32 %s50, 1
    %s52 = scalar_select %p49, %s50, %s51
    %p55 = pneg %p49
    %p56 = scmp.eq.s32.totalorder %s10, 7
    %p57 = por %p55, %p56
    %p58 = scmp.ne.s32.totalorder %s50, %s53
    %p59 = scmp.eq.s32.totalorder %s10, 0
    %p60 = por %p58, %p59
    %p61 = scmp.ne.s32.totalorder %s50, %s53
    %p62 = scmp.eq.s32.totalorder %s15, 7
    %p63 = por %p61, %p62
    %p64 = scmp.ne.s32.totalorder %s53, %s54
    %p65 = scmp.eq.s32.totalorder %s15, 0
    %p66 = por %p64, %p65
    %p67 = scmp.ne.s32.totalorder %s53, %s54
    %p68 = scmp.eq.s32.totalorder %s16, 7
    %p69 = por %p67, %p68
    %p71 = scmp.ne.s32.totalorder %s54, %s70
    %p72 = scmp.eq.s32.totalorder %s16, 0
    %p73 = por %p71, %p72
    %s74 = sadd.s32 %s18, 4
    %s75 = sadd.s32 %s39, 4
    %s76 = ssub.s32 %s17, %s43
    %s77 = ssub.s32 %s20, %s31
    %s78 = sor.u32 %s76, %s77
    %s79 = ssub.s32 %s74, %s75
    %s80 = sor.u32 %s78, %s79
    %p81 = scmp.eq.s32.totalorder %s80, 0
    %s83 = sadd.s32 %s82, 1
    %s84 = scalar_select %p81, %s82, %s83
    %p87 = pneg %p81
    %p88 = scmp.eq.s32.totalorder %s10, 7
    %p89 = por %p87, %p88
    %p90 = scmp.ne.s32.totalorder %s82, %s85
    %p91 = scmp.eq.s32.totalorder %s10, 0
    %p92 = por %p90, %p91
    %p93 = scmp.ne.s32.totalorder %s82, %s85
    %p94 = scmp.eq.s32.totalorder %s15, 7
    %p95 = por %p93, %p94
    %p96 = scmp.ne.s32.totalorder %s85, %s86
    %p97 = scmp.eq.s32.totalorder %s15, 0
    %p98 = por %p96, %p97
    %p99 = scmp.ne.s32.totalorder %s85, %s86
    %p100 = scmp.eq.s32.totalorder %s16, 7
    %p101 = por %p99, %p100
    %p103 = scmp.ne.s32.totalorder %s86, %s102
    %p104 = scmp.eq.s32.totalorder %s16, 0
    %p105 = por %p103, %p104
    %s106 = sadd.s32 %s18, 8
    %s107 = sadd.s32 %s39, 8
    %s108 = ssub.s32 %s17, %s43
    %s109 = ssub.s32 %s20, %s31
    %s110 = sor.u32 %s108, %s109
    %s111 = ssub.s32 %s106, %s107
    %s112 = sor.u32 %s110, %s111
    %p113 = scmp.eq.s32.totalorder %s112, 0
    %s115 = sadd.s32 %s114, 1
    %s116 = scalar_select %p113, %s114, %s115
    %p119 = pneg %p113
    %p120 = scmp.eq.s32.totalorder %s10, 7
    %p121 = por %p119, %p120
    %p122 = scmp.ne.s32.totalorder %s114, %s117
    %p123 = scmp.eq.s32.totalorder %s10, 0
    %p124 = por %p122, %p123
    %p125 = scmp.ne.s32.totalorder %s114, %s117
    %p126 = scmp.eq.s32.totalorder %s15, 7
    %p127 = por %p125, %p126
    %p128 = scmp.ne.s32.totalorder %s117, %s118
    %p129 = scmp.eq.s32.totalorder %s15, 0
    %p130 = por %p128, %p129
    %p131 = scmp.ne.s32.totalorder %s117, %s118
    %p132 = scmp.eq.s32.totalorder %s16, 7
    %p133 = por %p131, %p132
    %p135 = scmp.ne.s32.totalorder %s118, %s134
    %p136 = scmp.eq.s32.totalorder %s16, 0
    %p137 = por %p135, %p136
    %s138 = ssub.s32 %s17, %s43
    %s139 = ssub.s32 %s19, %s35
    %s140 = sor.u32 %s138, %s139
    %s141 = ssub.s32 %s20, %s31
    %s142 = sor.u32 %s140, %s141
    %p143 = scmp.eq.s32.totalorder %s142, 0
    %s145 = sadd.s32 %s144, 1
    %s146 = scalar_select %p143, %s144, %s145
    %p149 = pneg %p143
    %p150 = scmp.eq.s32.totalorder %s10, 7
    %p151 = por %p149, %p150
    %p152 = scmp.ne.s32.totalorder %s144, %s147
    %p153 = scmp.eq.s32.totalorder %s10, 0
    %p154 = por %p152, %p153
    %p155 = scmp.ne.s32.totalorder %s144, %s147
    %p156 = scmp.eq.s32.totalorder %s15, 7
    %p157 = por %p155, %p156
    %p158 = scmp.ne.s32.totalorder %s147, %s148
    %p159 = scmp.eq.s32.totalorder %s15, 0
    %p160 = por %p158, %p159
    %p161 = scmp.ne.s32.totalorder %s147, %s148
    %p162 = scmp.eq.s32.totalorder %s16, 7
    %p163 = por %p161, %p162
    %p165 = scmp.ne.s32.totalorder %s148, %s164
    %p166 = scmp.eq.s32.totalorder %s16, 0
    %p167 = por %p165, %p166
    %s168 = ssub.s32 %s17, %s43
    %s169 = ssub.s32 %s19, %s35
    %s170 = sor.u32 %s168, %s169
    %s171 = ssub.s32 %s18, %s39
    %s172 = sor.u32 %s170, %s171
    %p173 = scmp.eq.s32.totalorder %s172, 0
    %s175 = sadd.s32 %s174, 1
    %s176 = scalar_select %p173, %s174, %s175
    %p179 = pneg %p173
    %p180 = scmp.eq.s32.totalorder %s10, 7
    %p181 = por %p179, %p180
    %p182 = scmp.ne.s32.totalorder %s174, %s177
    %p183 = scmp.eq.s32.totalorder %s10, 0
    %p184 = por %p182, %p183
    %p185 = scmp.ne.s32.totalorder %s174, %s177
    %p186 = scmp.eq.s32.totalorder %s15, 7
    %p187 = por %p185, %p186
    %p188 = scmp.ne.s32.totalorder %s177, %s178
    %p189 = scmp.eq.s32.totalorder %s15, 0
    %p190 = por %p188, %p189
    %p191 = scmp.ne.s32.totalorder %s177, %s178
    %p192 = scmp.eq.s32.totalorder %s16, 7
    %p193 = por %p191, %p192
    %p195 = scmp.ne.s32.totalorder %s178, %s194
    %p196 = scmp.eq.s32.totalorder %s16, 0
    %p197 = por %p195, %p196
    %p198 = scmp.le.s32.totalorder 1, %s10
    %p199 = scmp.lt.s32.totalorder %s10, 9
    %p200 = pnand %p198, %p199
    %p201 = pneg %p200
    // Predicated region
    $region9: #{transformer_forward.36} parent=5 // pred_check
      _
    $region10: #{transformer_forward.36} parent=5 // pred_check_branch
      %203 = sbr.rel (%p200) target = $region12
    $region11: #{transformer_forward.36} parent=5 // pred_region
      %s204 = ssub.s32 %s10, 1
    $region12: #{transformer_forward.36} parent=5 // pred_fallthru
      _
    %p205 = scmp.lt.s32.totalorder %s10, 8
    // Predicated region
    $region13: #{transformer_forward.36} parent=5 // pred_check
      %p206 = pneg %p205
    $region14: #{transformer_forward.36} parent=5 // pred_check_branch
      %208 = sbr.rel (%p206) target = $region16
    $region15: #{transformer_forward.36} parent=5 // pred_region
      // Predicated region
      $region17: #{transformer_forward.36} parent=15 // pred_check
        %p209 = pneg %p60
      $region18: #{transformer_forward.36} parent=15 // pred_check_branch
        %211 = sbr.rel (%p209) target = $region20
      $region19: #{transformer_forward.36} parent=15 // pred_region
        %p212 = scmp.lt.s32.totalorder %s17, 1
        %s213 = scalar_select %p212, %s17, 1
        %p214 = scmp.lt.s32.totalorder %s19, 0
        %s215 = scalar_select %p214, %s19, 0
        %p216 = scmp.lt.s32.totalorder %s18, 11
        %s217 = scalar_select %p216, %s18, 11
        %s218 = smul.addr %s215, 12
        %s219 = sadd.s32 %s217, %s218
        %s220 = smul.addr %s213, 12
        %s221 = sadd.s32 %s219, %s220
        %s222 = smul.addr %s221, 8
        %s223 = scalar_lea.vmem %s0, %s222
      $region20: #{transformer_forward.36} parent=15 // pred_fallthru
        _
      // Predicated region
      $region21: #{transformer_forward.36} parent=15 // pred_check
        %p224 = pneg %p92
      $region22: #{transformer_forward.36} parent=15 // pred_check_branch
        %226 = sbr.rel (%p224) target = $region24
      $region23: #{transformer_forward.36} parent=15 // pred_region
        %s227 = sadd.s32 %s18, 4
        %p228 = scmp.lt.s32.totalorder %s17, 1
        %s229 = scalar_select %p228, %s17, 1
        %p230 = scmp.lt.s32.totalorder %s20, 0
        %s231 = scalar_select %p230, %s20, 0
        %p232 = scmp.lt.s32.totalorder %s227, 11
        %s233 = scalar_select %p232, %s227, 11
        %s234 = smul.addr %s231, 12
        %s235 = sadd.s32 %s233, %s234
        %s236 = smul.addr %s229, 12
        %s237 = sadd.s32 %s235, %s236
        %s238 = smul.addr %s237, 8
        %s239 = scalar_lea.vmem %s1, %s238
        %s240 = sadd.s32 %s18, 4
      $region24: #{transformer_forward.36} parent=15 // pred_fallthru
        _
      // Predicated region
      $region25: #{transformer_forward.36} parent=15 // pred_check
        %p241 = pneg %p124
      $region26: #{transformer_forward.36} parent=15 // pred_check_branch
        %243 = sbr.rel (%p241) target = $region28
      $region27: #{transformer_forward.36} parent=15 // pred_region
        %s244 = sadd.s32 %s18, 8
        %p245 = scmp.lt.s32.totalorder %s17, 1
        %s246 = scalar_select %p245, %s17, 1
        %p247 = scmp.lt.s32.totalorder %s20, 0
        %s248 = scalar_select %p247, %s20, 0
        %p249 = scmp.lt.s32.totalorder %s244, 11
        %s250 = scalar_select %p249, %s244, 11
        %s251 = smul.addr %s248, 12
        %s252 = sadd.s32 %s250, %s251
        %s253 = smul.addr %s246, 12
        %s254 = sadd.s32 %s252, %s253
        %s255 = smul.addr %s254, 8
        %s256 = scalar_lea.vmem %s2, %s255
        %s257 = sadd.s32 %s18, 8
      $region28: #{transformer_forward.36} parent=15 // pred_fallthru
        _
      // Predicated region
      $region29: #{transformer_forward.36} parent=15 // pred_check
        %p258 = pneg %p154
      $region30: #{transformer_forward.36} parent=15 // pred_check_branch
        %260 = sbr.rel (%p258) target = $region32
      $region31: #{transformer_forward.36} parent=15 // pred_region
        %p261 = scmp.lt.s32.totalorder %s17, 1
        %s262 = scalar_select %p261, %s17, 1
        %p263 = scmp.lt.s32.totalorder %s19, 0
        %s264 = scalar_select %p263, %s19, 0
        %p265 = scmp.lt.s32.totalorder %s20, 0
        %s266 = scalar_select %p265, %s20, 0
        %s267 = sadd.s32 %s266, %s264
        %s268 = sadd.s32 %s267, %s262
        %s269 = smul.addr %s268, 8
        %s270 = scalar_lea.vmem %s3, %s269
      $region32: #{transformer_forward.36} parent=15 // pred_fallthru
        _
    $region16: #{transformer_forward.36} parent=5 // pred_fallthru
      _
    %p271 = scmp.le.s32.totalorder 1, %s10
    %p272 = scmp.lt.s32.totalorder %s10, 9
    %p273 = pnand %p271, %p272
    %p274 = pneg %p273
    // Predicated region
    $region33: #{transformer_forward.36} parent=5 // pred_check
      _
    $region34: #{transformer_forward.36} parent=5 // pred_check_branch
      %276 = sbr.rel (%p273) target = $region36
    $region35: #{transformer_forward.36} parent=5 // pred_region
      %s277 = ssub.s32 %s10, 1
      %p278 = scmp.lt.s32.totalorder %s21, 1
      %s279 = scalar_select %p278, %s21, 1
      %p280 = scmp.lt.s32.totalorder %s23, 0
      %s281 = scalar_select %p280, %s23, 0
      %p282 = scmp.lt.s32.totalorder %s22, 11
      %s283 = scalar_select %p282, %s22, 11
      %s284 = smul.addr %s281, 12
      %s285 = sadd.s32 %s283, %s284
      %s286 = smul.addr %s279, 12
      %s287 = sadd.s32 %s285, %s286
      %s288 = smul.addr %s287, 8
      %s289 = scalar_lea.vmem %s0, %s288
      %p290 = pneg %p66
      %p291 = pneg %p63
      %s292 = sadd.s32 %s22, 4
      %p293 = scmp.lt.s32.totalorder %s21, 1
      %s294 = scalar_select %p293, %s21, 1
      %p295 = scmp.lt.s32.totalorder %s24, 0
      %s296 = scalar_select %p295, %s24, 0
      %p297 = scmp.lt.s32.totalorder %s292, 11
      %s298 = scalar_select %p297, %s292, 11
      %s299 = smul.addr %s296, 12
      %s300 = sadd.s32 %s298, %s299
      %s301 = smul.addr %s294, 12
      %s302 = sadd.s32 %s300, %s301
      %s303 = smul.addr %s302, 8
      %s304 = scalar_lea.vmem %s1, %s303
      %p305 = pneg %p98
      %p306 = pneg %p95
      %s307 = sadd.s32 %s22, 8
      %p308 = scmp.lt.s32.totalorder %s21, 1
      %s309 = scalar_select %p308, %s21, 1
      %p310 = scmp.lt.s32.totalorder %s24, 0
      %s311 = scalar_select %p310, %s24, 0
      %p312 = scmp.lt.s32.totalorder %s307, 11
      %s313 = scalar_select %p312, %s307, 11
      %s314 = smul.addr %s311, 12
      %s315 = sadd.s32 %s313, %s314
      %s316 = smul.addr %s309, 12
      %s317 = sadd.s32 %s315, %s316
      %s318 = smul.addr %s317, 8
      %s319 = scalar_lea.vmem %s2, %s318
      %p320 = pneg %p130
      %p321 = pneg %p127
      %p322 = scmp.lt.s32.totalorder %s21, 1
      %s323 = scalar_select %p322, %s21, 1
      %p324 = scmp.lt.s32.totalorder %s23, 0
      %s325 = scalar_select %p324, %s23, 0
      %p326 = scmp.lt.s32.totalorder %s24, 0
      %s327 = scalar_select %p326, %s24, 0
      %s328 = sadd.s32 %s327, %s325
      %s329 = sadd.s32 %s328, %s323
      %s330 = smul.addr %s329, 8
      %s331 = scalar_lea.vmem %s3, %s330
      %p332 = pneg %p160
      %p333 = pneg %p157
      %p334 = pneg %p190
      %p335 = pneg %p187
      %p336 = scmp.lt.s32.totalorder %s21, 1
      %s337 = scalar_select %p336, %s21, 1
      %p338 = scmp.lt.s32.totalorder %s23, 0
      %s339 = scalar_select %p338, %s23, 0
      %p340 = scmp.lt.s32.totalorder %s22, 3
      %s341 = scalar_select %p340, %s22, 3
      %s342 = smul.addr %s339, 4
      %s343 = sadd.s32 %s341, %s342
      %s344 = smul.addr %s337, 4
      %s345 = sadd.s32 %s343, %s344
      %s346 = smul.addr %s345, 8
      %s347 = scalar_lea.vmem %s4, %s346
      %p348 = scmp.lt.s32.totalorder %s21, 1
      %s349 = scalar_select %p348, %s21, 1
      %p350 = scmp.lt.s32.totalorder %s23, 0
      %s351 = scalar_select %p350, %s23, 0
      %p352 = scmp.lt.s32.totalorder %s22, 11
      %s353 = scalar_select %p352, %s22, 11
      %s354 = smul.addr %s351, 12
      %s355 = sadd.s32 %s353, %s354
      %s356 = smul.addr %s349, 12
      %s357 = sadd.s32 %s355, %s356
      %s358 = smul.addr %s357, 8
      %s359 = scalar_lea.vmem %s0, %s358
      %s360 = sadd.s32 %s22, 4
      %p361 = scmp.lt.s32.totalorder %s21, 1
      %s362 = scalar_select %p361, %s21, 1
      %p363 = scmp.lt.s32.totalorder %s24, 0
      %s364 = scalar_select %p363, %s24, 0
      %p365 = scmp.lt.s32.totalorder %s360, 11
      %s366 = scalar_select %p365, %s360, 11
      %s367 = smul.addr %s364, 12
      %s368 = sadd.s32 %s366, %s367
      %s369 = smul.addr %s362, 12
      %s370 = sadd.s32 %s368, %s369
      %s371 = smul.addr %s370, 8
      %s372 = scalar_lea.vmem %s1, %s371
      %s373 = sadd.s32 %s22, 4
      %s374 = sadd.s32 %s22, 8
      %p375 = scmp.lt.s32.totalorder %s21, 1
      %s376 = scalar_select %p375, %s21, 1
      %p377 = scmp.lt.s32.totalorder %s24, 0
      %s378 = scalar_select %p377, %s24, 0
      %p379 = scmp.lt.s32.totalorder %s374, 11
      %s380 = scalar_select %p379, %s374, 11
      %s381 = smul.addr %s378, 12
      %s382 = sadd.s32 %s380, %s381
      %s383 = smul.addr %s376, 12
      %s384 = sadd.s32 %s382, %s383
      %s385 = smul.addr %s384, 8
      %s386 = scalar_lea.vmem %s2, %s385
      %s387 = sadd.s32 %s22, 8
      %p388 = scmp.lt.s32.totalorder %s21, 1
      %s389 = scalar_select %p388, %s21, 1
      %p390 = scmp.lt.s32.totalorder %s23, 0
      %s391 = scalar_select %p390, %s23, 0
      %p392 = scmp.lt.s32.totalorder %s24, 0
      %s393 = scalar_select %p392, %s24, 0
      %s394 = sadd.s32 %s393, %s391
      %s395 = sadd.s32 %s394, %s389
      %s396 = smul.addr %s395, 8
      %s397 = scalar_lea.vmem %s3, %s396
      %p398 = scmp.lt.s32.totalorder %s21, 1
      %s399 = scalar_select %p398, %s21, 1
      %p400 = scmp.lt.s32.totalorder %s23, 0
      %s401 = scalar_select %p400, %s23, 0
      %p402 = scmp.lt.s32.totalorder %s22, 3
      %s403 = scalar_select %p402, %s22, 3
      %s404 = smul.addr %s401, 4
      %s405 = sadd.s32 %s403, %s404
      %s406 = smul.addr %s399, 4
      %s407 = sadd.s32 %s405, %s406
      %s408 = smul.addr %s407, 8
      %s409 = scalar_lea.vmem %s4, %s408
      %p411 = scmp.eq.s32.totalorder %s24, 0
      // Predicated region
      $region37: #{transformer_forward.36} parent=35 // pred_check
        %p412 = pneg %p411
      $region38: #{transformer_forward.36} parent=35 // pred_check_branch
        %414 = sbr.rel (%p412) target = $region40
      $region39: #{transformer_forward.36} parent=35 // pred_region
        %vm415 = vcmask 7168
        %416 = vst.msk [vmem:[#allocation2] sm:$0xff] %vm415, -inf
        %417 = vst.msk [vmem:[#allocation3] sm:$0xff] %vm415, 0.0
        %418 = vst [vmem:[#allocation4] sm:$0xff] 0.0
      $region40: #{transformer_forward.36} parent=35 // pred_fallthru
        _
      %v419 = vld [vmem:[%s359] sm:$0xff]
      %v420 = vmul.f32 %v419, 0.35355338
      %v421 = vpack.c.bf16 %v420, %v420
      %v422 = vld [vmem:[%s372] sm:$0xff]
      %v423 = vpack.c.bf16 %v422, %v422
      %v424 = vld [vmem:[%s397] sm:$0xff]
      %425 = vmatprep.subr.bf16.mxu0 0
      %426 = vmatpush1.bf16.xpose.msra.mxu0 %v423
      %427 = vmatprep.subr.bf16.mxu0 0
      %428 = vmatpush1.bf16.xpose.msra.mxu0 0
      %429 = vmatprep.subr.bf16.mxu0 0
      %430 = vmatpush1.bf16.xpose.msra.mxu0 0
      %431 = vmatprep.subr.bf16.mxu0 0
      %432 = vmatpush1.bf16.xpose.msra.mxu0 0
      %433 = vmatprep.subr.bf16.mxu0 0
      %434 = vmatpush1.bf16.xpose.msra.mxu0 0
      %435 = vmatprep.subr.bf16.mxu0 0
      %436 = vmatpush1.bf16.xpose.msra.mxu0 0
      %437 = vmatprep.subr.bf16.mxu0 0
      %438 = vmatpush1.bf16.xpose.msra.mxu0 0
      %439 = vmatprep.subr.bf16.mxu0 0
      %440 = vmatpush1.bf16.xpose.msra.mxu0 0
      %441 = vmatprep.subr.bf16.mxu0 0
      %442 = vmatpush1.bf16.xpose.msra.mxu0 0
      %443 = vmatprep.subr.bf16.mxu0 0
      %444 = vmatpush1.bf16.xpose.msra.mxu0 0
      %445 = vmatprep.subr.bf16.mxu0 0
      %446 = vmatpush1.bf16.xpose.msra.mxu0 0
      %447 = vmatprep.subr.bf16.mxu0 0
      %448 = vmatpush1.bf16.xpose.msra.mxu0 0
      %449 = vmatprep.subr.bf16.mxu0 0
      %450 = vmatpush1.bf16.xpose.msra.mxu0 0
      %451 = vmatprep.subr.bf16.mxu0 0
      %452 = vmatpush1.bf16.xpose.msra.mxu0 0
      %453 = vmatprep.subr.bf16.mxu0 0
      %454 = vmatpush1.bf16.xpose.msra.mxu0 0
      %455 = vmatprep.subr.bf16.mxu0 0
      %456 = vmatpush1.bf16.xpose.msra.mxu0 0
      %457 = vmatprep.mubr.bf16.mxu0 0
      %458 = vmatmul.mubr.bf16.gmra.mrb[0].mxu0 %v421
      %v459 = vpop.f32.mrb[0].mxu0
      %v460 = vadd.f32 %v424, %v459
      %v461 = vpop.f32.mrb[0].mxu0
      %v462 = vpop.f32.mrb[0].mxu0
      %v463 = vpop.f32.mrb[0].mxu0
      %464 = vdwg.mxu0
      %v465 = vld [vmem:[#allocation2] sm:$0xff]
      %vm466 = vcmask 64512
      %v467 = vsel %vm466, %v460, -inf
      %468 = vmax.xlane.f32.xlu0 %v467
      %v469 = vpop.xlane.xlu0 %468
      %v470 = vmax.f32 %v465, %v469
      %v471 = vsub.f32 %v465, %v470
      %v472 = vmul.f32 %v471, 1.442695
      %v473 = vpow.pop %v472
      %475 = vset.pattern.permute.xlu0 0
      %476 = vperm.xlu0 %475, %v470
      %v477 = vpop.permute.xlu0 %476
      %v479 = vsub.f32 %v460, %v477
      %v480 = vmul.f32 %v479, 1.442695
      %v481 = vpow.pop %v480
      %v482 = vld [vmem:[#allocation3] sm:$0xff]
      %v483 = vmul.f32 %v473, %v482
      %v484 = vsel %vm466, %v481, 0.0
      %485 = vadd.xlane.f32.xlu0 %v484
      %v486 = vpop.xlane.xlu0 %485
      %v487 = vadd.f32 %v483, %v486
      %vm488 = vcmask 7168
      %489 = vst.msk [vmem:[#allocation3] sm:$0xff] %vm488, %v487
      %v490 = vld [vmem:[#allocation4] sm:$0xff]
      %492 = vset.pattern.permute.xlu0 0
      %493 = vperm.xlu0 %492, %v473
      %v494 = vpop.permute.xlu0 %493
      %v496 = vmul.f32 %v494, %v490
      %v497 = vpack.c.bf16 %v481, %v481
      %v498 = vld [vmem:[%s386] sm:$0xff]
      %v499 = vpack.c.bf16 %v498, %v498
      %v501 = vsel %vm466, %v497, 0
      %vm503 = vcmask 1043456
      %v505 = vsel %vm503, %v499, 0
      %507 = vmatprep.subr.bf16.mxu0 0
      %508 = vmatpush1.bf16.msra.mxu0 %v505
      %509 = vmatprep.subr.bf16.mxu0 0
      %510 = vmatpush1.bf16.msra.mxu0 0
      %511 = vmatprep.subr.bf16.mxu0 0
      %512 = vmatpush1.bf16.msra.mxu0 0
      %513 = vmatprep.subr.bf16.mxu0 0
      %514 = vmatpush1.bf16.msra.mxu0 0
      %515 = vmatprep.subr.bf16.mxu0 0
      %516 = vmatpush1.bf16.msra.mxu0 0
      %517 = vmatprep.subr.bf16.mxu0 0
      %518 = vmatpush1.bf16.msra.mxu0 0
      %519 = vmatprep.subr.bf16.mxu0 0
      %520 = vmatpush1.bf16.msra.mxu0 0
      %521 = vmatprep.subr.bf16.mxu0 0
      %522 = vmatpush1.bf16.msra.mxu0 0
      %523 = vmatprep.subr.bf16.mxu0 0
      %524 = vmatpush1.bf16.msra.mxu0 0
      %525 = vmatprep.subr.bf16.mxu0 0
      %526 = vmatpush1.bf16.msra.mxu0 0
      %527 = vmatprep.subr.bf16.mxu0 0
      %528 = vmatpush1.bf16.msra.mxu0 0
      %529 = vmatprep.subr.bf16.mxu0 0
      %530 = vmatpush1.bf16.msra.mxu0 0
      %531 = vmatprep.subr.bf16.mxu0 0
      %532 = vmatpush1.bf16.msra.mxu0 0
      %533 = vmatprep.subr.bf16.mxu0 0
      %534 = vmatpush1.bf16.msra.mxu0 0
      %535 = vmatprep.subr.bf16.mxu0 0
      %536 = vmatpush1.bf16.msra.mxu0 0
      %537 = vmatprep.subr.bf16.mxu0 0
      %538 = vmatpush1.bf16.msra.mxu0 0
      %539 = vmatprep.mubr.bf16.mxu0 0
      %540 = vmatmul.mubr.bf16.gmra.mrb[0].mxu0 %v501
      %v541 = vpop.f32.mrb[0].mxu0
      %v542 = vadd.f32 0.0, %v541
      %v543 = vpop.f32.mrb[0].mxu0
      %v544 = vpop.f32.mrb[0].mxu0
      %v545 = vpop.f32.mrb[0].mxu0
      %546 = vdwg.mxu0
      %v547 = vadd.f32 %v496, %v542
      %548 = vst [vmem:[#allocation4] sm:$0xff] %v547
      %549 = vst.msk [vmem:[#allocation2] sm:$0xff] %vm488, %v470
      // Predicated region
      $region41: #{transformer_forward.36} parent=35 // pred_check
        %p550 = pneg %p411
      $region42: #{transformer_forward.36} parent=35 // pred_check_branch
        %552 = sbr.rel (%p550) target = $region44
      $region43: #{transformer_forward.36} parent=35 // pred_region
        %v553 = vld [vmem:[#allocation4] sm:$0xff]
        %v554 = vld [vmem:[#allocation3] sm:$0xff]
        %v555 = vrcp.pop %v554
        %557 = vset.pattern.permute.xlu0 0
        %558 = vperm.xlu0 %557, %v555
        %v559 = vpop.permute.xlu0 %558
        %v561 = vmul.f32 %v553, %v559
        %562 = vst [vmem:[%s409] sm:$0xff] %v561
      $region44: #{transformer_forward.36} parent=35 // pred_fallthru
        _
      %p563 = scmp.lt.s32.totalorder %s21, 1
      %s564 = scalar_select %p563, %s21, 1
      %p565 = scmp.lt.s32.totalorder %s23, 0
      %s566 = scalar_select %p565, %s23, 0
      %p567 = scmp.lt.s32.totalorder %s22, 3
      %s568 = scalar_select %p567, %s22, 3
      %s569 = smul.addr %s566, 4
      %s570 = sadd.s32 %s568, %s569
      %s571 = smul.addr %s564, 4
      %s572 = sadd.s32 %s570, %s571
      %s573 = smul.addr %s572, 8
      %s574 = scalar_lea.vmem %s4, %s573
      // Predicated region
      $region45: #{transformer_forward.36} parent=35 // pred_check
        %p575 = pneg %p187
      $region46: #{transformer_forward.36} parent=35 // pred_check_branch
        %577 = sbr.rel (%p575) target = $region48
      $region47: #{transformer_forward.36} parent=35 // pred_region
        _
      $region48: #{transformer_forward.36} parent=35 // pred_fallthru
        _
    $region36: #{transformer_forward.36} parent=5 // pred_fallthru
      _
    %p578 = scmp.le.s32.totalorder 2, %s10
    // Predicated region
    $region49: #{transformer_forward.36} parent=5 // pred_check
      %p579 = pneg %p578
    $region50: #{transformer_forward.36} parent=5 // pred_check_branch
      %581 = sbr.rel (%p579) target = $region52
    $region51: #{transformer_forward.36} parent=5 // pred_region
      %s582 = ssub.s32 %s10, 2
      // Predicated region
      $region53: #{transformer_forward.36} parent=51 // pred_check
        %p583 = pneg %p193
      $region54: #{transformer_forward.36} parent=51 // pred_check_branch
        %585 = sbr.rel (%p583) target = $region56
      $region55: #{transformer_forward.36} parent=51 // pred_region
        %p586 = scmp.lt.s32.totalorder %s25, 1
        %s587 = scalar_select %p586, %s25, 1
        %p588 = scmp.lt.s32.totalorder %s27, 0
        %s589 = scalar_select %p588, %s27, 0
        %p590 = scmp.lt.s32.totalorder %s26, 3
        %s591 = scalar_select %p590, %s26, 3
        %s592 = smul.addr %s589, 4
        %s593 = sadd.s32 %s591, %s592
        %s594 = smul.addr %s587, 4
        %s595 = sadd.s32 %s593, %s594
        %s596 = smul.addr %s595, 8
        %s597 = scalar_lea.vmem %s4, %s596
      $region56: #{transformer_forward.36} parent=51 // pred_fallthru
        _
    $region52: #{transformer_forward.36} parent=5 // pred_fallthru
      _
  $region6: #{transformer_forward.36} parent=0 // loop_footer
    %s14 = sadd.s32 1, %s10
  $region7: #{transformer_forward.36} parent=0 // loop_footer_branch
    %9 = sbr.rel target = $region3
  $region8: #{transformer_forward.36} parent=0 // loop_exit
    _

// kernel: transformer_forward.35
$region0: #{transformer_forward.35}
  #allocation0 [shape = 'u32[]', space=smem, size = 0x4, offset = 0x4, fixed_abs, tag = 'smem constant byte address 0x4 - core index']
  #allocation1 [shape = 'u32[144,128]{1,0:T(1,128)}', space=vmem, size = 0x12000, scoped, tag = 'internal scratch']
  %s0 = inlined_call_operand.vmem [shape: f32[16,128], index: 0, kind: input, shape index: {}]
  %s1 = inlined_call_operand.vmem [shape: f32[1,128], index: 1, kind: input, shape index: {}]
  %s2 = inlined_call_operand.vmem [shape: f32[1,128], index: 2, kind: input, shape index: {}]
  %s3 = inlined_call_operand.vmem [shape: bf16[128,1536], index: 3, kind: input, shape index: {}]
  %s4 = inlined_call_operand.vmem [shape: f32[1,1536], index: 4, kind: input, shape index: {}]
  %s5 = inlined_call_operand.vmem [shape: f32[16,1536], index: 5, kind: output, shape index: {}]
  %s6 = sld [smem:[#allocation0]]
  $region95: #{transformer_forward.35} parent=0
    _
  %s8 = ssub.s32 1, %s6
  %s9 = scalar_select 0, %s8, %s6
  $region1: #{transformer_forward.35} parent=0
    #allocation2 [shape = 'u8[262144]{0}', space=vmem, size = 0x40000, scoped, tag = 'input window, operand 3']
    #allocation3 [shape = 'u8[65536]{0}', space=vmem, size = 0x10000, scoped, tag = 'output window, operand 0']
    loop: start=0, step=1, limit=5
    $region2: #{transformer_forward.35} parent=1 // loop_pre_header
      _
    $region3: #{transformer_forward.35} parent=1 // loop_header
      %s11 = sphi 0, %s15
      %p12 = scmp.ge.s32.totalorder %s11, 5
      %s18 = sphi 0, %s30
      %s19 = sphi 0, %s26
      %s20 = sphi 0, %s18
      %s21 = sphi 0, %s19
      %s22 = sphi 0, %s20
      %s23 = sphi 0, %s21
      %s33 = sphi 0, %s35
      %s36 = sphi 0, %s33
      %s37 = sphi 0, %s36
      %s53 = sphi 0, %s37
      %s57 = sphi 0, %s57
      %s59 = sphi 0, %s57
      %s60 = sphi 0, %s59
      %s74 = sphi 0, %s60
      %s78 = sphi 0, %s78
      %s80 = sphi 0, %s78
      %s81 = sphi 0, %s80
      %s95 = sphi 0, %s81
      %s101 = sphi 0, %s103
      %s104 = sphi 0, %s101
      %s105 = sphi 0, %s104
      %s121 = sphi 0, %s105
      %s127 = sphi 0, %s129
      %s130 = sphi 0, %s127
      %s131 = sphi 0, %s130
      %s147 = sphi 0, %s131
      %s155 = sphi 0, %s157
      %s158 = sphi 0, %s155
      %s159 = sphi 0, %s158
      %s175 = sphi 0, %s159
    $region4: #{transformer_forward.35} parent=1 // loop_header_branch
      %14 = sbr.rel (%p12) target = $region8
    $region5: #{transformer_forward.35} parent=1 // loop_body
      %s16 = ssub.s32 %s11, 1
      %s17 = ssub.s32 %s11, 2
      %s24 = sadd.s32 1, %s19
      %p25 = scmp.ge.s32.totalorder %s24, 3
      %s26 = scalar_select %p25, 0, %s24
      %s27 = sadd.s32 1, %s18
      %s28 = scalar_select %p25, %s27, %s18
      %p29 = scmp.ge.s32.totalorder %s28, 1
      %s30 = scalar_select %p29, 0, %s28
      %s31 = ssub.s32 %s18, %s30
      %p32 = scmp.eq.s32.totalorder %s31, 0
      %s34 = sadd.s32 %s33, 1
      %s35 = scalar_select %p32, %s33, %s34
      %p38 = pneg %p32
      %p39 = scmp.eq.s32.totalorder %s11, 2
      %p40 = por %p38, %p39
      %p41 = scmp.ne.s32.totalorder %s33, %s36
      %p42 = scmp.eq.s32.totalorder %s11, 0
      %p43 = por %p41, %p42
      %p44 = scmp.ne.s32.totalorder %s33, %s36
      %p45 = scmp.eq.s32.totalorder %s16, 2
      %p46 = por %p44, %p45
      %p47 = scmp.ne.s32.totalorder %s36, %s37
      %p48 = scmp.eq.s32.totalorder %s16, 0
      %p49 = por %p47, %p48
      %p50 = scmp.ne.s32.totalorder %s36, %s37
      %p51 = scmp.eq.s32.totalorder %s17, 2
      %p52 = por %p50, %p51
      %p54 = scmp.ne.s32.totalorder %s37, %s53
      %p55 = scmp.eq.s32.totalorder %s17, 0
      %p56 = por %p54, %p55
      %s58 = sadd.s32 %s57, 1
      %p61 = scmp.eq.s32.totalorder %s11, 2
      %p62 = scmp.ne.s32.totalorder %s57, %s59
      %p63 = scmp.eq.s32.totalorder %s11, 0
      %p64 = por %p62, %p63
      %p65 = scmp.ne.s32.totalorder %s57, %s59
      %p66 = scmp.eq.s32.totalorder %s16, 2
      %p67 = por %p65, %p66
      %p68 = scmp.ne.s32.totalorder %s59, %s60
      %p69 = scmp.eq.s32.totalorder %s16, 0
      %p70 = por %p68, %p69
      %p71 = scmp.ne.s32.totalorder %s59, %s60
      %p72 = scmp.eq.s32.totalorder %s17, 2
      %p73 = por %p71, %p72
      %p75 = scmp.ne.s32.totalorder %s60, %s74
      %p76 = scmp.eq.s32.totalorder %s17, 0
      %p77 = por %p75, %p76
      %s79 = sadd.s32 %s78, 1
      %p82 = scmp.eq.s32.totalorder %s11, 2
      %p83 = scmp.ne.s32.totalorder %s78, %s80
      %p84 = scmp.eq.s32.totalorder %s11, 0
      %p85 = por %p83, %p84
      %p86 = scmp.ne.s32.totalorder %s78, %s80
      %p87 = scmp.eq.s32.totalorder %s16, 2
      %p88 = por %p86, %p87
      %p89 = scmp.ne.s32.totalorder %s80, %s81
      %p90 = scmp.eq.s32.totalorder %s16, 0
      %p91 = por %p89, %p90
      %p92 = scmp.ne.s32.totalorder %s80, %s81
      %p93 = scmp.eq.s32.totalorder %s17, 2
      %p94 = por %p92, %p93
      %p96 = scmp.ne.s32.totalorder %s81, %s95
      %p97 = scmp.eq.s32.totalorder %s17, 0
      %p98 = por %p96, %p97
      %s99 = ssub.s32 %s19, %s26
      %p100 = scmp.eq.s32.totalorder %s99, 0
      %s102 = sadd.s32 %s101, 1
      %s103 = scalar_select %p100, %s101, %s102
      %p106 = pneg %p100
      %p107 = scmp.eq.s32.totalorder %s11, 2
      %p108 = por %p106, %p107
      %p109 = scmp.ne.s32.totalorder %s101, %s104
      %p110 = scmp.eq.s32.totalorder %s11, 0
      %p111 = por %p109, %p110
      %p112 = scmp.ne.s32.totalorder %s101, %s104
      %p113 = scmp.eq.s32.totalorder %s16, 2
      %p114 = por %p112, %p113
      %p115 = scmp.ne.s32.totalorder %s104, %s105
      %p116 = scmp.eq.s32.totalorder %s16, 0
      %p117 = por %p115, %p116
      %p118 = scmp.ne.s32.totalorder %s104, %s105
      %p119 = scmp.eq.s32.totalorder %s17, 2
      %p120 = por %p118, %p119
      %p122 = scmp.ne.s32.totalorder %s105, %s121
      %p123 = scmp.eq.s32.totalorder %s17, 0
      %p124 = por %p122, %p123
      %s125 = ssub.s32 %s19, %s26
      %p126 = scmp.eq.s32.totalorder %s125, 0
      %s128 = sadd.s32 %s127, 1
      %s129 = scalar_select %p126, %s127, %s128
      %p132 = pneg %p126
      %p133 = scmp.eq.s32.totalorder %s11, 2
      %p134 = por %p132, %p133
      %p135 = scmp.ne.s32.totalorder %s127, %s130
      %p136 = scmp.eq.s32.totalorder %s11, 0
      %p137 = por %p135, %p136
      %p138 = scmp.ne.s32.totalorder %s127, %s130
      %p139 = scmp.eq.s32.totalorder %s16, 2
      %p140 = por %p138, %p139
      %p141 = scmp.ne.s32.totalorder %s130, %s131
      %p142 = scmp.eq.s32.totalorder %s16, 0
      %p143 = por %p141, %p142
      %p144 = scmp.ne.s32.totalorder %s130, %s131
      %p145 = scmp.eq.s32.totalorder %s17, 2
      %p146 = por %p144, %p145
      %p148 = scmp.ne.s32.totalorder %s131, %s147
      %p149 = scmp.eq.s32.totalorder %s17, 0
      %p150 = por %p148, %p149
      %s151 = ssub.s32 %s18, %s30
      %s152 = ssub.s32 %s19, %s26
      %s153 = sor.u32 %s151, %s152
      %p154 = scmp.eq.s32.totalorder %s153, 0
      %s156 = sadd.s32 %s155, 1
      %s157 = scalar_select %p154, %s155, %s156
      %p160 = pneg %p154
      %p161 = scmp.eq.s32.totalorder %s11, 2
      %p162 = por %p160, %p161
      %p163 = scmp.ne.s32.totalorder %s155, %s158
      %p164 = scmp.eq.s32.totalorder %s11, 0
      %p165 = por %p163, %p164
      %p166 = scmp.ne.s32.totalorder %s155, %s158
      %p167 = scmp.eq.s32.totalorder %s16, 2
      %p168 = por %p166, %p167
      %p169 = scmp.ne.s32.totalorder %s158, %s159
      %p170 = scmp.eq.s32.totalorder %s16, 0
      %p171 = por %p169, %p170
      %p172 = scmp.ne.s32.totalorder %s158, %s159
      %p173 = scmp.eq.s32.totalorder %s17, 2
      %p174 = por %p172, %p173
      %p176 = scmp.ne.s32.totalorder %s159, %s175
      %p177 = scmp.eq.s32.totalorder %s17, 0
      %p178 = por %p176, %p177
      %p179 = scmp.le.s32.totalorder 1, %s11
      %p180 = scmp.lt.s32.totalorder %s11, 4
      %p181 = pnand %p179, %p180
      %p182 = pneg %p181
      // Predicated region
      $region9: #{transformer_forward.35} parent=5 // pred_check
        _
      $region10: #{transformer_forward.35} parent=5 // pred_check_branch
        %184 = sbr.rel (%p181) target = $region12
      $region11: #{transformer_forward.35} parent=5 // pred_region
        %s185 = ssub.s32 %s11, 1
        // Predicated region
        $region13: #{transformer_forward.35} parent=11 // pred_check
          %p186 = pneg %p49
        $region14: #{transformer_forward.35} parent=11 // pred_check_branch
          %188 = sbr.rel (%p186) target = $region16
        $region15: #{transformer_forward.35} parent=11 // pred_region
          %s189 = smul.u32 2, %s20
          %p190 = scmp.lt.s32.totalorder %s189, 1
          %s191 = scalar_select %p190, %s189, 1
          %s192 = smul.addr %s191, 8
          %s193 = scalar_lea.vmem %s0, %s192
          %s194 = smul.u32 2, %s20
        $region16: #{transformer_forward.35} parent=11 // pred_fallthru
          _
        // Predicated region
        $region17: #{transformer_forward.35} parent=11 // pred_check
          %p195 = pneg %p70
        $region18: #{transformer_forward.35} parent=11 // pred_check_branch
          %197 = sbr.rel (%p195) target = $region20
        $region19: #{transformer_forward.35} parent=11 // pred_region
          _
        $region20: #{transformer_forward.35} parent=11 // pred_fallthru
          _
        // Predicated region
        $region21: #{transformer_forward.35} parent=11 // pred_check
          %p198 = pneg %p91
        $region22: #{transformer_forward.35} parent=11 // pred_check_branch
          %200 = sbr.rel (%p198) target = $region24
        $region23: #{transformer_forward.35} parent=11 // pred_region
          _
        $region24: #{transformer_forward.35} parent=11 // pred_fallthru
          _
      $region12: #{transformer_forward.35} parent=5 // pred_fallthru
        _
      %p201 = scmp.lt.s32.totalorder %s11, 3
      // Predicated region
      $region25: #{transformer_forward.35} parent=5 // pred_check
        %p202 = pneg %p201
      $region26: #{transformer_forward.35} parent=5 // pred_check_branch
        %204 = sbr.rel (%p202) target = $region28
      $region27: #{transformer_forward.35} parent=5 // pred_region
        // Predicated region
        $region29: #{transformer_forward.35} parent=27 // pred_check
          %p205 = pneg %p111
        $region30: #{transformer_forward.35} parent=27 // pred_check_branch
          %207 = sbr.rel (%p205) target = $region32
        $region31: #{transformer_forward.35} parent=27 // pred_region
          %s208 = sand.u32 %s101, 1
          %s209 = sand.u32 %s101, 1
          %s210 = smul.addr %s209, 256
          %s211 = scalar_lea.vmem [#allocation2], %s210
          %s212 = smul.u32 4, %s19
          %s213 = smul.addr %s212, 4
          %s214 = scalar_lea.vmem %s3, %s213
          // Predicated region
          $region33: #{transformer_forward.35} parent=31 // pred_check
            _
          $region34: #{transformer_forward.35} parent=31 // pred_check_branch
            %216 = sbr.rel (0) target = $region36
          $region35: #{transformer_forward.35} parent=31 // pred_region
            // Predicated region
            $region37: #{transformer_forward.35} parent=35 // pred_check
              _
            $region38: #{transformer_forward.35} parent=35 // pred_check_branch
              %218 = sbr.rel (0) target = $region40
            $region39: #{transformer_forward.35} parent=35 // pred_region
              loop: start=0, step=1, limit=1
              $region41: #{transformer_forward.35} parent=39 // loop_pre_header
                _
              $region42: #{transformer_forward.35} parent=39 // loop_header
                %s220 = sphi 0, %s224
                %p221 = scmp.ge.s32.totalorder %s220, 1
                %s225 = sphi %s214, %s214
                %s226 = sphi %s211, %s211
              $region43: #{transformer_forward.35} parent=39 // loop_header_branch
                %223 = sbr.rel (%p221) target = $region47
              $region44: #{transformer_forward.35} parent=39 // loop_body
                %v227 = vld [vmem:[%s225] sm:$0xff]
                %228 = vst [vmem:[%s226] sm:$0xff] %v227
                %v229 = vld [vmem:[%s225 + $0x8] sm:$0xff]
                %230 = vst [vmem:[%s226 + $0x8] sm:$0xff] %v229
                %v231 = vld [vmem:[%s225 + $0x30] sm:$0xff]
                %232 = vst [vmem:[%s226 + $0x10] sm:$0xff] %v231
                %v233 = vld [vmem:[%s225 + $0x38] sm:$0xff]
                %234 = vst [vmem:[%s226 + $0x18] sm:$0xff] %v233
                %v235 = vld [vmem:[%s225 + $0x60] sm:$0xff]
                %236 = vst [vmem:[%s226 + $0x20] sm:$0xff] %v235
                %v237 = vld [vmem:[%s225 + $0x68] sm:$0xff]
                %238 = vst [vmem:[%s226 + $0x28] sm:$0xff] %v237
                %v239 = vld [vmem:[%s225 + $0x90] sm:$0xff]
                %240 = vst [vmem:[%s226 + $0x30] sm:$0xff] %v239
                %v241 = vld [vmem:[%s225 + $0x98] sm:$0xff]
                %242 = vst [vmem:[%s226 + $0x38] sm:$0xff] %v241
                %v243 = vld [vmem:[%s225 + $0xc0] sm:$0xff]
                %244 = vst [vmem:[%s226 + $0x40] sm:$0xff] %v243
                %v245 = vld [vmem:[%s225 + $0xc8] sm:$0xff]
                %246 = vst [vmem:[%s226 + $0x48] sm:$0xff] %v245
                %v247 = vld [vmem:[%s225 + $0xf0] sm:$0xff]
                %248 = vst [vmem:[%s226 + $0x50] sm:$0xff] %v247
                %v249 = vld [vmem:[%s225 + $0xf8] sm:$0xff]
                %250 = vst [vmem:[%s226 + $0x58] sm:$0xff] %v249
                %v251 = vld [vmem:[%s225 + $0x120] sm:$0xff]
                %252 = vst [vmem:[%s226 + $0x60] sm:$0xff] %v251
                %v253 = vld [vmem:[%s225 + $0x128] sm:$0xff]
                %254 = vst [vmem:[%s226 + $0x68] sm:$0xff] %v253
                %v255 = vld [vmem:[%s225 + $0x150] sm:$0xff]
                %256 = vst [vmem:[%s226 + $0x70] sm:$0xff] %v255
                %v257 = vld [vmem:[%s225 + $0x158] sm:$0xff]
                %258 = vst [vmem:[%s226 + $0x78] sm:$0xff] %v257
                %v259 = vld [vmem:[%s225 + $0x180] sm:$0xff]
                %260 = vst [vmem:[%s226 + $0x80] sm:$0xff] %v259
                %v261 = vld [vmem:[%s225 + $0x188] sm:$0xff]
                %262 = vst [vmem:[%s226 + $0x88] sm:$0xff] %v261
                %v263 = vld [vmem:[%s225 + $0x1b0] sm:$0xff]
                %264 = vst [vmem:[%s226 + $0x90] sm:$0xff] %v263
                %v265 = vld [vmem:[%s225 + $0x1b8] sm:$0xff]
                %266 = vst [vmem:[%s226 + $0x98] sm:$0xff] %v265
                %v267 = vld [vmem:[%s225 + $0x1e0] sm:$0xff]
                %268 = vst [vmem:[%s226 + $0xa0] sm:$0xff] %v267
                %v269 = vld [vmem:[%s225 + $0x1e8] sm:$0xff]
                %270 = vst [vmem:[%s226 + $0xa8] sm:$0xff] %v269
                %v271 = vld [vmem:[%s225 + $0x210] sm:$0xff]
                %272 = vst [vmem:[%s226 + $0xb0] sm:$0xff] %v271
                %v273 = vld [vmem:[%s225 + $0x218] sm:$0xff]
                %274 = vst [vmem:[%s226 + $0xb8] sm:$0xff] %v273
                %v275 = vld [vmem:[%s225 + $0x240] sm:$0xff]
                %276 = vst [vmem:[%s226 + $0xc0] sm:$0xff] %v275
                %v277 = vld [vmem:[%s225 + $0x248] sm:$0xff]
                %278 = vst [vmem:[%s226 + $0xc8] sm:$0xff] %v277
                %v279 = vld [vmem:[%s225 + $0x270] sm:$0xff]
                %280 = vst [vmem:[%s226 + $0xd0] sm:$0xff] %v279
                %v281 = vld [vmem:[%s225 + $0x278] sm:$0xff]
                %282 = vst [vmem:[%s226 + $0xd8] sm:$0xff] %v281
                %v283 = vld [vmem:[%s225 + $0x2a0] sm:$0xff]
                %284 = vst [vmem:[%s226 + $0xe0] sm:$0xff] %v283
                %v285 = vld [vmem:[%s225 + $0x2a8] sm:$0xff]
                %286 = vst [vmem:[%s226 + $0xe8] sm:$0xff] %v285
                %v287 = vld [vmem:[%s225 + $0x2d0] sm:$0xff]
                %288 = vst [vmem:[%s226 + $0xf0] sm:$0xff] %v287
                %v289 = vld [vmem:[%s225 + $0x2d8] sm:$0xff]
                %290 = vst [vmem:[%s226 + $0xf8] sm:$0xff] %v289
              $region45: #{transformer_forward.35} parent=39 // loop_footer
                %s224 = sadd.s32 1, %s220
              $region46: #{transformer_forward.35} parent=39 // loop_footer_branch
                %219 = sbr.rel target = $region42
              $region47: #{transformer_forward.35} parent=39 // loop_exit
                _
            $region40: #{transformer_forward.35} parent=35 // pred_fallthru
              _
            // Predicated region
            $region48: #{transformer_forward.35} parent=35 // pred_check
              _
            $region49: #{transformer_forward.35} parent=35 // pred_check_branch
              %292 = sbr.rel target = $region51
            $region50: #{transformer_forward.35} parent=35 // pred_region
              _
            $region51: #{transformer_forward.35} parent=35 // pred_fallthru
              _
          $region36: #{transformer_forward.35} parent=31 // pred_fallthru
            _
          %293 = vnop
        $region32: #{transformer_forward.35} parent=27 // pred_fallthru
          _
        // Predicated region
        $region52: #{transformer_forward.35} parent=27 // pred_check
          %p294 = pneg %p137
        $region53: #{transformer_forward.35} parent=27 // pred_check_branch
          %296 = sbr.rel (%p294) target = $region55
        $region54: #{transformer_forward.35} parent=27 // pred_region
          %s297 = smul.u32 4, %s19
          %p298 = scmp.lt.s32.totalorder %s297, 11
          %s299 = scalar_select %p298, %s297, 11
          %s300 = scalar_lea.vmem %s4, %s299
          %s301 = smul.u32 4, %s19
        $region55: #{transformer_forward.35} parent=27 // pred_fallthru
          _
      $region28: #{transformer_forward.35} parent=5 // pred_fallthru
        _
      %p302 = scmp.le.s32.totalorder 1, %s11
      %p303 = scmp.lt.s32.totalorder %s11, 4
      %p304 = pnand %p302, %p303
      %p305 = pneg %p304
      // Predicated region
      $region56: #{transformer_forward.35} parent=5 // pred_check
        _
      $region57: #{transformer_forward.35} parent=5 // pred_check_branch
        %307 = sbr.rel (%p304) target = $region59
      $region58: #{transformer_forward.35} parent=5 // pred_region
        %s308 = ssub.s32 %s11, 1
        %s309 = sand.u32 %s104, 1
        %s310 = sand.u32 %s104, 1
        %s311 = smul.addr %s310, 256
        %s312 = scalar_lea.vmem [#allocation2], %s311
        // Predicated region
        $region60: #{transformer_forward.35} parent=58 // pred_check
          %p313 = pneg %p117
        $region61: #{transformer_forward.35} parent=58 // pred_check_branch
          %315 = sbr.rel (%p313) target = $region63
        $region62: #{transformer_forward.35} parent=58 // pred_region
          _
        $region63: #{transformer_forward.35} parent=58 // pred_fallthru
          _
        %s316 = smul.u32 2, %s20
        %p317 = scmp.lt.s32.totalorder %s316, 1
        %s318 = scalar_select %p317, %s316, 1
        %s319 = smul.addr %s318, 8
        %s320 = scalar_lea.vmem %s0, %s319
        %p321 = pneg %p49
        %p322 = pneg %p46
        %p323 = pneg %p70
        %p324 = pneg %p67
        %p325 = pneg %p91
        %p326 = pneg %p88
        %s327 = sand.u32 %s104, 1
        %s328 = sand.u32 %s104, 1
        %s329 = smul.addr %s328, 256
        %s330 = scalar_lea.vmem [#allocation2], %s329
        %p331 = pneg %p117
        %p332 = pneg %p114
        %s333 = smul.u32 4, %s21
        %p334 = scmp.lt.s32.totalorder %s333, 11
        %s335 = scalar_select %p334, %s333, 11
        %s336 = scalar_lea.vmem %s4, %s335
        %p337 = pneg %p143
        %p338 = pneg %p140
        %p339 = pneg %p171
        %p340 = pneg %p168
        %s341 = sand.u32 %s158, 1
        %s342 = sand.u32 %s158, 1
        %s343 = smul.addr %s342, 64
        %s344 = scalar_lea.vmem [#allocation3], %s343
        %s345 = smul.u32 2, %s20
        %p346 = scmp.lt.s32.totalorder %s345, 1
        %s347 = scalar_select %p346, %s345, 1
        %s348 = smul.addr %s347, 8
        %s349 = scalar_lea.vmem %s0, %s348
        %s350 = smul.u32 2, %s20
        %s351 = smul.u32 4, %s21
        %s352 = smul.u32 4, %s21
        %p353 = scmp.lt.s32.totalorder %s352, 11
        %s354 = scalar_select %p353, %s352, 11
        %s355 = scalar_lea.vmem %s4, %s354
        %s356 = smul.u32 4, %s21
        %s357 = smul.u32 2, %s20
        %s358 = smul.u32 4, %s21
        %v360 = vld [vmem:[%s349] sm:$0xff]
        %v361 = vld [vmem:[%s349 + $0x8] sm:$0xff]
        %v362 = vlaneseq
        %v363 = vand.u32 %v362, 127
        %vm364 = vcmp.lt.s32.totalorder %v363, 32
        %v365 = vsel %vm364, %v360, 0.0
        %v366 = vsel %vm364, %v361, 0.0
        %367 = vadd.xlane.f32.xlu0 %v365
        %v368 = vpop.xlane.xlu0 %367
        %369 = vadd.xlane.f32.xlu0 %v366
        %v370 = vpop.xlane.xlu0 %369
        %v371 = vmul.f32 %v368, 0.03125
        %v372 = vmul.f32 %v370, 0.03125
        %v373 = vsub.f32 %v360, %v371
        %v374 = vsub.f32 %v361, %v372
        %v375 = vsel %vm364, %v373, 0.0
        %v376 = vsel %vm364, %v374, 0.0
        %v377 = vmul.f32 %v375, %v375
        %v378 = vmul.f32 %v376, %v376
        %379 = vadd.xlane.f32.xlu0 %v377
        %v380 = vpop.xlane.xlu0 %379
        %381 = vadd.xlane.f32.xlu0 %v378
        %v382 = vpop.xlane.xlu0 %381
        %v383 = vmul.f32 %v380, 0.032258064
        %v384 = vmul.f32 %v382, 0.032258064
        %v385 = vrsqrt.pop %v383
        %v386 = vmul.f32 %v383, %v385
        %vm387 = vcmp.eq.f32.partialorder %v383, inf
        %v388 = vsel %vm387, %v383, %v386
        %vm389 = vcmp.eq.f32.partialorder %v383, 0.0
        %v390 = vand.u32 %v383, 2147483648
        %v391 = vsel %vm389, %v390, %v388
        %v392 = vrsqrt.pop %v384
        %v393 = vmul.f32 %v384, %v392
        %vm394 = vcmp.eq.f32.partialorder %v384, inf
        %v395 = vsel %vm394, %v384, %v393
        %vm396 = vcmp.eq.f32.partialorder %v384, 0.0
        %v397 = vand.u32 %v384, 2147483648
        %v398 = vsel %vm396, %v397, %v395
        %v399 = vadd.f32 %v391, 1e-06
        %v400 = vadd.f32 %v398, 1e-06
        %v401 = vrcp.pop %v399
        %v402 = vrcp.pop %v400
        %v403 = vld [vmem:[%s1] sm:$0x1]
        %v405 = vlaneseq
        %v406 = vshrl.u32 %v405, 7
        %v407 = vsub.s32 0, %v406
        %v408 = vrot.slane %v403, %v407
        %v410 = vmul.f32 %v408, %v373
        %v411 = vmul.f32 %v408, %v374
        %v412 = vmul.f32 %v410, %v401
        %v413 = vmul.f32 %v411, %v402
        %v414 = vld [vmem:[%s2] sm:$0x1]
        %v416 = vlaneseq
        %v417 = vshrl.u32 %v416, 7
        %v418 = vsub.s32 0, %v417
        %v419 = vrot.slane %v414, %v418
        %v421 = vadd.f32 %v412, %v419
        %v422 = vadd.f32 %v413, %v419
        %v423 = vpack.c.bf16 %v422, %v421
        %v424 = vld [vmem:[%s312] sm:$0xff]
        %v425 = vld [vmem:[%s312 + $0x8] sm:$0xff]
        %v426 = vld [vmem:[%s312 + $0x10] sm:$0xff]
        %v427 = vld [vmem:[%s312 + $0x18] sm:$0xff]
        %v428 = vld [vmem:[%s312 + $0x20] sm:$0xff]
        %v429 = vld [vmem:[%s312 + $0x28] sm:$0xff]
        %v430 = vld [vmem:[%s312 + $0x30] sm:$0xff]
        %v431 = vld [vmem:[%s312 + $0x38] sm:$0xff]
        %v432 = vld [vmem:[%s312 + $0x40] sm:$0xff]
        %v433 = vld [vmem:[%s312 + $0x48] sm:$0xff]
        %v434 = vld [vmem:[%s312 + $0x50] sm:$0xff]
        %v435 = vld [vmem:[%s312 + $0x58] sm:$0xff]
        %v436 = vld [vmem:[%s312 + $0x60] sm:$0xff]
        %v437 = vld [vmem:[%s312 + $0x68] sm:$0xff]
        %v438 = vld [vmem:[%s312 + $0x70] sm:$0xff]
        %v439 = vld [vmem:[%s312 + $0x78] sm:$0xff]
        %v440 = vld [vmem:[%s312 + $0x80] sm:$0xff]
        %v441 = vld [vmem:[%s312 + $0x88] sm:$0xff]
        %v442 = vld [vmem:[%s312 + $0x90] sm:$0xff]
        %v443 = vld [vmem:[%s312 + $0x98] sm:$0xff]
        %v444 = vld [vmem:[%s312 + $0xa0] sm:$0xff]
        %v445 = vld [vmem:[%s312 + $0xa8] sm:$0xff]
        %v446 = vld [vmem:[%s312 + $0xb0] sm:$0xff]
        %v447 = vld [vmem:[%s312 + $0xb8] sm:$0xff]
        %v448 = vld [vmem:[%s312 + $0xc0] sm:$0xff]
        %v449 = vld [vmem:[%s312 + $0xc8] sm:$0xff]
        %v450 = vld [vmem:[%s312 + $0xd0] sm:$0xff]
        %v451 = vld [vmem:[%s312 + $0xd8] sm:$0xff]
        %v452 = vld [vmem:[%s312 + $0xe0] sm:$0xff]
        %v453 = vld [vmem:[%s312 + $0xe8] sm:$0xff]
        %v454 = vld [vmem:[%s312 + $0xf0] sm:$0xff]
        %v455 = vld [vmem:[%s312 + $0xf8] sm:$0xff]
        %v456 = vld [vmem:[%s355] sm:$0xf]
        %v458 = vlaneseq
        %v459 = vshrl.u32 %v458, 7
        %v460 = vsub.s32 0, %v459
        %v461 = vrot.slane %v456, %v460
        %v462 = vlaneseq
        %v463 = vshrl.u32 %v462, 7
        %v464 = vsub.s32 1, %v463
        %v465 = vrot.slane %v456, %v464
        %v466 = vlaneseq
        %v467 = vshrl.u32 %v466, 7
        %v468 = vsub.s32 2, %v467
        %v469 = vrot.slane %v456, %v468
        %v470 = vlaneseq
        %v471 = vshrl.u32 %v470, 7
        %v472 = vsub.s32 3, %v471
        %v473 = vrot.slane %v456, %v472
        %v510 = vunpack.c.l.b16 %v424
        %v511 = vunpack.c.h.b16 %v424
        %v512 = vunpack.c.l.b16 %v425
        %v513 = vunpack.c.h.b16 %v425
        %v514 = vunpack.c.l.b16 %v426
        %v515 = vunpack.c.h.b16 %v426
        %v516 = vunpack.c.l.b16 %v427
        %v517 = vunpack.c.h.b16 %v427
        %v518 = vunpack.c.l.b16 %v428
        %v519 = vunpack.c.h.b16 %v428
        %v520 = vunpack.c.l.b16 %v429
        %v521 = vunpack.c.h.b16 %v429
        %v522 = vunpack.c.l.b16 %v430
        %v523 = vunpack.c.h.b16 %v430
        %v524 = vunpack.c.l.b16 %v431
        %v525 = vunpack.c.h.b16 %v431
        %v526 = vunpack.c.l.b16 %v432
        %v527 = vunpack.c.h.b16 %v432
        %v528 = vunpack.c.l.b16 %v433
        %v529 = vunpack.c.h.b16 %v433
        %v530 = vunpack.c.l.b16 %v434
        %v531 = vunpack.c.h.b16 %v434
        %v532 = vunpack.c.l.b16 %v435
        %v533 = vunpack.c.h.b16 %v435
        %v534 = vunpack.c.l.b16 %v436
        %v535 = vunpack.c.h.b16 %v436
        %v536 = vunpack.c.l.b16 %v437
        %v537 = vunpack.c.h.b16 %v437
        %v538 = vunpack.c.l.b16 %v438
        %v539 = vunpack.c.h.b16 %v438
        %v540 = vunpack.c.l.b16 %v439
        %v541 = vunpack.c.h.b16 %v439
        %v542 = vunpack.c.l.b16 %v440
        %v543 = vunpack.c.h.b16 %v440
        %v544 = vunpack.c.l.b16 %v441
        %v545 = vunpack.c.h.b16 %v441
        %v546 = vunpack.c.l.b16 %v442
        %v547 = vunpack.c.h.b16 %v442
        %v548 = vunpack.c.l.b16 %v443
        %v549 = vunpack.c.h.b16 %v443
        %v550 = vunpack.c.l.b16 %v444
        %v551 = vunpack.c.h.b16 %v444
        %v552 = vunpack.c.l.b16 %v445
        %v553 = vunpack.c.h.b16 %v445
        %v554 = vunpack.c.l.b16 %v446
        %v555 = vunpack.c.h.b16 %v446
        %v556 = vunpack.c.l.b16 %v447
        %v557 = vunpack.c.h.b16 %v447
        %v558 = vunpack.c.l.b16 %v448
        %v559 = vunpack.c.h.b16 %v448
        %v560 = vunpack.c.l.b16 %v449
        %v561 = vunpack.c.h.b16 %v449
        %v562 = vunpack.c.l.b16 %v450
        %v563 = vunpack.c.h.b16 %v450
        %v564 = vunpack.c.l.b16 %v451
        %v565 = vunpack.c.h.b16 %v451
        %v566 = vunpack.c.l.b16 %v452
        %v567 = vunpack.c.h.b16 %v452
        %v568 = vunpack.c.l.b16 %v453
        %v569 = vunpack.c.h.b16 %v453
        %v570 = vunpack.c.l.b16 %v454
        %v571 = vunpack.c.h.b16 %v454
        %v572 = vunpack.c.l.b16 %v455
        %v573 = vunpack.c.h.b16 %v455
        %v574 = vpack.c.b16 %v514, %v510
        %v575 = vpack.c.b16 %v515, %v511
        %v576 = vpack.c.b16 %v516, %v512
        %v577 = vpack.c.b16 %v517, %v513
        %v578 = vpack.c.b16 %v522, %v518
        %v579 = vpack.c.b16 %v523, %v519
        %v580 = vpack.c.b16 %v524, %v520
        %v581 = vpack.c.b16 %v525, %v521
        %v582 = vpack.c.b16 %v530, %v526
        %v583 = vpack.c.b16 %v531, %v527
        %v584 = vpack.c.b16 %v532, %v528
        %v585 = vpack.c.b16 %v533, %v529
        %v586 = vpack.c.b16 %v538, %v534
        %v587 = vpack.c.b16 %v539, %v535
        %v588 = vpack.c.b16 %v540, %v536
        %v589 = vpack.c.b16 %v541, %v537
        %v590 = vpack.c.b16 %v546, %v542
        %v591 = vpack.c.b16 %v547, %v543
        %v592 = vpack.c.b16 %v548, %v544
        %v593 = vpack.c.b16 %v549, %v545
        %v594 = vpack.c.b16 %v554, %v550
        %v595 = vpack.c.b16 %v555, %v551
        %v596 = vpack.c.b16 %v556, %v552
        %v597 = vpack.c.b16 %v557, %v553
        %v598 = vpack.c.b16 %v562, %v558
        %v599 = vpack.c.b16 %v563, %v559
        %v600 = vpack.c.b16 %v564, %v560
        %v601 = vpack.c.b16 %v565, %v561
        %v602 = vpack.c.b16 %v570, %v566
        %v603 = vpack.c.b16 %v571, %v567
        %v604 = vpack.c.b16 %v572, %v568
        %v605 = vpack.c.b16 %v573, %v569
        %638 = vmatprep.subr.bf16.mxu0 %v575
        %639 = vmatpush1.bf16.msra.mxu0 %v574
        %640 = vmatprep.subr.bf16.mxu0 %v579
        %641 = vmatpush1.bf16.msra.mxu0 %v578
        %642 = vmatprep.subr.bf16.mxu0 %v583
        %643 = vmatpush1.bf16.msra.mxu0 %v582
        %644 = vmatprep.subr.bf16.mxu0 %v587
        %645 = vmatpush1.bf16.msra.mxu0 %v586
        %646 = vmatprep.subr.bf16.mxu0 %v591
        %647 = vmatpush1.bf16.msra.mxu0 %v590
        %648 = vmatprep.subr.bf16.mxu0 %v595
        %649 = vmatpush1.bf16.msra.mxu0 %v594
        %650 = vmatprep.subr.bf16.mxu0 %v599
        %651 = vmatpush1.bf16.msra.mxu0 %v598
        %652 = vmatprep.subr.bf16.mxu0 %v603
        %653 = vmatpush1.bf16.msra.mxu0 %v602
        %654 = vmatprep.subr.bf16.mxu0 0
        %655 = vmatpush1.bf16.msra.mxu0 0
        %656 = vmatprep.subr.bf16.mxu0 0
        %657 = vmatpush1.bf16.msra.mxu0 0
        %658 = vmatprep.subr.bf16.mxu0 0
        %659 = vmatpush1.bf16.msra.mxu0 0
        %660 = vmatprep.subr.bf16.mxu0 0
        %661 = vmatpush1.bf16.msra.mxu0 0
        %662 = vmatprep.subr.bf16.mxu0 0
        %663 = vmatpush1.bf16.msra.mxu0 0
        %664 = vmatprep.subr.bf16.mxu0 0
        %665 = vmatpush1.bf16.msra.mxu0 0
        %666 = vmatprep.subr.bf16.mxu0 0
        %667 = vmatpush1.bf16.msra.mxu0 0
        %668 = vmatprep.subr.bf16.mxu0 0
        %669 = vmatpush1.bf16.msra.mxu0 0
        %670 = vmatprep.mubr.bf16.mxu0 0
        %671 = vmatmul.mubr.bf16.gmra.mrb[0].mxu0 %v423
        %v672 = vpop.f32.mrb[0].mxu0
        %v673 = vadd.f32 %v461, %v672
        %v674 = vpop.f32.mrb[0].mxu0
        %v675 = vadd.f32 %v465, %v674
        %v676 = vpop.f32.mrb[0].mxu0
        %v677 = vadd.f32 %v461, %v676
        %v678 = vpop.f32.mrb[0].mxu0
        %v679 = vadd.f32 %v465, %v678
        %680 = vdwg.mxu0
        %681 = vmatprep.subr.bf16.mxu0 %v577
        %682 = vmatpush1.bf16.msra.mxu0 %v576
        %683 = vmatprep.subr.bf16.mxu0 %v581
        %684 = vmatpush1.bf16.msra.mxu0 %v580
        %685 = vmatprep.subr.bf16.mxu0 %v585
        %686 = vmatpush1.bf16.msra.mxu0 %v584
        %687 = vmatprep.subr.bf16.mxu0 %v589
        %688 = vmatpush1.bf16.msra.mxu0 %v588
        %689 = vmatprep.subr.bf16.mxu0 %v593
        %690 = vmatpush1.bf16.msra.mxu0 %v592
        %691 = vmatprep.subr.bf16.mxu0 %v597
        %692 = vmatpush1.bf16.msra.mxu0 %v596
        %693 = vmatprep.subr.bf16.mxu0 %v601
        %694 = vmatpush1.bf16.msra.mxu0 %v600
        %695 = vmatprep.subr.bf16.mxu0 %v605
        %696 = vmatpush1.bf16.msra.mxu0 %v604
        %697 = vmatprep.subr.bf16.mxu0 0
        %698 = vmatpush1.bf16.msra.mxu0 0
        %699 = vmatprep.subr.bf16.mxu0 0
        %700 = vmatpush1.bf16.msra.mxu0 0
        %701 = vmatprep.subr.bf16.mxu0 0
        %702 = vmatpush1.bf16.msra.mxu0 0
        %703 = vmatprep.subr.bf16.mxu0 0
        %704 = vmatpush1.bf16.msra.mxu0 0
        %705 = vmatprep.subr.bf16.mxu0 0
        %706 = vmatpush1.bf16.msra.mxu0 0
        %707 = vmatprep.subr.bf16.mxu0 0
        %708 = vmatpush1.bf16.msra.mxu0 0
        %709 = vmatprep.subr.bf16.mxu0 0
        %710 = vmatpush1.bf16.msra.mxu0 0
        %711 = vmatprep.subr.bf16.mxu0 0
        %712 = vmatpush1.bf16.msra.mxu0 0
        %713 = vmatprep.mubr.bf16.mxu0 0
        %714 = vmatmul.mubr.bf16.gmra.mrb[0].mxu0 %v423
        %v715 = vpop.f32.mrb[0].mxu0
        %v716 = vadd.f32 %v469, %v715
        %v717 = vpop.f32.mrb[0].mxu0
        %v718 = vadd.f32 %v473, %v717
        %v719 = vpop.f32.mrb[0].mxu0
        %v720 = vadd.f32 %v469, %v719
        %v721 = vpop.f32.mrb[0].mxu0
        %v722 = vadd.f32 %v473, %v721
        %723 = vdwg.mxu0
        %724 = vst [vmem:[%s344] sm:$0xff] %v673
        %725 = vst [vmem:[%s344 + $0x8] sm:$0xff] %v675
        %726 = vst [vmem:[%s344 + $0x10] sm:$0xff] %v716
        %727 = vst [vmem:[%s344 + $0x18] sm:$0xff] %v718
        %728 = vst [vmem:[%s344 + $0x20] sm:$0xff] %v677
        %729 = vst [vmem:[%s344 + $0x28] sm:$0xff] %v679
        %730 = vst [vmem:[%s344 + $0x30] sm:$0xff] %v720
        %731 = vst [vmem:[%s344 + $0x38] sm:$0xff] %v722
        %s732 = sand.u32 %s158, 1
        %s733 = sand.u32 %s158, 1
        %s734 = smul.addr %s733, 64
        %s735 = scalar_lea.vmem [#allocation3], %s734
        // Predicated region
        $region64: #{transformer_forward.35} parent=58 // pred_check
          %p736 = pneg %p168
        $region65: #{transformer_forward.35} parent=58 // pred_check_branch
          %738 = sbr.rel (%p736) target = $region67
        $region66: #{transformer_forward.35} parent=58 // pred_region
          %s739 = smul.u32 2, %s20
          %s740 = smul.u32 4, %s21
          %s741 = smul.addr %s739, 12
          %s742 = sadd.s32 %s740, %s741
          %s743 = smul.addr %s742, 8
          %s744 = scalar_lea.vmem %s5, %s743
          // Predicated region
          $region68: #{transformer_forward.35} parent=66 // pred_check
            _
          $region69: #{transformer_forward.35} parent=66 // pred_check_branch
            %746 = sbr.rel (0) target = $region71
          $region70: #{transformer_forward.35} parent=66 // pred_region
            // Predicated region
            $region72: #{transformer_forward.35} parent=70 // pred_check
              _
            $region73: #{transformer_forward.35} parent=70 // pred_check_branch
              %748 = sbr.rel (0) target = $region75
            $region74: #{transformer_forward.35} parent=70 // pred_region
              loop: start=0, step=1, limit=1
              $region76: #{transformer_forward.35} parent=74 // loop_pre_header
                _
              $region77: #{transformer_forward.35} parent=74 // loop_header
                %s750 = sphi 0, %s754
                %p751 = scmp.ge.s32.totalorder %s750, 1
                %s755 = sphi %s735, %s735
                %s756 = sphi %s744, %s744
              $region78: #{transformer_forward.35} parent=74 // loop_header_branch
                %753 = sbr.rel (%p751) target = $region82
              $region79: #{transformer_forward.35} parent=74 // loop_body
                %v757 = vld [vmem:[%s755] sm:$0xff]
                %758 = vst [vmem:[%s756] sm:$0xff] %v757
                %v759 = vld [vmem:[%s755 + $0x8] sm:$0xff]
                %760 = vst [vmem:[%s756 + $0x8] sm:$0xff] %v759
                %v761 = vld [vmem:[%s755 + $0x10] sm:$0xff]
                %762 = vst [vmem:[%s756 + $0x10] sm:$0xff] %v761
                %v763 = vld [vmem:[%s755 + $0x18] sm:$0xff]
                %764 = vst [vmem:[%s756 + $0x18] sm:$0xff] %v763
                %v765 = vld [vmem:[%s755 + $0x20] sm:$0xff]
                %766 = vst [vmem:[%s756 + $0x60] sm:$0xff] %v765
                %v767 = vld [vmem:[%s755 + $0x28] sm:$0xff]
                %768 = vst [vmem:[%s756 + $0x68] sm:$0xff] %v767
                %v769 = vld [vmem:[%s755 + $0x30] sm:$0xff]
                %770 = vst [vmem:[%s756 + $0x70] sm:$0xff] %v769
                %v771 = vld [vmem:[%s755 + $0x38] sm:$0xff]
                %772 = vst [vmem:[%s756 + $0x78] sm:$0xff] %v771
              $region80: #{transformer_forward.35} parent=74 // loop_footer
                %s754 = sadd.s32 1, %s750
              $region81: #{transformer_forward.35} parent=74 // loop_footer_branch
                %749 = sbr.rel target = $region77
              $region82: #{transformer_forward.35} parent=74 // loop_exit
                _
            $region75: #{transformer_forward.35} parent=70 // pred_fallthru
              _
            // Predicated region
            $region83: #{transformer_forward.35} parent=70 // pred_check
              _
            $region84: #{transformer_forward.35} parent=70 // pred_check_branch
              %774 = sbr.rel target = $region86
            $region85: #{transformer_forward.35} parent=70 // pred_region
              _
            $region86: #{transformer_forward.35} parent=70 // pred_fallthru
              _
          $region71: #{transformer_forward.35} parent=66 // pred_fallthru
            _
          %775 = vnop
        $region67: #{transformer_forward.35} parent=58 // pred_fallthru
          _
      $region59: #{transformer_forward.35} parent=5 // pred_fallthru
        _
      %p776 = scmp.le.s32.totalorder 2, %s11
      // Predicated region
      $region87: #{transformer_forward.35} parent=5 // pred_check
        %p777 = pneg %p776
      $region88: #{transformer_forward.35} parent=5 // pred_check_branch
        %779 = sbr.rel (%p777) target = $region90
      $region89: #{transformer_forward.35} parent=5 // pred_region
        %s780 = ssub.s32 %s11, 2
        // Predicated region
        $region91: #{transformer_forward.35} parent=89 // pred_check
          %p781 = pneg %p174
        $region92: #{transformer_forward.35} parent=89 // pred_check_branch
          %783 = sbr.rel (%p781) target = $region94
        $region93: #{transformer_forward.35} parent=89 // pred_region
          %s784 = sand.u32 %s159, 1
          %s785 = sand.u32 %s159, 1
          %s786 = smul.addr %s785, 64
          %s787 = scalar_lea.vmem [#allocation3], %s786
        $region94: #{transformer_forward.35} parent=89 // pred_fallthru
          _
      $region90: #{transformer_forward.35} parent=5 // pred_fallthru
        _
    $region6: #{transformer_forward.35} parent=1 // loop_footer
      %s15 = sadd.s32 1, %s11
    $region7: #{transformer_forward.35} parent=1 // loop_footer_branch
      %10 = sbr.rel target = $region3
    $region8: #{transformer_forward.35} parent=1 // loop_exit
      _

// kernel: transformer_forward.37
$region0: #{transformer_forward.37}
  #allocation0 [shape = 'u32[]', space=smem, size = 0x4, offset = 0x4, fixed_abs, tag = 'smem constant byte address 0x4 - core index']
  #allocation1 [shape = 'u32[144,128]{1,0:T(1,128)}', space=vmem, size = 0x12000, scoped, tag = 'internal scratch']
  %s0 = inlined_call_operand.vmem [shape: f32[16,512], index: 0, kind: input, shape index: {}]
  %s1 = inlined_call_operand.vmem [shape: bf16[512,128], index: 1, kind: input, shape index: {}]
  %s2 = inlined_call_operand.vmem [shape: f32[1,128], index: 2, kind: input, shape index: {}]
  %s3 = inlined_call_operand.vmem [shape: f32[16,128], index: 3, kind: input, shape index: {}]
  %s4 = inlined_call_operand.vmem [shape: f32[16,128], index: 4, kind: output, shape index: {}]
  %s5 = sld [smem:[#allocation0]]
  $region26: #{transformer_forward.37} parent=0
    _
  %s7 = ssub.s32 1, %s5
  %s8 = scalar_select 0, %s7, %s5
  // Predicated region
  $region2: #{transformer_forward.37} parent=0 // pred_check
    _
  $region3: #{transformer_forward.37} parent=0 // pred_check_branch
    %10 = sbr.rel (0) target = $region5
  $region4: #{transformer_forward.37} parent=0 // pred_region
    _
  $region5: #{transformer_forward.37} parent=0 // pred_fallthru
    _
  // Predicated region
  $region6: #{transformer_forward.37} parent=0 // pred_check
    _
  $region7: #{transformer_forward.37} parent=0 // pred_check_branch
    %12 = sbr.rel (0) target = $region9
  $region8: #{transformer_forward.37} parent=0 // pred_region
    _
  $region9: #{transformer_forward.37} parent=0 // pred_fallthru
    _
  // Predicated region
  $region10: #{transformer_forward.37} parent=0 // pred_check
    _
  $region11: #{transformer_forward.37} parent=0 // pred_check_branch
    %14 = sbr.rel (0) target = $region13
  $region12: #{transformer_forward.37} parent=0 // pred_region
    _
  $region13: #{transformer_forward.37} parent=0 // pred_fallthru
    _
  // Predicated region
  $region14: #{transformer_forward.37} parent=0 // pred_check
    _
  $region15: #{transformer_forward.37} parent=0 // pred_check_branch
    %16 = sbr.rel (0) target = $region17
  $region16: #{transformer_forward.37} parent=0 // pred_region
    _
  $region17: #{transformer_forward.37} parent=0 // pred_fallthru
    _
  %v18 = vld [vmem:[%s0] sm:$0xff]
  %v19 = vld [vmem:[%s0 + $0x8] sm:$0xff]
  %v20 = vld [vmem:[%s0 + $0x10] sm:$0xff]
  %v21 = vld [vmem:[%s0 + $0x18] sm:$0xff]
  %v22 = vld [vmem:[%s0 + $0x20] sm:$0xff]
  %v23 = vld [vmem:[%s0 + $0x28] sm:$0xff]
  %v24 = vld [vmem:[%s0 + $0x30] sm:$0xff]
  %v25 = vld [vmem:[%s0 + $0x38] sm:$0xff]
  %v26 = vpack.c.bf16 %v22, %v18
  %v27 = vpack.c.bf16 %v23, %v19
  %v28 = vpack.c.bf16 %v24, %v20
  %v29 = vpack.c.bf16 %v25, %v21
  %v30 = vld [vmem:[%s1] sm:$0xf]
  %v31 = vld [vmem:[%s1 + $0x4] sm:$0xf]
  %v32 = vld [vmem:[%s1 + $0x8] sm:$0xf]
  %v33 = vld [vmem:[%s1 + $0xc] sm:$0xf]
  %v34 = vld [vmem:[%s1 + $0x10] sm:$0xf]
  %v35 = vld [vmem:[%s1 + $0x14] sm:$0xf]
  %v36 = vld [vmem:[%s1 + $0x18] sm:$0xf]
  %v37 = vld [vmem:[%s1 + $0x1c] sm:$0xf]
  %v38 = vld [vmem:[%s1 + $0x20] sm:$0xf]
  %v39 = vld [vmem:[%s1 + $0x24] sm:$0xf]
  %v40 = vld [vmem:[%s1 + $0x28] sm:$0xf]
  %v41 = vld [vmem:[%s1 + $0x2c] sm:$0xf]
  %v42 = vld [vmem:[%s1 + $0x30] sm:$0xf]
  %v43 = vld [vmem:[%s1 + $0x34] sm:$0xf]
  %v44 = vld [vmem:[%s1 + $0x38] sm:$0xf]
  %v45 = vld [vmem:[%s1 + $0x3c] sm:$0xf]
  %v46 = vld [vmem:[%s1 + $0x40] sm:$0xf]
  %v47 = vld [vmem:[%s1 + $0x44] sm:$0xf]
  %v48 = vld [vmem:[%s1 + $0x48] sm:$0xf]
  %v49 = vld [vmem:[%s1 + $0x4c] sm:$0xf]
  %v50 = vld [vmem:[%s1 + $0x50] sm:$0xf]
  %v51 = vld [vmem:[%s1 + $0x54] sm:$0xf]
  %v52 = vld [vmem:[%s1 + $0x58] sm:$0xf]
  %v53 = vld [vmem:[%s1 + $0x5c] sm:$0xf]
  %v54 = vld [vmem:[%s1 + $0x60] sm:$0xf]
  %v55 = vld [vmem:[%s1 + $0x64] sm:$0xf]
  %v56 = vld [vmem:[%s1 + $0x68] sm:$0xf]
  %v57 = vld [vmem:[%s1 + $0x6c] sm:$0xf]
  %v58 = vld [vmem:[%s1 + $0x70] sm:$0xf]
  %v59 = vld [vmem:[%s1 + $0x74] sm:$0xf]
  %v60 = vld [vmem:[%s1 + $0x78] sm:$0xf]
  %v61 = vld [vmem:[%s1 + $0x7c] sm:$0xf]
  %v62 = vld [vmem:[%s1 + $0x80] sm:$0xf]
  %v63 = vld [vmem:[%s1 + $0x84] sm:$0xf]
  %v64 = vld [vmem:[%s1 + $0x88] sm:$0xf]
  %v65 = vld [vmem:[%s1 + $0x8c] sm:$0xf]
  %v66 = vld [vmem:[%s1 + $0x90] sm:$0xf]
  %v67 = vld [vmem:[%s1 + $0x94] sm:$0xf]
  %v68 = vld [vmem:[%s1 + $0x98] sm:$0xf]
  %v69 = vld [vmem:[%s1 + $0x9c] sm:$0xf]
  %v70 = vld [vmem:[%s1 + $0xa0] sm:$0xf]
  %v71 = vld [vmem:[%s1 + $0xa4] sm:$0xf]
  %v72 = vld [vmem:[%s1 + $0xa8] sm:$0xf]
  %v73 = vld [vmem:[%s1 + $0xac] sm:$0xf]
  %v74 = vld [vmem:[%s1 + $0xb0] sm:$0xf]
  %v75 = vld [vmem:[%s1 + $0xb4] sm:$0xf]
  %v76 = vld [vmem:[%s1 + $0xb8] sm:$0xf]
  %v77 = vld [vmem:[%s1 + $0xbc] sm:$0xf]
  %v78 = vld [vmem:[%s1 + $0xc0] sm:$0xf]
  %v79 = vld [vmem:[%s1 + $0xc4] sm:$0xf]
  %v80 = vld [vmem:[%s1 + $0xc8] sm:$0xf]
  %v81 = vld [vmem:[%s1 + $0xcc] sm:$0xf]
  %v82 = vld [vmem:[%s1 + $0xd0] sm:$0xf]
  %v83 = vld [vmem:[%s1 + $0xd4] sm:$0xf]
  %v84 = vld [vmem:[%s1 + $0xd8] sm:$0xf]
  %v85 = vld [vmem:[%s1 + $0xdc] sm:$0xf]
  %v86 = vld [vmem:[%s1 + $0xe0] sm:$0xf]
  %v87 = vld [vmem:[%s1 + $0xe4] sm:$0xf]
  %v88 = vld [vmem:[%s1 + $0xe8] sm:$0xf]
  %v89 = vld [vmem:[%s1 + $0xec] sm:$0xf]
  %v90 = vld [vmem:[%s1 + $0xf0] sm:$0xf]
  %v91 = vld [vmem:[%s1 + $0xf4] sm:$0xf]
  %v92 = vld [vmem:[%s1 + $0xf8] sm:$0xf]
  %v93 = vld [vmem:[%s1 + $0xfc] sm:$0xf]
  %v94 = vld [vmem:[%s2] sm:$0x1]
  %v96 = vlaneseq
  %v97 = vshrl.u32 %v96, 7
  %v98 = vsub.s32 0, %v97
  %v99 = vrot.slane %v94, %v98
  %v165 = vunpack.c.l.b16 %v30
  %v166 = vunpack.c.l.b16 %v31
  %v167 = vunpack.c.l.b16 %v32
  %v168 = vunpack.c.l.b16 %v33
  %v169 = vunpack.c.l.b16 %v34
  %v170 = vunpack.c.l.b16 %v35
  %v171 = vunpack.c.l.b16 %v36
  %v172 = vunpack.c.l.b16 %v37
  %v173 = vunpack.c.l.b16 %v38
  %v174 = vunpack.c.l.b16 %v39
  %v175 = vunpack.c.l.b16 %v40
  %v176 = vunpack.c.l.b16 %v41
  %v177 = vunpack.c.l.b16 %v42
  %v178 = vunpack.c.l.b16 %v43
  %v179 = vunpack.c.l.b16 %v44
  %v180 = vunpack.c.l.b16 %v45
  %v181 = vunpack.c.l.b16 %v46
  %v182 = vunpack.c.l.b16 %v47
  %v183 = vunpack.c.l.b16 %v48
  %v184 = vunpack.c.l.b16 %v49
  %v185 = vunpack.c.l.b16 %v50
  %v186 = vunpack.c.l.b16 %v51
  %v187 = vunpack.c.l.b16 %v52
  %v188 = vunpack.c.l.b16 %v53
  %v189 = vunpack.c.l.b16 %v54
  %v190 = vunpack.c.l.b16 %v55
  %v191 = vunpack.c.l.b16 %v56
  %v192 = vunpack.c.l.b16 %v57
  %v193 = vunpack.c.l.b16 %v58
  %v194 = vunpack.c.l.b16 %v59
  %v195 = vunpack.c.l.b16 %v60
  %v196 = vunpack.c.l.b16 %v61
  %v197 = vunpack.c.l.b16 %v62
  %v198 = vunpack.c.l.b16 %v63
  %v199 = vunpack.c.l.b16 %v64
  %v200 = vunpack.c.l.b16 %v65
  %v201 = vunpack.c.l.b16 %v66
  %v202 = vunpack.c.l.b16 %v67
  %v203 = vunpack.c.l.b16 %v68
  %v204 = vunpack.c.l.b16 %v69
  %v205 = vunpack.c.l.b16 %v70
  %v206 = vunpack.c.l.b16 %v71
  %v207 = vunpack.c.l.b16 %v72
  %v208 = vunpack.c.l.b16 %v73
  %v209 = vunpack.c.l.b16 %v74
  %v210 = vunpack.c.l.b16 %v75
  %v211 = vunpack.c.l.b16 %v76
  %v212 = vunpack.c.l.b16 %v77
  %v213 = vunpack.c.l.b16 %v78
  %v214 = vunpack.c.l.b16 %v79
  %v215 = vunpack.c.l.b16 %v80
  %v216 = vunpack.c.l.b16 %v81
  %v217 = vunpack.c.l.b16 %v82
  %v218 = vunpack.c.l.b16 %v83
  %v219 = vunpack.c.l.b16 %v84
  %v220 = vunpack.c.l.b16 %v85
  %v221 = vunpack.c.l.b16 %v86
  %v222 = vunpack.c.l.b16 %v87
  %v223 = vunpack.c.l.b16 %v88
  %v224 = vunpack.c.l.b16 %v89
  %v225 = vunpack.c.l.b16 %v90
  %v226 = vunpack.c.l.b16 %v91
  %v227 = vunpack.c.l.b16 %v92
  %v228 = vunpack.c.l.b16 %v93
  %v229 = vpack.c.b16 %v166, %v165
  %v230 = vpack.c.b16 %v168, %v167
  %v231 = vpack.c.b16 %v170, %v169
  %v232 = vpack.c.b16 %v172, %v171
  %v233 = vpack.c.b16 %v174, %v173
  %v234 = vpack.c.b16 %v176, %v175
  %v235 = vpack.c.b16 %v178, %v177
  %v236 = vpack.c.b16 %v180, %v179
  %v237 = vpack.c.b16 %v182, %v181
  %v238 = vpack.c.b16 %v184, %v183
  %v239 = vpack.c.b16 %v186, %v185
  %v240 = vpack.c.b16 %v188, %v187
  %v241 = vpack.c.b16 %v190, %v189
  %v242 = vpack.c.b16 %v192, %v191
  %v243 = vpack.c.b16 %v194, %v193
  %v244 = vpack.c.b16 %v196, %v195
  %v245 = vpack.c.b16 %v198, %v197
  %v246 = vpack.c.b16 %v200, %v199
  %v247 = vpack.c.b16 %v202, %v201
  %v248 = vpack.c.b16 %v204, %v203
  %v249 = vpack.c.b16 %v206, %v205
  %v250 = vpack.c.b16 %v208, %v207
  %v251 = vpack.c.b16 %v210, %v209
  %v252 = vpack.c.b16 %v212, %v211
  %v253 = vpack.c.b16 %v214, %v213
  %v254 = vpack.c.b16 %v216, %v215
  %v255 = vpack.c.b16 %v218, %v217
  %v256 = vpack.c.b16 %v220, %v219
  %v257 = vpack.c.b16 %v222, %v221
  %v258 = vpack.c.b16 %v224, %v223
  %v259 = vpack.c.b16 %v226, %v225
  %v260 = vpack.c.b16 %v228, %v227
  %293 = vmatprep.subr.bf16.mxu0 0
  %294 = vmatpush1.bf16.msra.mxu0 %v229
  %295 = vmatprep.subr.bf16.mxu0 0
  %296 = vmatpush1.bf16.msra.mxu0 %v230
  %297 = vmatprep.subr.bf16.mxu0 0
  %298 = vmatpush1.bf16.msra.mxu0 %v231
  %299 = vmatprep.subr.bf16.mxu0 0
  %300 = vmatpush1.bf16.msra.mxu0 %v232
  %301 = vmatprep.subr.bf16.mxu0 0
  %302 = vmatpush1.bf16.msra.mxu0 %v233
  %303 = vmatprep.subr.bf16.mxu0 0
  %304 = vmatpush1.bf16.msra.mxu0 %v234
  %305 = vmatprep.subr.bf16.mxu0 0
  %306 = vmatpush1.bf16.msra.mxu0 %v235
  %307 = vmatprep.subr.bf16.mxu0 0
  %308 = vmatpush1.bf16.msra.mxu0 %v236
  %309 = vmatprep.subr.bf16.mxu0 0
  %310 = vmatpush1.bf16.msra.mxu0 %v237
  %311 = vmatprep.subr.bf16.mxu0 0
  %312 = vmatpush1.bf16.msra.mxu0 %v238
  %313 = vmatprep.subr.bf16.mxu0 0
  %314 = vmatpush1.bf16.msra.mxu0 %v239
  %315 = vmatprep.subr.bf16.mxu0 0
  %316 = vmatpush1.bf16.msra.mxu0 %v240
  %317 = vmatprep.subr.bf16.mxu0 0
  %318 = vmatpush1.bf16.msra.mxu0 %v241
  %319 = vmatprep.subr.bf16.mxu0 0
  %320 = vmatpush1.bf16.msra.mxu0 %v242
  %321 = vmatprep.subr.bf16.mxu0 0
  %322 = vmatpush1.bf16.msra.mxu0 %v243
  %323 = vmatprep.subr.bf16.mxu0 0
  %324 = vmatpush1.bf16.msra.mxu0 %v244
  %325 = vmatprep.mubr.bf16.mxu0 %v27
  %326 = vmatmul.mubr.bf16.gmra.mrb[0].mxu0 %v26
  %v327 = vpop.f32.mrb[0].mxu0
  %v328 = vadd.f32 %v99, %v327
  %v329 = vpop.f32.mrb[0].mxu0
  %v330 = vpop.f32.mrb[0].mxu0
  %v331 = vadd.f32 %v99, %v330
  %v332 = vpop.f32.mrb[0].mxu0
  %333 = vdwg.mxu0
  %334 = vmatprep.subr.bf16.mxu0 0
  %335 = vmatpush1.bf16.msra.mxu0 %v245
  %336 = vmatprep.subr.bf16.mxu0 0
  %337 = vmatpush1.bf16.msra.mxu0 %v246
  %338 = vmatprep.subr.bf16.mxu0 0
  %339 = vmatpush1.bf16.msra.mxu0 %v247
  %340 = vmatprep.subr.bf16.mxu0 0
  %341 = vmatpush1.bf16.msra.mxu0 %v248
  %342 = vmatprep.subr.bf16.mxu0 0
  %343 = vmatpush1.bf16.msra.mxu0 %v249
  %344 = vmatprep.subr.bf16.mxu0 0
  %345 = vmatpush1.bf16.msra.mxu0 %v250
  %346 = vmatprep.subr.bf16.mxu0 0
  %347 = vmatpush1.bf16.msra.mxu0 %v251
  %348 = vmatprep.subr.bf16.mxu0 0
  %349 = vmatpush1.bf16.msra.mxu0 %v252
  %350 = vmatprep.subr.bf16.mxu0 0
  %351 = vmatpush1.bf16.msra.mxu0 %v253
  %352 = vmatprep.subr.bf16.mxu0 0
  %353 = vmatpush1.bf16.msra.mxu0 %v254
  %354 = vmatprep.subr.bf16.mxu0 0
  %355 = vmatpush1.bf16.msra.mxu0 %v255
  %356 = vmatprep.subr.bf16.mxu0 0
  %357 = vmatpush1.bf16.msra.mxu0 %v256
  %358 = vmatprep.subr.bf16.mxu0 0
  %359 = vmatpush1.bf16.msra.mxu0 %v257
  %360 = vmatprep.subr.bf16.mxu0 0
  %361 = vmatpush1.bf16.msra.mxu0 %v258
  %362 = vmatprep.subr.bf16.mxu0 0
  %363 = vmatpush1.bf16.msra.mxu0 %v259
  %364 = vmatprep.subr.bf16.mxu0 0
  %365 = vmatpush1.bf16.msra.mxu0 %v260
  %366 = vmatprep.mubr.bf16.mxu0 %v29
  %367 = vmatmul.mubr.bf16.gmra.mrb[0].mxu0 %v28
  %v368 = vpop.f32.mrb[0].mxu0
  %v369 = vadd.f32 %v328, %v368
  %v370 = vpop.f32.mrb[0].mxu0
  %v371 = vpop.f32.mrb[0].mxu0
  %v372 = vadd.f32 %v331, %v371
  %v373 = vpop.f32.mrb[0].mxu0
  %374 = vdwg.mxu0
  %v375 = vld [vmem:[%s3] sm:$0xff]
  %v376 = vld [vmem:[%s3 + $0x8] sm:$0xff]
  %v377 = vadd.f32 %v375, %v369
  %v378 = vadd.f32 %v376, %v372
  %379 = vst [vmem:[%s4] sm:$0xff] %v377
  %380 = vst [vmem:[%s4 + $0x8] sm:$0xff] %v378
  // Predicated region
  $region18: #{transformer_forward.37} parent=0 // pred_check
    _
  $region19: #{transformer_forward.37} parent=0 // pred_check_branch
    %382 = sbr.rel (0) target = $region21
  $region20: #{transformer_forward.37} parent=0 // pred_region
    _
  $region21: #{transformer_forward.37} parent=0 // pred_fallthru
    _
  // Predicated region
  $region22: #{transformer_forward.37} parent=0 // pred_check
    _
  $region23: #{transformer_forward.37} parent=0 // pred_check_branch
    %384 = sbr.rel (0) target = $region25
  $region24: #{transformer_forward.37} parent=0 // pred_region
    _
  $region25: #{transformer_forward.37} parent=0 // pred_fallthru
    _

// kernel: transformer_forward.38
$region0: #{transformer_forward.38}
  #allocation0 [shape = 'u32[]', space=smem, size = 0x4, offset = 0x4, fixed_abs, tag = 'smem constant byte address 0x4 - core index']
  #allocation1 [shape = 'u32[144,128]{1,0:T(1,128)}', space=vmem, size = 0x12000, scoped, tag = 'internal scratch']
  %s0 = inlined_call_operand.vmem [shape: f32[16,128], index: 0, kind: input, shape index: {}]
  %s1 = inlined_call_operand.vmem [shape: f32[1,128], index: 1, kind: input, shape index: {}]
  %s2 = inlined_call_operand.vmem [shape: f32[1,128], index: 2, kind: input, shape index: {}]
  %s3 = inlined_call_operand.vmem [shape: bf16[128,512], index: 3, kind: input, shape index: {}]
  %s4 = inlined_call_operand.vmem [shape: f32[1,512], index: 4, kind: input, shape index: {}]
  %s5 = inlined_call_operand.vmem [shape: f32[16,512], index: 5, kind: output, shape index: {}]
  %s6 = sld [smem:[#allocation0]]
  $region30: #{transformer_forward.38} parent=0
    _
  %s8 = ssub.s32 1, %s6
  %s9 = scalar_select 0, %s8, %s6
  // Predicated region
  $region2: #{transformer_forward.38} parent=0 // pred_check
    _
  $region3: #{transformer_forward.38} parent=0 // pred_check_branch
    %11 = sbr.rel (0) target = $region5
  $region4: #{transformer_forward.38} parent=0 // pred_region
    _
  $region5: #{transformer_forward.38} parent=0 // pred_fallthru
    _
  // Predicated region
  $region6: #{transformer_forward.38} parent=0 // pred_check
    _
  $region7: #{transformer_forward.38} parent=0 // pred_check_branch
    %13 = sbr.rel (0) target = $region9
  $region8: #{transformer_forward.38} parent=0 // pred_region
    _
  $region9: #{transformer_forward.38} parent=0 // pred_fallthru
    _
  // Predicated region
  $region10: #{transformer_forward.38} parent=0 // pred_check
    _
  $region11: #{transformer_forward.38} parent=0 // pred_check_branch
    %15 = sbr.rel (0) target = $region13
  $region12: #{transformer_forward.38} parent=0 // pred_region
    _
  $region13: #{transformer_forward.38} parent=0 // pred_fallthru
    _
  // Predicated region
  $region14: #{transformer_forward.38} parent=0 // pred_check
    _
  $region15: #{transformer_forward.38} parent=0 // pred_check_branch
    %17 = sbr.rel (0) target = $region17
  $region16: #{transformer_forward.38} parent=0 // pred_region
    _
  $region17: #{transformer_forward.38} parent=0 // pred_fallthru
    _
  // Predicated region
  $region18: #{transformer_forward.38} parent=0 // pred_check
    _
  $region19: #{transformer_forward.38} parent=0 // pred_check_branch
    %19 = sbr.rel (0) target = $region21
  $region20: #{transformer_forward.38} parent=0 // pred_region
    _
  $region21: #{transformer_forward.38} parent=0 // pred_fallthru
    _
  %v21 = vld [vmem:[%s0] sm:$0xff]
  %v22 = vld [vmem:[%s0 + $0x8] sm:$0xff]
  %v23 = vlaneseq
  %v24 = vand.u32 %v23, 127
  %vm25 = vcmp.lt.s32.totalorder %v24, 32
  %v26 = vsel %vm25, %v21, 0.0
  %v27 = vsel %vm25, %v22, 0.0
  %28 = vadd.xlane.f32.xlu0 %v26
  %v29 = vpop.xlane.xlu0 %28
  %30 = vadd.xlane.f32.xlu0 %v27
  %v31 = vpop.xlane.xlu0 %30
  %v32 = vmul.f32 %v29, 0.03125
  %v33 = vmul.f32 %v31, 0.03125
  %v34 = vsub.f32 %v21, %v32
  %v35 = vsub.f32 %v22, %v33
  %v36 = vsel %vm25, %v34, 0.0
  %v37 = vsel %vm25, %v35, 0.0
  %v38 = vmul.f32 %v36, %v36
  %v39 = vmul.f32 %v37, %v37
  %40 = vadd.xlane.f32.xlu0 %v38
  %v41 = vpop.xlane.xlu0 %40
  %42 = vadd.xlane.f32.xlu0 %v39
  %v43 = vpop.xlane.xlu0 %42
  %v44 = vmul.f32 %v41, 0.032258064
  %v45 = vmul.f32 %v43, 0.032258064
  %v46 = vrsqrt.pop %v44
  %v47 = vmul.f32 %v44, %v46
  %vm48 = vcmp.eq.f32.partialorder %v44, inf
  %v49 = vsel %vm48, %v44, %v47
  %vm50 = vcmp.eq.f32.partialorder %v44, 0.0
  %v51 = vand.u32 %v44, 2147483648
  %v52 = vsel %vm50, %v51, %v49
  %v53 = vrsqrt.pop %v45
  %v54 = vmul.f32 %v45, %v53
  %vm55 = vcmp.eq.f32.partialorder %v45, inf
  %v56 = vsel %vm55, %v45, %v54
  %vm57 = vcmp.eq.f32.partialorder %v45, 0.0
  %v58 = vand.u32 %v45, 2147483648
  %v59 = vsel %vm57, %v58, %v56
  %v60 = vadd.f32 %v52, 1e-06
  %v61 = vadd.f32 %v59, 1e-06
  %v62 = vrcp.pop %v60
  %v63 = vrcp.pop %v61
  %v64 = vld [vmem:[%s1] sm:$0x1]
  %v66 = vlaneseq
  %v67 = vshrl.u32 %v66, 7
  %v68 = vsub.s32 0, %v67
  %v69 = vrot.slane %v64, %v68
  %v71 = vmul.f32 %v69, %v34
  %v72 = vmul.f32 %v69, %v35
  %v73 = vmul.f32 %v71, %v62
  %v74 = vmul.f32 %v72, %v63
  %v75 = vld [vmem:[%s2] sm:$0x1]
  %v77 = vlaneseq
  %v78 = vshrl.u32 %v77, 7
  %v79 = vsub.s32 0, %v78
  %v80 = vrot.slane %v75, %v79
  %v82 = vadd.f32 %v73, %v80
  %v83 = vadd.f32 %v74, %v80
  %v84 = vpack.c.bf16 %v83, %v82
  %v85 = vld [vmem:[%s3] sm:$0xff]
  %v86 = vld [vmem:[%s3 + $0x8] sm:$0xff]
  %v87 = vld [vmem:[%s3 + $0x10] sm:$0xff]
  %v88 = vld [vmem:[%s3 + $0x18] sm:$0xff]
  %v89 = vld [vmem:[%s3 + $0x20] sm:$0xff]
  %v90 = vld [vmem:[%s3 + $0x28] sm:$0xff]
  %v91 = vld [vmem:[%s3 + $0x30] sm:$0xff]
  %v92 = vld [vmem:[%s3 + $0x38] sm:$0xff]
  %v93 = vld [vmem:[%s3 + $0x40] sm:$0xff]
  %v94 = vld [vmem:[%s3 + $0x48] sm:$0xff]
  %v95 = vld [vmem:[%s3 + $0x50] sm:$0xff]
  %v96 = vld [vmem:[%s3 + $0x58] sm:$0xff]
  %v97 = vld [vmem:[%s3 + $0x60] sm:$0xff]
  %v98 = vld [vmem:[%s3 + $0x68] sm:$0xff]
  %v99 = vld [vmem:[%s3 + $0x70] sm:$0xff]
  %v100 = vld [vmem:[%s3 + $0x78] sm:$0xff]
  %v101 = vld [vmem:[%s3 + $0x80] sm:$0xff]
  %v102 = vld [vmem:[%s3 + $0x88] sm:$0xff]
  %v103 = vld [vmem:[%s3 + $0x90] sm:$0xff]
  %v104 = vld [vmem:[%s3 + $0x98] sm:$0xff]
  %v105 = vld [vmem:[%s3 + $0xa0] sm:$0xff]
  %v106 = vld [vmem:[%s3 + $0xa8] sm:$0xff]
  %v107 = vld [vmem:[%s3 + $0xb0] sm:$0xff]
  %v108 = vld [vmem:[%s3 + $0xb8] sm:$0xff]
  %v109 = vld [vmem:[%s3 + $0xc0] sm:$0xff]
  %v110 = vld [vmem:[%s3 + $0xc8] sm:$0xff]
  %v111 = vld [vmem:[%s3 + $0xd0] sm:$0xff]
  %v112 = vld [vmem:[%s3 + $0xd8] sm:$0xff]
  %v113 = vld [vmem:[%s3 + $0xe0] sm:$0xff]
  %v114 = vld [vmem:[%s3 + $0xe8] sm:$0xff]
  %v115 = vld [vmem:[%s3 + $0xf0] sm:$0xff]
  %v116 = vld [vmem:[%s3 + $0xf8] sm:$0xff]
  %v117 = vld [vmem:[%s4] sm:$0xf]
  %v119 = vlaneseq
  %v120 = vshrl.u32 %v119, 7
  %v121 = vsub.s32 0, %v120
  %v122 = vrot.slane %v117, %v121
  %v123 = vlaneseq
  %v124 = vshrl.u32 %v123, 7
  %v125 = vsub.s32 1, %v124
  %v126 = vrot.slane %v117, %v125
  %v127 = vlaneseq
  %v128 = vshrl.u32 %v127, 7
  %v129 = vsub.s32 2, %v128
  %v130 = vrot.slane %v117, %v129
  %v131 = vlaneseq
  %v132 = vshrl.u32 %v131, 7
  %v133 = vsub.s32 3, %v132
  %v134 = vrot.slane %v117, %v133
  %v171 = vunpack.c.l.b16 %v85
  %v172 = vunpack.c.h.b16 %v85
  %v173 = vunpack.c.l.b16 %v86
  %v174 = vunpack.c.h.b16 %v86
  %v175 = vunpack.c.l.b16 %v87
  %v176 = vunpack.c.h.b16 %v87
  %v177 = vunpack.c.l.b16 %v88
  %v178 = vunpack.c.h.b16 %v88
  %v179 = vunpack.c.l.b16 %v89
  %v180 = vunpack.c.h.b16 %v89
  %v181 = vunpack.c.l.b16 %v90
  %v182 = vunpack.c.h.b16 %v90
  %v183 = vunpack.c.l.b16 %v91
  %v184 = vunpack.c.h.b16 %v91
  %v185 = vunpack.c.l.b16 %v92
  %v186 = vunpack.c.h.b16 %v92
  %v187 = vunpack.c.l.b16 %v93
  %v188 = vunpack.c.h.b16 %v93
  %v189 = vunpack.c.l.b16 %v94
  %v190 = vunpack.c.h.b16 %v94
  %v191 = vunpack.c.l.b16 %v95
  %v192 = vunpack.c.h.b16 %v95
  %v193 = vunpack.c.l.b16 %v96
  %v194 = vunpack.c.h.b16 %v96
  %v195 = vunpack.c.l.b16 %v97
  %v196 = vunpack.c.h.b16 %v97
  %v197 = vunpack.c.l.b16 %v98
  %v198 = vunpack.c.h.b16 %v98
  %v199 = vunpack.c.l.b16 %v99
  %v200 = vunpack.c.h.b16 %v99
  %v201 = vunpack.c.l.b16 %v100
  %v202 = vunpack.c.h.b16 %v100
  %v203 = vunpack.c.l.b16 %v101
  %v204 = vunpack.c.h.b16 %v101
  %v205 = vunpack.c.l.b16 %v102
  %v206 = vunpack.c.h.b16 %v102
  %v207 = vunpack.c.l.b16 %v103
  %v208 = vunpack.c.h.b16 %v103
  %v209 = vunpack.c.l.b16 %v104
  %v210 = vunpack.c.h.b16 %v104
  %v211 = vunpack.c.l.b16 %v105
  %v212 = vunpack.c.h.b16 %v105
  %v213 = vunpack.c.l.b16 %v106
  %v214 = vunpack.c.h.b16 %v106
  %v215 = vunpack.c.l.b16 %v107
  %v216 = vunpack.c.h.b16 %v107
  %v217 = vunpack.c.l.b16 %v108
  %v218 = vunpack.c.h.b16 %v108
  %v219 = vunpack.c.l.b16 %v109
  %v220 = vunpack.c.h.b16 %v109
  %v221 = vunpack.c.l.b16 %v110
  %v222 = vunpack.c.h.b16 %v110
  %v223 = vunpack.c.l.b16 %v111
  %v224 = vunpack.c.h.b16 %v111
  %v225 = vunpack.c.l.b16 %v112
  %v226 = vunpack.c.h.b16 %v112
  %v227 = vunpack.c.l.b16 %v113
  %v228 = vunpack.c.h.b16 %v113
  %v229 = vunpack.c.l.b16 %v114
  %v230 = vunpack.c.h.b16 %v114
  %v231 = vunpack.c.l.b16 %v115
  %v232 = vunpack.c.h.b16 %v115
  %v233 = vunpack.c.l.b16 %v116
  %v234 = vunpack.c.h.b16 %v116
  %v235 = vpack.c.b16 %v175, %v171
  %v236 = vpack.c.b16 %v176, %v172
  %v237 = vpack.c.b16 %v177, %v173
  %v238 = vpack.c.b16 %v178, %v174
  %v239 = vpack.c.b16 %v183, %v179
  %v240 = vpack.c.b16 %v184, %v180
  %v241 = vpack.c.b16 %v185, %v181
  %v242 = vpack.c.b16 %v186, %v182
  %v243 = vpack.c.b16 %v191, %v187
  %v244 = vpack.c.b16 %v192, %v188
  %v245 = vpack.c.b16 %v193, %v189
  %v246 = vpack.c.b16 %v194, %v190
  %v247 = vpack.c.b16 %v199, %v195
  %v248 = vpack.c.b16 %v200, %v196
  %v249 = vpack.c.b16 %v201, %v197
  %v250 = vpack.c.b16 %v202, %v198
  %v251 = vpack.c.b16 %v207, %v203
  %v252 = vpack.c.b16 %v208, %v204
  %v253 = vpack.c.b16 %v209, %v205
  %v254 = vpack.c.b16 %v210, %v206
  %v255 = vpack.c.b16 %v215, %v211
  %v256 = vpack.c.b16 %v216, %v212
  %v257 = vpack.c.b16 %v217, %v213
  %v258 = vpack.c.b16 %v218, %v214
  %v259 = vpack.c.b16 %v223, %v219
  %v260 = vpack.c.b16 %v224, %v220
  %v261 = vpack.c.b16 %v225, %v221
  %v262 = vpack.c.b16 %v226, %v222
  %v263 = vpack.c.b16 %v231, %v227
  %v264 = vpack.c.b16 %v232, %v228
  %v265 = vpack.c.b16 %v233, %v229
  %v266 = vpack.c.b16 %v234, %v230
  %299 = vmatprep.subr.bf16.mxu0 %v236
  %300 = vmatpush1.bf16.msra.mxu0 %v235
  %301 = vmatprep.subr.bf16.mxu0 %v240
  %302 = vmatpush1.bf16.msra.mxu0 %v239
  %303 = vmatprep.subr.bf16.mxu0 %v244
  %304 = vmatpush1.bf16.msra.mxu0 %v243
  %305 = vmatprep.subr.bf16.mxu0 %v248
  %306 = vmatpush1.bf16.msra.mxu0 %v247
  %307 = vmatprep.subr.bf16.mxu0 %v252
  %308 = vmatpush1.bf16.msra.mxu0 %v251
  %309 = vmatprep.subr.bf16.mxu0 %v256
  %310 = vmatpush1.bf16.msra.mxu0 %v255
  %311 = vmatprep.subr.bf16.mxu0 %v260
  %312 = vmatpush1.bf16.msra.mxu0 %v259
  %313 = vmatprep.subr.bf16.mxu0 %v264
  %314 = vmatpush1.bf16.msra.mxu0 %v263
  %315 = vmatprep.subr.bf16.mxu0 0
  %316 = vmatpush1.bf16.msra.mxu0 0
  %317 = vmatprep.subr.bf16.mxu0 0
  %318 = vmatpush1.bf16.msra.mxu0 0
  %319 = vmatprep.subr.bf16.mxu0 0
  %320 = vmatpush1.bf16.msra.mxu0 0
  %321 = vmatprep.subr.bf16.mxu0 0
  %322 = vmatpush1.bf16.msra.mxu0 0
  %323 = vmatprep.subr.bf16.mxu0 0
  %324 = vmatpush1.bf16.msra.mxu0 0
  %325 = vmatprep.subr.bf16.mxu0 0
  %326 = vmatpush1.bf16.msra.mxu0 0
  %327 = vmatprep.subr.bf16.mxu0 0
  %328 = vmatpush1.bf16.msra.mxu0 0
  %329 = vmatprep.subr.bf16.mxu0 0
  %330 = vmatpush1.bf16.msra.mxu0 0
  %331 = vmatprep.mubr.bf16.mxu0 0
  %332 = vmatmul.mubr.bf16.gmra.mrb[0].mxu0 %v84
  %v333 = vpop.f32.mrb[0].mxu0
  %v334 = vadd.f32 %v122, %v333
  %v335 = vpop.f32.mrb[0].mxu0
  %v336 = vadd.f32 %v126, %v335
  %v337 = vpop.f32.mrb[0].mxu0
  %v338 = vadd.f32 %v122, %v337
  %v339 = vpop.f32.mrb[0].mxu0
  %v340 = vadd.f32 %v126, %v339
  %341 = vdwg.mxu0
  %342 = vmatprep.subr.bf16.mxu0 %v238
  %343 = vmatpush1.bf16.msra.mxu0 %v237
  %344 = vmatprep.subr.bf16.mxu0 %v242
  %345 = vmatpush1.bf16.msra.mxu0 %v241
  %346 = vmatprep.subr.bf16.mxu0 %v246
  %347 = vmatpush1.bf16.msra.mxu0 %v245
  %348 = vmatprep.subr.bf16.mxu0 %v250
  %349 = vmatpush1.bf16.msra.mxu0 %v249
  %350 = vmatprep.subr.bf16.mxu0 %v254
  %351 = vmatpush1.bf16.msra.mxu0 %v253
  %352 = vmatprep.subr.bf16.mxu0 %v258
  %353 = vmatpush1.bf16.msra.mxu0 %v257
  %354 = vmatprep.subr.bf16.mxu0 %v262
  %355 = vmatpush1.bf16.msra.mxu0 %v261
  %356 = vmatprep.subr.bf16.mxu0 %v266
  %357 = vmatpush1.bf16.msra.mxu0 %v265
  %358 = vmatprep.subr.bf16.mxu0 0
  %359 = vmatpush1.bf16.msra.mxu0 0
  %360 = vmatprep.subr.bf16.mxu0 0
  %361 = vmatpush1.bf16.msra.mxu0 0
  %362 = vmatprep.subr.bf16.mxu0 0
  %363 = vmatpush1.bf16.msra.mxu0 0
  %364 = vmatprep.subr.bf16.mxu0 0
  %365 = vmatpush1.bf16.msra.mxu0 0
  %366 = vmatprep.subr.bf16.mxu0 0
  %367 = vmatpush1.bf16.msra.mxu0 0
  %368 = vmatprep.subr.bf16.mxu0 0
  %369 = vmatpush1.bf16.msra.mxu0 0
  %370 = vmatprep.subr.bf16.mxu0 0
  %371 = vmatpush1.bf16.msra.mxu0 0
  %372 = vmatprep.subr.bf16.mxu0 0
  %373 = vmatpush1.bf16.msra.mxu0 0
  %374 = vmatprep.mubr.bf16.mxu0 0
  %375 = vmatmul.mubr.bf16.gmra.mrb[0].mxu0 %v84
  %v376 = vpop.f32.mrb[0].mxu0
  %v377 = vadd.f32 %v130, %v376
  %v378 = vpop.f32.mrb[0].mxu0
  %v379 = vadd.f32 %v134, %v378
  %v380 = vpop.f32.mrb[0].mxu0
  %v381 = vadd.f32 %v130, %v380
  %v382 = vpop.f32.mrb[0].mxu0
  %v383 = vadd.f32 %v134, %v382
  %384 = vdwg.mxu0
  %385 = vst [vmem:[%s5] sm:$0xff] %v334
  %386 = vst [vmem:[%s5 + $0x8] sm:$0xff] %v336
  %387 = vst [vmem:[%s5 + $0x10] sm:$0xff] %v377
  %388 = vst [vmem:[%s5 + $0x18] sm:$0xff] %v379
  %389 = vst [vmem:[%s5 + $0x20] sm:$0xff] %v338
  %390 = vst [vmem:[%s5 + $0x28] sm:$0xff] %v340
  %391 = vst [vmem:[%s5 + $0x30] sm:$0xff] %v381
  %392 = vst [vmem:[%s5 + $0x38] sm:$0xff] %v383
  // Predicated region
  $region22: #{transformer_forward.38} parent=0 // pred_check
    _
  $region23: #{transformer_forward.38} parent=0 // pred_check_branch
    %394 = sbr.rel (0) target = $region25
  $region24: #{transformer_forward.38} parent=0 // pred_region
    _
  $region25: #{transformer_forward.38} parent=0 // pred_fallthru
    _
  // Predicated region
  $region26: #{transformer_forward.38} parent=0 // pred_check
    _
  $region27: #{transformer_forward.38} parent=0 // pred_check_branch
    %396 = sbr.rel (0) target = $region29
  $region28: #{transformer_forward.38} parent=0 // pred_region
    _
  $region29: #{transformer_forward.38} parent=0 // pred_fallthru
    _

// kernel: transformer_forward.34
$region0: #{transformer_forward.34}
  #allocation0 [shape = 'u32[]', space=smem, size = 0x4, offset = 0x4, fixed_abs, tag = 'smem constant byte address 0x4 - core index']
  #allocation1 [shape = 'u32[144,128]{1,0:T(1,128)}', space=vmem, size = 0x12000, scoped, tag = 'internal scratch']
  %s0 = inlined_call_operand.vmem [shape: f32[16,128], index: 0, kind: input, shape index: {}]
  %s1 = inlined_call_operand.vmem [shape: f32[1,128], index: 1, kind: input, shape index: {}]
  %s2 = inlined_call_operand.vmem [shape: f32[1,128], index: 2, kind: input, shape index: {}]
  %s3 = inlined_call_operand.vmem [shape: f32[16,128], index: 3, kind: output, shape index: {}]
  %s4 = sld [smem:[#allocation0]]
  $region22: #{transformer_forward.34} parent=0
    _
  %s6 = ssub.s32 1, %s4
  %s7 = scalar_select 0, %s6, %s4
  // Predicated region
  $region2: #{transformer_forward.34} parent=0 // pred_check
    _
  $region3: #{transformer_forward.34} parent=0 // pred_check_branch
    %9 = sbr.rel (0) target = $region5
  $region4: #{transformer_forward.34} parent=0 // pred_region
    _
  $region5: #{transformer_forward.34} parent=0 // pred_fallthru
    _
  // Predicated region
  $region6: #{transformer_forward.34} parent=0 // pred_check
    _
  $region7: #{transformer_forward.34} parent=0 // pred_check_branch
    %11 = sbr.rel (0) target = $region9
  $region8: #{transformer_forward.34} parent=0 // pred_region
    _
  $region9: #{transformer_forward.34} parent=0 // pred_fallthru
    _
  // Predicated region
  $region10: #{transformer_forward.34} parent=0 // pred_check
    _
  $region11: #{transformer_forward.34} parent=0 // pred_check_branch
    %13 = sbr.rel (0) target = $region13
  $region12: #{transformer_forward.34} parent=0 // pred_region
    _
  $region13: #{transformer_forward.34} parent=0 // pred_fallthru
    _
  %v14 = vld [vmem:[%s0] sm:$0xff]
  %v15 = vld [vmem:[%s0 + $0x8] sm:$0xff]
  %v16 = vlaneseq
  %v17 = vand.u32 %v16, 127
  %vm18 = vcmp.lt.s32.totalorder %v17, 32
  %v19 = vsel %vm18, %v14, 0.0
  %v20 = vsel %vm18, %v15, 0.0
  %21 = vadd.xlane.f32.xlu0 %v19
  %v22 = vpop.xlane.xlu0 %21
  %23 = vadd.xlane.f32.xlu0 %v20
  %v24 = vpop.xlane.xlu0 %23
  %v25 = vmul.f32 %v22, 0.03125
  %v26 = vmul.f32 %v24, 0.03125
  %v27 = vsub.f32 %v14, %v25
  %v28 = vsub.f32 %v15, %v26
  %v29 = vsel %vm18, %v27, 0.0
  %v30 = vsel %vm18, %v28, 0.0
  %v31 = vmul.f32 %v29, %v29
  %v32 = vmul.f32 %v30, %v30
  %33 = vadd.xlane.f32.xlu0 %v31
  %v34 = vpop.xlane.xlu0 %33
  %35 = vadd.xlane.f32.xlu0 %v32
  %v36 = vpop.xlane.xlu0 %35
  %v37 = vmul.f32 %v34, 0.032258064
  %v38 = vmul.f32 %v36, 0.032258064
  %v39 = vrsqrt.pop %v37
  %v40 = vmul.f32 %v37, %v39
  %vm41 = vcmp.eq.f32.partialorder %v37, inf
  %v42 = vsel %vm41, %v37, %v40
  %vm43 = vcmp.eq.f32.partialorder %v37, 0.0
  %v44 = vand.u32 %v37, 2147483648
  %v45 = vsel %vm43, %v44, %v42
  %v46 = vrsqrt.pop %v38
  %v47 = vmul.f32 %v38, %v46
  %vm48 = vcmp.eq.f32.partialorder %v38, inf
  %v49 = vsel %vm48, %v38, %v47
  %vm50 = vcmp.eq.f32.partialorder %v38, 0.0
  %v51 = vand.u32 %v38, 2147483648
  %v52 = vsel %vm50, %v51, %v49
  %v53 = vadd.f32 %v45, 1e-06
  %v54 = vadd.f32 %v52, 1e-06
  %v55 = vrcp.pop %v53
  %v56 = vrcp.pop %v54
  %v57 = vld [vmem:[%s1] sm:$0x1]
  %v59 = vlaneseq
  %v60 = vshrl.u32 %v59, 7
  %v61 = vsub.s32 0, %v60
  %v62 = vrot.slane %v57, %v61
  %v64 = vmul.f32 %v62, %v27
  %v65 = vmul.f32 %v62, %v28
  %v66 = vmul.f32 %v64, %v55
  %v67 = vmul.f32 %v65, %v56
  %v68 = vld [vmem:[%s2] sm:$0x1]
  %v70 = vlaneseq
  %v71 = vshrl.u32 %v70, 7
  %v72 = vsub.s32 0, %v71
  %v73 = vrot.slane %v68, %v72
  %v75 = vadd.f32 %v66, %v73
  %v76 = vadd.f32 %v67, %v73
  %77 = vst [vmem:[%s3] sm:$0xff] %v75
  %78 = vst [vmem:[%s3 + $0x8] sm:$0xff] %v76
  // Predicated region
  $region14: #{transformer_forward.34} parent=0 // pred_check
    _
  $region15: #{transformer_forward.34} parent=0 // pred_check_branch
    %80 = sbr.rel (0) target = $region17
  $region16: #{transformer_forward.34} parent=0 // pred_region
    _
  $region17: #{transformer_forward.34} parent=0 // pred_fallthru
    _
  // Predicated region
  $region18: #{transformer_forward.34} parent=0 // pred_check
    _
  $region19: #{transformer_forward.34} parent=0 // pred_check_branch
    %82 = sbr.rel (0) target = $region21
  $region20: #{transformer_forward.34} parent=0 // pred_region
    _
  $region21: #{transformer_forward.34} parent=0 // pred_fallthru
    _

// kernel: transformer_forward.27
$region0: #{transformer_forward.27}
  #allocation0 [shape = 'u32[]', space=smem, size = 0x4, offset = 0x4, fixed_abs, tag = 'smem constant byte address 0x4 - core index']
  #allocation1 [shape = 'u32[144,128]{1,0:T(1,128)}', space=vmem, size = 0x12000, scoped, tag = 'internal scratch']
  #allocation2 [shape = 'f32[1,8,1]{2,1,0:T(8,128)}', space=vmem, size = 0x1000, scoped, tag = 'scratch operand']
  #allocation3 [shape = 'f32[1,8,1]{2,1,0:T(8,128)}', space=vmem, size = 0x1000, scoped, tag = 'scratch operand']
  #allocation4 [shape = 'f32[1,8,128]{2,1,0:T(8,128)}', space=vmem, size = 0x1000, scoped, tag = 'scratch operand']
  %s0 = inlined_call_operand.vmem [shape: f32[2,8,1536], index: 0, kind: input, shape index: {}, may-alias: {0,1,2}]
  %s1 = inlined_call_operand.vmem [shape: f32[2,8,1536], index: 1, kind: input, shape index: {}, may-alias: {0,1,2}]
  %s2 = inlined_call_operand.vmem [shape: f32[2,8,1536], index: 2, kind: input, shape index: {}, may-alias: {0,1,2}]
  %s3 = inlined_call_operand.vmem [shape: f32[2,1,8], index: 3, kind: input, shape index: {}]
  %s4 = inlined_call_operand.vmem [shape: f32[2,8,512], index: 4, kind: output, shape index: {}]
  %s5 = sld [smem:[#allocation0]]
  $region57: #{transformer_forward.27} parent=0
    _
  %s7 = ssub.s32 1, %s5
  %s8 = scalar_select 0, %s7, %s5
  loop: start=0, step=1, limit=10
  $region2: #{transformer_forward.27} parent=0 // loop_pre_header
    _
  $region3: #{transformer_forward.27} parent=0 // loop_header
    %s10 = sphi 0, %s14
    %p11 = scmp.ge.s32.totalorder %s10, 10
    %s17 = sphi 0, %s43
    %s18 = sphi 0, %s39
    %s19 = sphi 0, %s35
    %s20 = sphi 0, %s31
    %s21 = sphi 0, %s17
    %s22 = sphi 0, %s18
    %s23 = sphi 0, %s19
    %s24 = sphi 0, %s20
    %s25 = sphi 0, %s21
    %s26 = sphi 0, %s22
    %s27 = sphi 0, %s23
    %s28 = sphi 0, %s24
    %s50 = sphi 0, %s52
    %s53 = sphi 0, %s50
    %s54 = sphi 0, %s53
    %s70 = sphi 0, %s54
    %s82 = sphi 0, %s84
    %s85 = sphi 0, %s82
    %s86 = sphi 0, %s85
    %s102 = sphi 0, %s86
    %s114 = sphi 0, %s116
    %s117 = sphi 0, %s114
    %s118 = sphi 0, %s117
    %s134 = sphi 0, %s118
    %s142 = sphi 0, %s144
    %s145 = sphi 0, %s142
    %s146 = sphi 0, %s145
    %s162 = sphi 0, %s146
    %s172 = sphi 0, %s174
    %s175 = sphi 0, %s172
    %s176 = sphi 0, %s175
    %s192 = sphi 0, %s176
  $region4: #{transformer_forward.27} parent=0 // loop_header_branch
    %13 = sbr.rel (%p11) target = $region8
  $region5: #{transformer_forward.27} parent=0 // loop_body
    %s15 = ssub.s32 %s10, 1
    %s16 = ssub.s32 %s10, 2
    %s29 = sadd.s32 1, %s20
    %p30 = scmp.ge.s32.totalorder %s29, 1
    %s31 = scalar_select %p30, 0, %s29
    %s32 = sadd.s32 1, %s19
    %s33 = scalar_select %p30, %s32, %s19
    %p34 = scmp.ge.s32.totalorder %s33, 1
    %s35 = scalar_select %p34, 0, %s33
    %s36 = sadd.s32 1, %s18
    %s37 = scalar_select %p34, %s36, %s18
    %p38 = scmp.ge.s32.totalorder %s37, 4
    %s39 = scalar_select %p38, 0, %s37
    %s40 = sadd.s32 1, %s17
    %s41 = scalar_select %p38, %s40, %s17
    %p42 = scmp.ge.s32.totalorder %s41, 2
    %s43 = scalar_select %p42, 0, %s41
    %s44 = ssub.s32 %s17, %s43
    %s45 = ssub.s32 %s19, %s35
    %s46 = sor.u32 %s44, %s45
    %s47 = ssub.s32 %s18, %s39
    %s48 = sor.u32 %s46, %s47
    %p49 = scmp.eq.s32.totalorder %s48, 0
    %s51 = sadd.s32 %s50, 1
    %s52 = scalar_select %p49, %s50, %s51
    %p55 = pneg %p49
    %p56 = scmp.eq.s32.totalorder %s10, 7
    %p57 = por %p55, %p56
    %p58 = scmp.ne.s32.totalorder %s50, %s53
    %p59 = scmp.eq.s32.totalorder %s10, 0
    %p60 = por %p58, %p59
    %p61 = scmp.ne.s32.totalorder %s50, %s53
    %p62 = scmp.eq.s32.totalorder %s15, 7
    %p63 = por %p61, %p62
    %p64 = scmp.ne.s32.totalorder %s53, %s54
    %p65 = scmp.eq.s32.totalorder %s15, 0
    %p66 = por %p64, %p65
    %p67 = scmp.ne.s32.totalorder %s53, %s54
    %p68 = scmp.eq.s32.totalorder %s16, 7
    %p69 = por %p67, %p68
    %p71 = scmp.ne.s32.totalorder %s54, %s70
    %p72 = scmp.eq.s32.totalorder %s16, 0
    %p73 = por %p71, %p72
    %s74 = sadd.s32 %s18, 4
    %s75 = sadd.s32 %s39, 4
    %s76 = ssub.s32 %s17, %s43
    %s77 = ssub.s32 %s20, %s31
    %s78 = sor.u32 %s76, %s77
    %s79 = ssub.s32 %s74, %s75
    %s80 = sor.u32 %s78, %s79
    %p81 = scmp.eq.s32.totalorder %s80, 0
    %s83 = sadd.s32 %s82, 1
    %s84 = scalar_select %p81, %s82, %s83
    %p87 = pneg %p81
    %p88 = scmp.eq.s32.totalorder %s10, 7
    %p89 = por %p87, %p88
    %p90 = scmp.ne.s32.totalorder %s82, %s85
    %p91 = scmp.eq.s32.totalorder %s10, 0
    %p92 = por %p90, %p91
    %p93 = scmp.ne.s32.totalorder %s82, %s85
    %p94 = scmp.eq.s32.totalorder %s15, 7
    %p95 = por %p93, %p94
    %p96 = scmp.ne.s32.totalorder %s85, %s86
    %p97 = scmp.eq.s32.totalorder %s15, 0
    %p98 = por %p96, %p97
    %p99 = scmp.ne.s32.totalorder %s85, %s86
    %p100 = scmp.eq.s32.totalorder %s16, 7
    %p101 = por %p99, %p100
    %p103 = scmp.ne.s32.totalorder %s86, %s102
    %p104 = scmp.eq.s32.totalorder %s16, 0
    %p105 = por %p103, %p104
    %s106 = sadd.s32 %s18, 8
    %s107 = sadd.s32 %s39, 8
    %s108 = ssub.s32 %s17, %s43
    %s109 = ssub.s32 %s20, %s31
    %s110 = sor.u32 %s108, %s109
    %s111 = ssub.s32 %s106, %s107
    %s112 = sor.u32 %s110, %s111
    %p113 = scmp.eq.s32.totalorder %s112, 0
    %s115 = sadd.s32 %s114, 1
    %s116 = scalar_select %p113, %s114, %s115
    %p119 = pneg %p113
    %p120 = scmp.eq.s32.totalorder %s10, 7
    %p121 = por %p119, %p120
    %p122 = scmp.ne.s32.totalorder %s114, %s117
    %p123 = scmp.eq.s32.totalorder %s10, 0
    %p124 = por %p122, %p123
    %p125 = scmp.ne.s32.totalorder %s114, %s117
    %p126 = scmp.eq.s32.totalorder %s15, 7
    %p127 = por %p125, %p126
    %p128 = scmp.ne.s32.totalorder %s117, %s118
    %p129 = scmp.eq.s32.totalorder %s15, 0
    %p130 = por %p128, %p129
    %p131 = scmp.ne.s32.totalorder %s117, %s118
    %p132 = scmp.eq.s32.totalorder %s16, 7
    %p133 = por %p131, %p132
    %p135 = scmp.ne.s32.totalorder %s118, %s134
    %p136 = scmp.eq.s32.totalorder %s16, 0
    %p137 = por %p135, %p136
    %s138 = ssub.s32 %s17, %s43
    %s139 = ssub.s32 %s20, %s31
    %s140 = sor.u32 %s138, %s139
    %p141 = scmp.eq.s32.totalorder %s140, 0
    %s143 = sadd.s32 %s142, 1
    %s144 = scalar_select %p141, %s142, %s143
    %p147 = pneg %p141
    %p148 = scmp.eq.s32.totalorder %s10, 7
    %p149 = por %p147, %p148
    %p150 = scmp.ne.s32.totalorder %s142, %s145
    %p151 = scmp.eq.s32.totalorder %s10, 0
    %p152 = por %p150, %p151
    %p153 = scmp.ne.s32.totalorder %s142, %s145
    %p154 = scmp.eq.s32.totalorder %s15, 7
    %p155 = por %p153, %p154
    %p156 = scmp.ne.s32.totalorder %s145, %s146
    %p157 = scmp.eq.s32.totalorder %s15, 0
    %p158 = por %p156, %p157
    %p159 = scmp.ne.s32.totalorder %s145, %s146
    %p160 = scmp.eq.s32.totalorder %s16, 7
    %p161 = por %p159, %p160
    %p163 = scmp.ne.s32.totalorder %s146, %s162
    %p164 = scmp.eq.s32.totalorder %s16, 0
    %p165 = por %p163, %p164
    %s166 = ssub.s32 %s17, %s43
    %s167 = ssub.s32 %s19, %s35
    %s168 = sor.u32 %s166, %s167
    %s169 = ssub.s32 %s18, %s39
    %s170 = sor.u32 %s168, %s169
    %p171 = scmp.eq.s32.totalorder %s170, 0
    %s173 = sadd.s32 %s172, 1
    %s174 = scalar_select %p171, %s172, %s173
    %p177 = pneg %p171
    %p178 = scmp.eq.s32.totalorder %s10, 7
    %p179 = por %p177, %p178
    %p180 = scmp.ne.s32.totalorder %s172, %s175
    %p181 = scmp.eq.s32.totalorder %s10, 0
    %p182 = por %p180, %p181
    %p183 = scmp.ne.s32.totalorder %s172, %s175
    %p184 = scmp.eq.s32.totalorder %s15, 7
    %p185 = por %p183, %p184
    %p186 = scmp.ne.s32.totalorder %s175, %s176
    %p187 = scmp.eq.s32.totalorder %s15, 0
    %p188 = por %p186, %p187
    %p189 = scmp.ne.s32.totalorder %s175, %s176
    %p190 = scmp.eq.s32.totalorder %s16, 7
    %p191 = por %p189, %p190
    %p193 = scmp.ne.s32.totalorder %s176, %s192
    %p194 = scmp.eq.s32.totalorder %s16, 0
    %p195 = por %p193, %p194
    %p196 = scmp.le.s32.totalorder 1, %s10
    %p197 = scmp.lt.s32.totalorder %s10, 9
    %p198 = pnand %p196, %p197
    %p199 = pneg %p198
    // Predicated region
    $region9: #{transformer_forward.27} parent=5 // pred_check
      _
    $region10: #{transformer_forward.27} parent=5 // pred_check_branch
      %201 = sbr.rel (%p198) target = $region12
    $region11: #{transformer_forward.27} parent=5 // pred_region
      %s202 = ssub.s32 %s10, 1
    $region12: #{transformer_forward.27} parent=5 // pred_fallthru
      _
    %p203 = scmp.lt.s32.totalorder %s10, 8
    // Predicated region
    $region13: #{transformer_forward.27} parent=5 // pred_check
      %p204 = pneg %p203
    $region14: #{transformer_forward.27} parent=5 // pred_check_branch
      %206 = sbr.rel (%p204) target = $region16
    $region15: #{transformer_forward.27} parent=5 // pred_region
      // Predicated region
      $region17: #{transformer_forward.27} parent=15 // pred_check
        %p207 = pneg %p60
      $region18: #{transformer_forward.27} parent=15 // pred_check_branch
        %209 = sbr.rel (%p207) target = $region20
      $region19: #{transformer_forward.27} parent=15 // pred_region
        %p210 = scmp.lt.s32.totalorder %s17, 1
        %s211 = scalar_select %p210, %s17, 1
        %p212 = scmp.lt.s32.totalorder %s19, 0
        %s213 = scalar_select %p212, %s19, 0
        %p214 = scmp.lt.s32.totalorder %s18, 11
        %s215 = scalar_select %p214, %s18, 11
        %s216 = smul.addr %s213, 12
        %s217 = sadd.s32 %s215, %s216
        %s218 = smul.addr %s211, 12
        %s219 = sadd.s32 %s217, %s218
        %s220 = smul.addr %s219, 8
        %s221 = scalar_lea.vmem %s0, %s220
      $region20: #{transformer_forward.27} parent=15 // pred_fallthru
        _
      // Predicated region
      $region21: #{transformer_forward.27} parent=15 // pred_check
        %p222 = pneg %p92
      $region22: #{transformer_forward.27} parent=15 // pred_check_branch
        %224 = sbr.rel (%p222) target = $region24
      $region23: #{transformer_forward.27} parent=15 // pred_region
        %s225 = sadd.s32 %s18, 4
        %p226 = scmp.lt.s32.totalorder %s17, 1
        %s227 = scalar_select %p226, %s17, 1
        %p228 = scmp.lt.s32.totalorder %s20, 0
        %s229 = scalar_select %p228, %s20, 0
        %p230 = scmp.lt.s32.totalorder %s225, 11
        %s231 = scalar_select %p230, %s225, 11
        %s232 = smul.addr %s229, 12
        %s233 = sadd.s32 %s231, %s232
        %s234 = smul.addr %s227, 12
        %s235 = sadd.s32 %s233, %s234
        %s236 = smul.addr %s235, 8
        %s237 = scalar_lea.vmem %s1, %s236
        %s238 = sadd.s32 %s18, 4
      $region24: #{transformer_forward.27} parent=15 // pred_fallthru
        _
      // Predicated region
      $region25: #{transformer_forward.27} parent=15 // pred_check
        %p239 = pneg %p124
      $region26: #{transformer_forward.27} parent=15 // pred_check_branch
        %241 = sbr.rel (%p239) target = $region28
      $region27: #{transformer_forward.27} parent=15 // pred_region
        %s242 = sadd.s32 %s18, 8
        %p243 = scmp.lt.s32.totalorder %s17, 1
        %s244 = scalar_select %p243, %s17, 1
        %p245 = scmp.lt.s32.totalorder %s20, 0
        %s246 = scalar_select %p245, %s20, 0
        %p247 = scmp.lt.s32.totalorder %s242, 11
        %s248 = scalar_select %p247, %s242, 11
        %s249 = smul.addr %s246, 12
        %s250 = sadd.s32 %s248, %s249
        %s251 = smul.addr %s244, 12
        %s252 = sadd.s32 %s250, %s251
        %s253 = smul.addr %s252, 8
        %s254 = scalar_lea.vmem %s2, %s253
        %s255 = sadd.s32 %s18, 8
      $region28: #{transformer_forward.27} parent=15 // pred_fallthru
        _
      // Predicated region
      $region29: #{transformer_forward.27} parent=15 // pred_check
        %p256 = pneg %p152
      $region30: #{transformer_forward.27} parent=15 // pred_check_branch
        %258 = sbr.rel (%p256) target = $region32
      $region31: #{transformer_forward.27} parent=15 // pred_region
        %p259 = scmp.lt.s32.totalorder %s17, 1
        %s260 = scalar_select %p259, %s17, 1
        %p261 = scmp.lt.s32.totalorder %s20, 0
        %s262 = scalar_select %p261, %s20, 0
        %s263 = sadd.s32 %s262, %s260
        %s264 = scalar_lea.vmem %s3, %s263
      $region32: #{transformer_forward.27} parent=15 // pred_fallthru
        _
    $region16: #{transformer_forward.27} parent=5 // pred_fallthru
      _
    %p265 = scmp.le.s32.totalorder 1, %s10
    %p266 = scmp.lt.s32.totalorder %s10, 9
    %p267 = pnand %p265, %p266
    %p268 = pneg %p267
    // Predicated region
    $region33: #{transformer_forward.27} parent=5 // pred_check
      _
    $region34: #{transformer_forward.27} parent=5 // pred_check_branch
      %270 = sbr.rel (%p267) target = $region36
    $region35: #{transformer_forward.27} parent=5 // pred_region
      %s271 = ssub.s32 %s10, 1
      %p272 = scmp.lt.s32.totalorder %s21, 1
      %s273 = scalar_select %p272, %s21, 1
      %p274 = scmp.lt.s32.totalorder %s23, 0
      %s275 = scalar_select %p274, %s23, 0
      %p276 = scmp.lt.s32.totalorder %s22, 11
      %s277 = scalar_select %p276, %s22, 11
      %s278 = smul.addr %s275, 12
      %s279 = sadd.s32 %s277, %s278
      %s280 = smul.addr %s273, 12
      %s281 = sadd.s32 %s279, %s280
      %s282 = smul.addr %s281, 8
      %s283 = scalar_lea.vmem %s0, %s282
      %p284 = pneg %p66
      %p285 = pneg %p63
      %s286 = sadd.s32 %s22, 4
      %p287 = scmp.lt.s32.totalorder %s21, 1
      %s288 = scalar_select %p287, %s21, 1
      %p289 = scmp.lt.s32.totalorder %s24, 0
      %s290 = scalar_select %p289, %s24, 0
      %p291 = scmp.lt.s32.totalorder %s286, 11
      %s292 = scalar_select %p291, %s286, 11
      %s293 = smul.addr %s290, 12
      %s294 = sadd.s32 %s292, %s293
      %s295 = smul.addr %s288, 12
      %s296 = sadd.s32 %s294, %s295
      %s297 = smul.addr %s296, 8
      %s298 = scalar_lea.vmem %s1, %s297
      %p299 = pneg %p98
      %p300 = pneg %p95
      %s301 = sadd.s32 %s22, 8
      %p302 = scmp.lt.s32.totalorder %s21, 1
      %s303 = scalar_select %p302, %s21, 1
      %p304 = scmp.lt.s32.totalorder %s24, 0
      %s305 = scalar_select %p304, %s24, 0
      %p306 = scmp.lt.s32.totalorder %s301, 11
      %s307 = scalar_select %p306, %s301, 11
      %s308 = smul.addr %s305, 12
      %s309 = sadd.s32 %s307, %s308
      %s310 = smul.addr %s303, 12
      %s311 = sadd.s32 %s309, %s310
      %s312 = smul.addr %s311, 8
      %s313 = scalar_lea.vmem %s2, %s312
      %p314 = pneg %p130
      %p315 = pneg %p127
      %p316 = scmp.lt.s32.totalorder %s21, 1
      %s317 = scalar_select %p316, %s21, 1
      %p318 = scmp.lt.s32.totalorder %s24, 0
      %s319 = scalar_select %p318, %s24, 0
      %s320 = sadd.s32 %s319, %s317
      %s321 = scalar_lea.vmem %s3, %s320
      %p322 = pneg %p158
      %p323 = pneg %p155
      %p324 = pneg %p188
      %p325 = pneg %p185
      %p326 = scmp.lt.s32.totalorder %s21, 1
      %s327 = scalar_select %p326, %s21, 1
      %p328 = scmp.lt.s32.totalorder %s23, 0
      %s329 = scalar_select %p328, %s23, 0
      %p330 = scmp.lt.s32.totalorder %s22, 3
      %s331 = scalar_select %p330, %s22, 3
      %s332 = smul.addr %s329, 4
      %s333 = sadd.s32 %s331, %s332
      %s334 = smul.addr %s327, 4
      %s335 = sadd.s32 %s333, %s334
      %s336 = smul.addr %s335, 8
      %s337 = scalar_lea.vmem %s4, %s336
      %p338 = scmp.lt.s32.totalorder %s21, 1
      %s339 = scalar_select %p338, %s21, 1
      %p340 = scmp.lt.s32.totalorder %s23, 0
      %s341 = scalar_select %p340, %s23, 0
      %p342 = scmp.lt.s32.totalorder %s22, 11
      %s343 = scalar_select %p342, %s22, 11
      %s344 = smul.addr %s341, 12
      %s345 = sadd.s32 %s343, %s344
      %s346 = smul.addr %s339, 12
      %s347 = sadd.s32 %s345, %s346
      %s348 = smul.addr %s347, 8
      %s349 = scalar_lea.vmem %s0, %s348
      %s350 = sadd.s32 %s22, 4
      %p351 = scmp.lt.s32.totalorder %s21, 1
      %s352 = scalar_select %p351, %s21, 1
      %p353 = scmp.lt.s32.totalorder %s24, 0
      %s354 = scalar_select %p353, %s24, 0
      %p355 = scmp.lt.s32.totalorder %s350, 11
      %s356 = scalar_select %p355, %s350, 11
      %s357 = smul.addr %s354, 12
      %s358 = sadd.s32 %s356, %s357
      %s359 = smul.addr %s352, 12
      %s360 = sadd.s32 %s358, %s359
      %s361 = smul.addr %s360, 8
      %s362 = scalar_lea.vmem %s1, %s361
      %s363 = sadd.s32 %s22, 4
      %s364 = sadd.s32 %s22, 8
      %p365 = scmp.lt.s32.totalorder %s21, 1
      %s366 = scalar_select %p365, %s21, 1
      %p367 = scmp.lt.s32.totalorder %s24, 0
      %s368 = scalar_select %p367, %s24, 0
      %p369 = scmp.lt.s32.totalorder %s364, 11
      %s370 = scalar_select %p369, %s364, 11
      %s371 = smul.addr %s368, 12
      %s372 = sadd.s32 %s370, %s371
      %s373 = smul.addr %s366, 12
      %s374 = sadd.s32 %s372, %s373
      %s375 = smul.addr %s374, 8
      %s376 = scalar_lea.vmem %s2, %s375
      %s377 = sadd.s32 %s22, 8
      %p378 = scmp.lt.s32.totalorder %s21, 1
      %s379 = scalar_select %p378, %s21, 1
      %p380 = scmp.lt.s32.totalorder %s24, 0
      %s381 = scalar_select %p380, %s24, 0
      %s382 = sadd.s32 %s381, %s379
      %s383 = scalar_lea.vmem %s3, %s382
      %p384 = scmp.lt.s32.totalorder %s21, 1
      %s385 = scalar_select %p384, %s21, 1
      %p386 = scmp.lt.s32.totalorder %s23, 0
      %s387 = scalar_select %p386, %s23, 0
      %p388 = scmp.lt.s32.totalorder %s22, 3
      %s389 = scalar_select %p388, %s22, 3
      %s390 = smul.addr %s387, 4
      %s391 = sadd.s32 %s389, %s390
      %s392 = smul.addr %s385, 4
      %s393 = sadd.s32 %s391, %s392
      %s394 = smul.addr %s393, 8
      %s395 = scalar_lea.vmem %s4, %s394
      %p397 = scmp.eq.s32.totalorder %s24, 0
      // Predicated region
      $region37: #{transformer_forward.27} parent=35 // pred_check
        %p398 = pneg %p397
      $region38: #{transformer_forward.27} parent=35 // pred_check_branch
        %400 = sbr.rel (%p398) target = $region40
      $region39: #{transformer_forward.27} parent=35 // pred_region
        %vm401 = vcmask 7168
        %402 = vst.msk [vmem:[#allocation2] sm:$0xff] %vm401, -inf
        %403 = vst.msk [vmem:[#allocation3] sm:$0xff] %vm401, 0.0
        %404 = vst [vmem:[#allocation4] sm:$0xff] 0.0
      $region40: #{transformer_forward.27} parent=35 // pred_fallthru
        _
      %v405 = vld [vmem:[%s349] sm:$0xff]
      %v406 = vmul.f32 %v405, 0.35355338
      %v407 = vpack.c.bf16 %v406, %v406
      %v408 = vld [vmem:[%s362] sm:$0xff]
      %v409 = vpack.c.bf16 %v408, %v408
      %v410 = vld [vmem:[%s383] sm:$0x1]
      %v412 = vlaneseq
      %v413 = vshrl.u32 %v412, 7
      %v414 = vsub.s32 0, %v413
      %v415 = vrot.slane %v410, %v414
      %417 = vmatprep.subr.bf16.mxu0 0
      %418 = vmatpush1.bf16.xpose.msra.mxu0 %v409
      %419 = vmatprep.subr.bf16.mxu0 0
      %420 = vmatpush1.bf16.xpose.msra.mxu0 0
      %421 = vmatprep.subr.bf16.mxu0 0
      %422 = vmatpush1.bf16.xpose.msra.mxu0 0
      %423 = vmatprep.subr.bf16.mxu0 0
      %424 = vmatpush1.bf16.xpose.msra.mxu0 0
      %425 = vmatprep.subr.bf16.mxu0 0
      %426 = vmatpush1.bf16.xpose.msra.mxu0 0
      %427 = vmatprep.subr.bf16.mxu0 0
      %428 = vmatpush1.bf16.xpose.msra.mxu0 0
      %429 = vmatprep.subr.bf16.mxu0 0
      %430 = vmatpush1.bf16.xpose.msra.mxu0 0
      %431 = vmatprep.subr.bf16.mxu0 0
      %432 = vmatpush1.bf16.xpose.msra.mxu0 0
      %433 = vmatprep.subr.bf16.mxu0 0
      %434 = vmatpush1.bf16.xpose.msra.mxu0 0
      %435 = vmatprep.subr.bf16.mxu0 0
      %436 = vmatpush1.bf16.xpose.msra.mxu0 0
      %437 = vmatprep.subr.bf16.mxu0 0
      %438 = vmatpush1.bf16.xpose.msra.mxu0 0
      %439 = vmatprep.subr.bf16.mxu0 0
      %440 = vmatpush1.bf16.xpose.msra.mxu0 0
      %441 = vmatprep.subr.bf16.mxu0 0
      %442 = vmatpush1.bf16.xpose.msra.mxu0 0
      %443 = vmatprep.subr.bf16.mxu0 0
      %444 = vmatpush1.bf16.xpose.msra.mxu0 0
      %445 = vmatprep.subr.bf16.mxu0 0
      %446 = vmatpush1.bf16.xpose.msra.mxu0 0
      %447 = vmatprep.subr.bf16.mxu0 0
      %448 = vmatpush1.bf16.xpose.msra.mxu0 0
      %449 = vmatprep.mubr.bf16.mxu0 0
      %450 = vmatmul.mubr.bf16.gmra.mrb[0].mxu0 %v407
      %v451 = vpop.f32.mrb[0].mxu0
      %v452 = vadd.f32 %v415, %v451
      %v453 = vpop.f32.mrb[0].mxu0
      %v454 = vpop.f32.mrb[0].mxu0
      %v455 = vpop.f32.mrb[0].mxu0
      %456 = vdwg.mxu0
      %v457 = vld [vmem:[#allocation2] sm:$0xff]
      %vm458 = vcmask 64512
      %v459 = vsel %vm458, %v452, -inf
      %460 = vmax.xlane.f32.xlu0 %v459
      %v461 = vpop.xlane.xlu0 %460
      %v462 = vmax.f32 %v457, %v461
      %v463 = vsub.f32 %v457, %v462
      %v464 = vmul.f32 %v463, 1.442695
      %v465 = vpow.pop %v464
      %467 = vset.pattern.permute.xlu0 0
      %468 = vperm.xlu0 %467, %v462
      %v469 = vpop.permute.xlu0 %468
      %v471 = vsub.f32 %v452, %v469
      %v472 = vmul.f32 %v471, 1.442695
      %v473 = vpow.pop %v472
      %v474 = vld [vmem:[#allocation3] sm:$0xff]
      %v475 = vmul.f32 %v465, %v474
      %v476 = vsel %vm458, %v473, 0.0
      %477 = vadd.xlane.f32.xlu0 %v476
      %v478 = vpop.xlane.xlu0 %477
      %v479 = vadd.f32 %v475, %v478
      %vm480 = vcmask 7168
      %481 = vst.msk [vmem:[#allocation3] sm:$0xff] %vm480, %v479
      %v482 = vld [vmem:[#allocation4] sm:$0xff]
      %484 = vset.pattern.permute.xlu0 0
      %485 = vperm.xlu0 %484, %v465
      %v486 = vpop.permute.xlu0 %485
      %v488 = vmul.f32 %v486, %v482
      %v489 = vpack.c.bf16 %v473, %v473
      %v490 = vld [vmem:[%s376] sm:$0xff]
      %v491 = vpack.c.bf16 %v490, %v490
      %v493 = vsel %vm458, %v489, 0
      %vm495 = vcmask 1043456
      %v497 = vsel %vm495, %v491, 0
      %499 = vmatprep.subr.bf16.mxu0 0
      %500 = vmatpush1.bf16.msra.mxu0 %v497
      %501 = vmatprep.subr.bf16.mxu0 0
      %502 = vmatpush1.bf16.msra.mxu0 0
      %503 = vmatprep.subr.bf16.mxu0 0
      %504 = vmatpush1.bf16.msra.mxu0 0
      %505 = vmatprep.subr.bf16.mxu0 0
      %506 = vmatpush1.bf16.msra.mxu0 0
      %507 = vmatprep.subr.bf16.mxu0 0
      %508 = vmatpush1.bf16.msra.mxu0 0
      %509 = vmatprep.subr.bf16.mxu0 0
      %510 = vmatpush1.bf16.msra.mxu0 0
      %511 = vmatprep.subr.bf16.mxu0 0
      %512 = vmatpush1.bf16.msra.mxu0 0
      %513 = vmatprep.subr.bf16.mxu0 0
      %514 = vmatpush1.bf16.msra.mxu0 0
      %515 = vmatprep.subr.bf16.mxu0 0
      %516 = vmatpush1.bf16.msra.mxu0 0
      %517 = vmatprep.subr.bf16.mxu0 0
      %518 = vmatpush1.bf16.msra.mxu0 0
      %519 = vmatprep.subr.bf16.mxu0 0
      %520 = vmatpush1.bf16.msra.mxu0 0
      %521 = vmatprep.subr.bf16.mxu0 0
      %522 = vmatpush1.bf16.msra.mxu0 0
      %523 = vmatprep.subr.bf16.mxu0 0
      %524 = vmatpush1.bf16.msra.mxu0 0
      %525 = vmatprep.subr.bf16.mxu0 0
      %526 = vmatpush1.bf16.msra.mxu0 0
      %527 = vmatprep.subr.bf16.mxu0 0
      %528 = vmatpush1.bf16.msra.mxu0 0
      %529 = vmatprep.subr.bf16.mxu0 0
      %530 = vmatpush1.bf16.msra.mxu0 0
      %531 = vmatprep.mubr.bf16.mxu0 0
      %532 = vmatmul.mubr.bf16.gmra.mrb[0].mxu0 %v493
      %v533 = vpop.f32.mrb[0].mxu0
      %v534 = vadd.f32 0.0, %v533
      %v535 = vpop.f32.mrb[0].mxu0
      %v536 = vpop.f32.mrb[0].mxu0
      %v537 = vpop.f32.mrb[0].mxu0
      %538 = vdwg.mxu0
      %v539 = vadd.f32 %v488, %v534
      %540 = vst [vmem:[#allocation4] sm:$0xff] %v539
      %541 = vst.msk [vmem:[#allocation2] sm:$0xff] %vm480, %v462
      // Predicated region
      $region41: #{transformer_forward.27} parent=35 // pred_check
        %p542 = pneg %p397
      $region42: #{transformer_forward.27} parent=35 // pred_check_branch
        %544 = sbr.rel (%p542) target = $region44
      $region43: #{transformer_forward.27} parent=35 // pred_region
        %v545 = vld [vmem:[#allocation4] sm:$0xff]
        %v546 = vld [vmem:[#allocation3] sm:$0xff]
        %v547 = vrcp.pop %v546
        %549 = vset.pattern.permute.xlu0 0
        %550 = vperm.xlu0 %549, %v547
        %v551 = vpop.permute.xlu0 %550
        %v553 = vmul.f32 %v545, %v551
        %554 = vst [vmem:[%s395] sm:$0xff] %v553
      $region44: #{transformer_forward.27} parent=35 // pred_fallthru
        _
      %p555 = scmp.lt.s32.totalorder %s21, 1
      %s556 = scalar_select %p555, %s21, 1
      %p557 = scmp.lt.s32.totalorder %s23, 0
      %s558 = scalar_select %p557, %s23, 0
      %p559 = scmp.lt.s32.totalorder %s22, 3
      %s560 = scalar_select %p559, %s22, 3
      %s561 = smul.addr %s558, 4
      %s562 = sadd.s32 %s560, %s561
      %s563 = smul.addr %s556, 4
      %s564 = sadd.s32 %s562, %s563
      %s565 = smul.addr %s564, 8
      %s566 = scalar_lea.vmem %s4, %s565
      // Predicated region
      $region45: #{transformer_forward.27} parent=35 // pred_check
        %p567 = pneg %p185
      $region46: #{transformer_forward.27} parent=35 // pred_check_branch
        %569 = sbr.rel (%p567) target = $region48
      $region47: #{transformer_forward.27} parent=35 // pred_region
        _
      $region48: #{transformer_forward.27} parent=35 // pred_fallthru
        _
    $region36: #{transformer_forward.27} parent=5 // pred_fallthru
      _
    %p570 = scmp.le.s32.totalorder 2, %s10
    // Predicated region
    $region49: #{transformer_forward.27} parent=5 // pred_check
      %p571 = pneg %p570
    $region50: #{transformer_forward.27} parent=5 // pred_check_branch
      %573 = sbr.rel (%p571) target = $region52
    $region51: #{transformer_forward.27} parent=5 // pred_region
      %s574 = ssub.s32 %s10, 2
      // Predicated region
      $region53: #{transformer_forward.27} parent=51 // pred_check
        %p575 = pneg %p191
      $region54: #{transformer_forward.27} parent=51 // pred_check_branch
        %577 = sbr.rel (%p575) target = $region56
      $region55: #{transformer_forward.27} parent=51 // pred_region
        %p578 = scmp.lt.s32.totalorder %s25, 1
        %s579 = scalar_select %p578, %s25, 1
        %p580 = scmp.lt.s32.totalorder %s27, 0
        %s581 = scalar_select %p580, %s27, 0
        %p582 = scmp.lt.s32.totalorder %s26, 3
        %s583 = scalar_select %p582, %s26, 3
        %s584 = smul.addr %s581, 4
        %s585 = sadd.s32 %s583, %s584
        %s586 = smul.addr %s579, 4
        %s587 = sadd.s32 %s585, %s586
        %s588 = smul.addr %s587, 8
        %s589 = scalar_lea.vmem %s4, %s588
      $region56: #{transformer_forward.27} parent=51 // pred_fallthru
        _
    $region52: #{transformer_forward.27} parent=5 // pred_fallthru
      _
  $region6: #{transformer_forward.27} parent=0 // loop_footer
    %s14 = sadd.s32 1, %s10
  $region7: #{transformer_forward.27} parent=0 // loop_footer_branch
    %9 = sbr.rel target = $region3
  $region8: #{transformer_forward.27} parent=0 // loop_exit
    _

// kernel: transformer_forward.39
$region0: #{transformer_forward.39}
  #allocation0 [shape = 'u32[]', space=smem, size = 0x4, offset = 0x4, fixed_abs, tag = 'smem constant byte address 0x4 - core index']
  #allocation1 [shape = 'u32[144,128]{1,0:T(1,128)}', space=vmem, size = 0x12000, scoped, tag = 'internal scratch']
  %s0 = inlined_call_operand.vmem [shape: f32[16,128], index: 0, kind: input, shape index: {}]
  %s1 = inlined_call_operand.vmem [shape: bf16[128,1024], index: 1, kind: input, shape index: {}]
  %s2 = inlined_call_operand.vmem [shape: f32[1,1024], index: 2, kind: input, shape index: {}]
  %s3 = inlined_call_operand.vmem [shape: f32[16,1024], index: 3, kind: output, shape index: {}]
  %s4 = sld [smem:[#allocation0]]
  $region87: #{transformer_forward.39} parent=0
    _
  %s6 = ssub.s32 1, %s4
  %s7 = scalar_select 0, %s6, %s4
  $region1: #{transformer_forward.39} parent=0
    #allocation2 [shape = 'u8[262144]{0}', space=vmem, size = 0x40000, scoped, tag = 'input window, operand 1']
    #allocation3 [shape = 'u8[65536]{0}', space=vmem, size = 0x10000, scoped, tag = 'output window, operand 0']
    loop: start=0, step=1, limit=4
    $region2: #{transformer_forward.39} parent=1 // loop_pre_header
      _
    $region3: #{transformer_forward.39} parent=1 // loop_header
      %s9 = sphi 0, %s13
      %p10 = scmp.ge.s32.totalorder %s9, 4
      %s16 = sphi 0, %s28
      %s17 = sphi 0, %s24
      %s18 = sphi 0, %s16
      %s19 = sphi 0, %s17
      %s20 = sphi 0, %s18
      %s21 = sphi 0, %s19
      %s31 = sphi 0, %s33
      %s34 = sphi 0, %s31
      %s35 = sphi 0, %s34
      %s51 = sphi 0, %s35
      %s57 = sphi 0, %s59
      %s60 = sphi 0, %s57
      %s61 = sphi 0, %s60
      %s77 = sphi 0, %s61
      %s83 = sphi 0, %s85
      %s86 = sphi 0, %s83
      %s87 = sphi 0, %s86
      %s103 = sphi 0, %s87
      %s111 = sphi 0, %s113
      %s114 = sphi 0, %s111
      %s115 = sphi 0, %s114
      %s131 = sphi 0, %s115
    $region4: #{transformer_forward.39} parent=1 // loop_header_branch
      %12 = sbr.rel (%p10) target = $region8
    $region5: #{transformer_forward.39} parent=1 // loop_body
      %s14 = ssub.s32 %s9, 1
      %s15 = ssub.s32 %s9, 2
      %s22 = sadd.s32 1, %s17
      %p23 = scmp.ge.s32.totalorder %s22, 2
      %s24 = scalar_select %p23, 0, %s22
      %s25 = sadd.s32 1, %s16
      %s26 = scalar_select %p23, %s25, %s16
      %p27 = scmp.ge.s32.totalorder %s26, 1
      %s28 = scalar_select %p27, 0, %s26
      %s29 = ssub.s32 %s16, %s28
      %p30 = scmp.eq.s32.totalorder %s29, 0
      %s32 = sadd.s32 %s31, 1
      %s33 = scalar_select %p30, %s31, %s32
      %p36 = pneg %p30
      %p37 = scmp.eq.s32.totalorder %s9, 1
      %p38 = por %p36, %p37
      %p39 = scmp.ne.s32.totalorder %s31, %s34
      %p40 = scmp.eq.s32.totalorder %s9, 0
      %p41 = por %p39, %p40
      %p42 = scmp.ne.s32.totalorder %s31, %s34
      %p43 = scmp.eq.s32.totalorder %s14, 1
      %p44 = por %p42, %p43
      %p45 = scmp.ne.s32.totalorder %s34, %s35
      %p46 = scmp.eq.s32.totalorder %s14, 0
      %p47 = por %p45, %p46
      %p48 = scmp.ne.s32.totalorder %s34, %s35
      %p49 = scmp.eq.s32.totalorder %s15, 1
      %p50 = por %p48, %p49
      %p52 = scmp.ne.s32.totalorder %s35, %s51
      %p53 = scmp.eq.s32.totalorder %s15, 0
      %p54 = por %p52, %p53
      %s55 = ssub.s32 %s17, %s24
      %p56 = scmp.eq.s32.totalorder %s55, 0
      %s58 = sadd.s32 %s57, 1
      %s59 = scalar_select %p56, %s57, %s58
      %p62 = pneg %p56
      %p63 = scmp.eq.s32.totalorder %s9, 1
      %p64 = por %p62, %p63
      %p65 = scmp.ne.s32.totalorder %s57, %s60
      %p66 = scmp.eq.s32.totalorder %s9, 0
      %p67 = por %p65, %p66
      %p68 = scmp.ne.s32.totalorder %s57, %s60
      %p69 = scmp.eq.s32.totalorder %s14, 1
      %p70 = por %p68, %p69
      %p71 = scmp.ne.s32.totalorder %s60, %s61
      %p72 = scmp.eq.s32.totalorder %s14, 0
      %p73 = por %p71, %p72
      %p74 = scmp.ne.s32.totalorder %s60, %s61
      %p75 = scmp.eq.s32.totalorder %s15, 1
      %p76 = por %p74, %p75
      %p78 = scmp.ne.s32.totalorder %s61, %s77
      %p79 = scmp.eq.s32.totalorder %s15, 0
      %p80 = por %p78, %p79
      %s81 = ssub.s32 %s17, %s24
      %p82 = scmp.eq.s32.totalorder %s81, 0
      %s84 = sadd.s32 %s83, 1
      %s85 = scalar_select %p82, %s83, %s84
      %p88 = pneg %p82
      %p89 = scmp.eq.s32.totalorder %s9, 1
      %p90 = por %p88, %p89
      %p91 = scmp.ne.s32.totalorder %s83, %s86
      %p92 = scmp.eq.s32.totalorder %s9, 0
      %p93 = por %p91, %p92
      %p94 = scmp.ne.s32.totalorder %s83, %s86
      %p95 = scmp.eq.s32.totalorder %s14, 1
      %p96 = por %p94, %p95
      %p97 = scmp.ne.s32.totalorder %s86, %s87
      %p98 = scmp.eq.s32.totalorder %s14, 0
      %p99 = por %p97, %p98
      %p100 = scmp.ne.s32.totalorder %s86, %s87
      %p101 = scmp.eq.s32.totalorder %s15, 1
      %p102 = por %p100, %p101
      %p104 = scmp.ne.s32.totalorder %s87, %s103
      %p105 = scmp.eq.s32.totalorder %s15, 0
      %p106 = por %p104, %p105
      %s107 = ssub.s32 %s16, %s28
      %s108 = ssub.s32 %s17, %s24
      %s109 = sor.u32 %s107, %s108
      %p110 = scmp.eq.s32.totalorder %s109, 0
      %s112 = sadd.s32 %s111, 1
      %s113 = scalar_select %p110, %s111, %s112
      %p116 = pneg %p110
      %p117 = scmp.eq.s32.totalorder %s9, 1
      %p118 = por %p116, %p117
      %p119 = scmp.ne.s32.totalorder %s111, %s114
      %p120 = scmp.eq.s32.totalorder %s9, 0
      %p121 = por %p119, %p120
      %p122 = scmp.ne.s32.totalorder %s111, %s114
      %p123 = scmp.eq.s32.totalorder %s14, 1
      %p124 = por %p122, %p123
      %p125 = scmp.ne.s32.totalorder %s114, %s115
      %p126 = scmp.eq.s32.totalorder %s14, 0
      %p127 = por %p125, %p126
      %p128 = scmp.ne.s32.totalorder %s114, %s115
      %p129 = scmp.eq.s32.totalorder %s15, 1
      %p130 = por %p128, %p129
      %p132 = scmp.ne.s32.totalorder %s115, %s131
      %p133 = scmp.eq.s32.totalorder %s15, 0
      %p134 = por %p132, %p133
      %p135 = scmp.le.s32.totalorder 1, %s9
      %p136 = scmp.lt.s32.totalorder %s9, 3
      %p137 = pnand %p135, %p136
      %p138 = pneg %p137
      // Predicated region
      $region9: #{transformer_forward.39} parent=5 // pred_check
        _
      $region10: #{transformer_forward.39} parent=5 // pred_check_branch
        %140 = sbr.rel (%p137) target = $region12
      $region11: #{transformer_forward.39} parent=5 // pred_region
        %s141 = ssub.s32 %s9, 1
        // Predicated region
        $region13: #{transformer_forward.39} parent=11 // pred_check
          %p142 = pneg %p47
        $region14: #{transformer_forward.39} parent=11 // pred_check_branch
          %144 = sbr.rel (%p142) target = $region16
        $region15: #{transformer_forward.39} parent=11 // pred_region
          %s145 = smul.u32 2, %s18
          %p146 = scmp.lt.s32.totalorder %s145, 1
          %s147 = scalar_select %p146, %s145, 1
          %s148 = smul.addr %s147, 8
          %s149 = scalar_lea.vmem %s0, %s148
          %s150 = smul.u32 2, %s18
        $region16: #{transformer_forward.39} parent=11 // pred_fallthru
          _
      $region12: #{transformer_forward.39} parent=5 // pred_fallthru
        _
      %p151 = scmp.lt.s32.totalorder %s9, 2
      // Predicated region
      $region17: #{transformer_forward.39} parent=5 // pred_check
        %p152 = pneg %p151
      $region18: #{transformer_forward.39} parent=5 // pred_check_branch
        %154 = sbr.rel (%p152) target = $region20
      $region19: #{transformer_forward.39} parent=5 // pred_region
        // Predicated region
        $region21: #{transformer_forward.39} parent=19 // pred_check
          %p155 = pneg %p67
        $region22: #{transformer_forward.39} parent=19 // pred_check_branch
          %157 = sbr.rel (%p155) target = $region24
        $region23: #{transformer_forward.39} parent=19 // pred_region
          %s158 = sand.u32 %s57, 1
          %s159 = sand.u32 %s57, 1
          %s160 = smul.addr %s159, 256
          %s161 = scalar_lea.vmem [#allocation2], %s160
          %s162 = smul.u32 4, %s17
          %s163 = smul.addr %s162, 4
          %s164 = scalar_lea.vmem %s1, %s163
          // Predicated region
          $region25: #{transformer_forward.39} parent=23 // pred_check
            _
          $region26: #{transformer_forward.39} parent=23 // pred_check_branch
            %166 = sbr.rel (0) target = $region28
          $region27: #{transformer_forward.39} parent=23 // pred_region
            // Predicated region
            $region29: #{transformer_forward.39} parent=27 // pred_check
              _
            $region30: #{transformer_forward.39} parent=27 // pred_check_branch
              %168 = sbr.rel (0) target = $region32
            $region31: #{transformer_forward.39} parent=27 // pred_region
              loop: start=0, step=1, limit=1
              $region33: #{transformer_forward.39} parent=31 // loop_pre_header
                _
              $region34: #{transformer_forward.39} parent=31 // loop_header
                %s170 = sphi 0, %s174
                %p171 = scmp.ge.s32.totalorder %s170, 1
                %s175 = sphi %s164, %s164
                %s176 = sphi %s161, %s161
              $region35: #{transformer_forward.39} parent=31 // loop_header_branch
                %173 = sbr.rel (%p171) target = $region39
              $region36: #{transformer_forward.39} parent=31 // loop_body
                %v177 = vld [vmem:[%s175] sm:$0xff]
                %178 = vst [vmem:[%s176] sm:$0xff] %v177
                %v179 = vld [vmem:[%s175 + $0x8] sm:$0xff]
                %180 = vst [vmem:[%s176 + $0x8] sm:$0xff] %v179
                %v181 = vld [vmem:[%s175 + $0x20] sm:$0xff]
                %182 = vst [vmem:[%s176 + $0x10] sm:$0xff] %v181
                %v183 = vld [vmem:[%s175 + $0x28] sm:$0xff]
                %184 = vst [vmem:[%s176 + $0x18] sm:$0xff] %v183
                %v185 = vld [vmem:[%s175 + $0x40] sm:$0xff]
                %186 = vst [vmem:[%s176 + $0x20] sm:$0xff] %v185
                %v187 = vld [vmem:[%s175 + $0x48] sm:$0xff]
                %188 = vst [vmem:[%s176 + $0x28] sm:$0xff] %v187
                %v189 = vld [vmem:[%s175 + $0x60] sm:$0xff]
                %190 = vst [vmem:[%s176 + $0x30] sm:$0xff] %v189
                %v191 = vld [vmem:[%s175 + $0x68] sm:$0xff]
                %192 = vst [vmem:[%s176 + $0x38] sm:$0xff] %v191
                %v193 = vld [vmem:[%s175 + $0x80] sm:$0xff]
                %194 = vst [vmem:[%s176 + $0x40] sm:$0xff] %v193
                %v195 = vld [vmem:[%s175 + $0x88] sm:$0xff]
                %196 = vst [vmem:[%s176 + $0x48] sm:$0xff] %v195
                %v197 = vld [vmem:[%s175 + $0xa0] sm:$0xff]
                %198 = vst [vmem:[%s176 + $0x50] sm:$0xff] %v197
                %v199 = vld [vmem:[%s175 + $0xa8] sm:$0xff]
                %200 = vst [vmem:[%s176 + $0x58] sm:$0xff] %v199
                %v201 = vld [vmem:[%s175 + $0xc0] sm:$0xff]
                %202 = vst [vmem:[%s176 + $0x60] sm:$0xff] %v201
                %v203 = vld [vmem:[%s175 + $0xc8] sm:$0xff]
                %204 = vst [vmem:[%s176 + $0x68] sm:$0xff] %v203
                %v205 = vld [vmem:[%s175 + $0xe0] sm:$0xff]
                %206 = vst [vmem:[%s176 + $0x70] sm:$0xff] %v205
                %v207 = vld [vmem:[%s175 + $0xe8] sm:$0xff]
                %208 = vst [vmem:[%s176 + $0x78] sm:$0xff] %v207
                %v209 = vld [vmem:[%s175 + $0x100] sm:$0xff]
                %210 = vst [vmem:[%s176 + $0x80] sm:$0xff] %v209
                %v211 = vld [vmem:[%s175 + $0x108] sm:$0xff]
                %212 = vst [vmem:[%s176 + $0x88] sm:$0xff] %v211
                %v213 = vld [vmem:[%s175 + $0x120] sm:$0xff]
                %214 = vst [vmem:[%s176 + $0x90] sm:$0xff] %v213
                %v215 = vld [vmem:[%s175 + $0x128] sm:$0xff]
                %216 = vst [vmem:[%s176 + $0x98] sm:$0xff] %v215
                %v217 = vld [vmem:[%s175 + $0x140] sm:$0xff]
                %218 = vst [vmem:[%s176 + $0xa0] sm:$0xff] %v217
                %v219 = vld [vmem:[%s175 + $0x148] sm:$0xff]
                %220 = vst [vmem:[%s176 + $0xa8] sm:$0xff] %v219
                %v221 = vld [vmem:[%s175 + $0x160] sm:$0xff]
                %222 = vst [vmem:[%s176 + $0xb0] sm:$0xff] %v221
                %v223 = vld [vmem:[%s175 + $0x168] sm:$0xff]
                %224 = vst [vmem:[%s176 + $0xb8] sm:$0xff] %v223
                %v225 = vld [vmem:[%s175 + $0x180] sm:$0xff]
                %226 = vst [vmem:[%s176 + $0xc0] sm:$0xff] %v225
                %v227 = vld [vmem:[%s175 + $0x188] sm:$0xff]
                %228 = vst [vmem:[%s176 + $0xc8] sm:$0xff] %v227
                %v229 = vld [vmem:[%s175 + $0x1a0] sm:$0xff]
                %230 = vst [vmem:[%s176 + $0xd0] sm:$0xff] %v229
                %v231 = vld [vmem:[%s175 + $0x1a8] sm:$0xff]
                %232 = vst [vmem:[%s176 + $0xd8] sm:$0xff] %v231
                %v233 = vld [vmem:[%s175 + $0x1c0] sm:$0xff]
                %234 = vst [vmem:[%s176 + $0xe0] sm:$0xff] %v233
                %v235 = vld [vmem:[%s175 + $0x1c8] sm:$0xff]
                %236 = vst [vmem:[%s176 + $0xe8] sm:$0xff] %v235
                %v237 = vld [vmem:[%s175 + $0x1e0] sm:$0xff]
                %238 = vst [vmem:[%s176 + $0xf0] sm:$0xff] %v237
                %v239 = vld [vmem:[%s175 + $0x1e8] sm:$0xff]
                %240 = vst [vmem:[%s176 + $0xf8] sm:$0xff] %v239
              $region37: #{transformer_forward.39} parent=31 // loop_footer
                %s174 = sadd.s32 1, %s170
              $region38: #{transformer_forward.39} parent=31 // loop_footer_branch
                %169 = sbr.rel target = $region34
              $region39: #{transformer_forward.39} parent=31 // loop_exit
                _
            $region32: #{transformer_forward.39} parent=27 // pred_fallthru
              _
            // Predicated region
            $region40: #{transformer_forward.39} parent=27 // pred_check
              _
            $region41: #{transformer_forward.39} parent=27 // pred_check_branch
              %242 = sbr.rel target = $region43
            $region42: #{transformer_forward.39} parent=27 // pred_region
              _
            $region43: #{transformer_forward.39} parent=27 // pred_fallthru
              _
          $region28: #{transformer_forward.39} parent=23 // pred_fallthru
            _
          %243 = vnop
        $region24: #{transformer_forward.39} parent=19 // pred_fallthru
          _
        // Predicated region
        $region44: #{transformer_forward.39} parent=19 // pred_check
          %p244 = pneg %p93
        $region45: #{transformer_forward.39} parent=19 // pred_check_branch
          %246 = sbr.rel (%p244) target = $region47
        $region46: #{transformer_forward.39} parent=19 // pred_region
          %s247 = smul.u32 4, %s17
          %p248 = scmp.lt.s32.totalorder %s247, 7
          %s249 = scalar_select %p248, %s247, 7
          %s250 = scalar_lea.vmem %s2, %s249
          %s251 = smul.u32 4, %s17
        $region47: #{transformer_forward.39} parent=19 // pred_fallthru
          _
      $region20: #{transformer_forward.39} parent=5 // pred_fallthru
        _
      %p252 = scmp.le.s32.totalorder 1, %s9
      %p253 = scmp.lt.s32.totalorder %s9, 3
      %p254 = pnand %p252, %p253
      %p255 = pneg %p254
      // Predicated region
      $region48: #{transformer_forward.39} parent=5 // pred_check
        _
      $region49: #{transformer_forward.39} parent=5 // pred_check_branch
        %257 = sbr.rel (%p254) target = $region51
      $region50: #{transformer_forward.39} parent=5 // pred_region
        %s258 = ssub.s32 %s9, 1
        %s259 = sand.u32 %s60, 1
        %s260 = sand.u32 %s60, 1
        %s261 = smul.addr %s260, 256
        %s262 = scalar_lea.vmem [#allocation2], %s261
        // Predicated region
        $region52: #{transformer_forward.39} parent=50 // pred_check
          %p263 = pneg %p73
        $region53: #{transformer_forward.39} parent=50 // pred_check_branch
          %265 = sbr.rel (%p263) target = $region55
        $region54: #{transformer_forward.39} parent=50 // pred_region
          _
        $region55: #{transformer_forward.39} parent=50 // pred_fallthru
          _
        %s266 = smul.u32 2, %s18
        %p267 = scmp.lt.s32.totalorder %s266, 1
        %s268 = scalar_select %p267, %s266, 1
        %s269 = smul.addr %s268, 8
        %s270 = scalar_lea.vmem %s0, %s269
        %p271 = pneg %p47
        %p272 = pneg %p44
        %s273 = sand.u32 %s60, 1
        %s274 = sand.u32 %s60, 1
        %s275 = smul.addr %s274, 256
        %s276 = scalar_lea.vmem [#allocation2], %s275
        %p277 = pneg %p73
        %p278 = pneg %p70
        %s279 = smul.u32 4, %s19
        %p280 = scmp.lt.s32.totalorder %s279, 7
        %s281 = scalar_select %p280, %s279, 7
        %s282 = scalar_lea.vmem %s2, %s281
        %p283 = pneg %p99
        %p284 = pneg %p96
        %p285 = pneg %p127
        %p286 = pneg %p124
        %s287 = sand.u32 %s114, 1
        %s288 = sand.u32 %s114, 1
        %s289 = smul.addr %s288, 64
        %s290 = scalar_lea.vmem [#allocation3], %s289
        %s291 = smul.u32 2, %s18
        %p292 = scmp.lt.s32.totalorder %s291, 1
        %s293 = scalar_select %p292, %s291, 1
        %s294 = smul.addr %s293, 8
        %s295 = scalar_lea.vmem %s0, %s294
        %s296 = smul.u32 2, %s18
        %s297 = smul.u32 4, %s19
        %s298 = smul.u32 4, %s19
        %p299 = scmp.lt.s32.totalorder %s298, 7
        %s300 = scalar_select %p299, %s298, 7
        %s301 = scalar_lea.vmem %s2, %s300
        %s302 = smul.u32 4, %s19
        %s303 = smul.u32 2, %s18
        %s304 = smul.u32 4, %s19
        %v306 = vld [vmem:[%s295] sm:$0xff]
        %v307 = vld [vmem:[%s295 + $0x8] sm:$0xff]
        %v308 = vpack.c.bf16 %v307, %v306
        %v309 = vld [vmem:[%s262] sm:$0xff]
        %v310 = vld [vmem:[%s262 + $0x8] sm:$0xff]
        %v311 = vld [vmem:[%s262 + $0x10] sm:$0xff]
        %v312 = vld [vmem:[%s262 + $0x18] sm:$0xff]
        %v313 = vld [vmem:[%s262 + $0x20] sm:$0xff]
        %v314 = vld [vmem:[%s262 + $0x28] sm:$0xff]
        %v315 = vld [vmem:[%s262 + $0x30] sm:$0xff]
        %v316 = vld [vmem:[%s262 + $0x38] sm:$0xff]
        %v317 = vld [vmem:[%s262 + $0x40] sm:$0xff]
        %v318 = vld [vmem:[%s262 + $0x48] sm:$0xff]
        %v319 = vld [vmem:[%s262 + $0x50] sm:$0xff]
        %v320 = vld [vmem:[%s262 + $0x58] sm:$0xff]
        %v321 = vld [vmem:[%s262 + $0x60] sm:$0xff]
        %v322 = vld [vmem:[%s262 + $0x68] sm:$0xff]
        %v323 = vld [vmem:[%s262 + $0x70] sm:$0xff]
        %v324 = vld [vmem:[%s262 + $0x78] sm:$0xff]
        %v325 = vld [vmem:[%s262 + $0x80] sm:$0xff]
        %v326 = vld [vmem:[%s262 + $0x88] sm:$0xff]
        %v327 = vld [vmem:[%s262 + $0x90] sm:$0xff]
        %v328 = vld [vmem:[%s262 + $0x98] sm:$0xff]
        %v329 = vld [vmem:[%s262 + $0xa0] sm:$0xff]
        %v330 = vld [vmem:[%s262 + $0xa8] sm:$0xff]
        %v331 = vld [vmem:[%s262 + $0xb0] sm:$0xff]
        %v332 = vld [vmem:[%s262 + $0xb8] sm:$0xff]
        %v333 = vld [vmem:[%s262 + $0xc0] sm:$0xff]
        %v334 = vld [vmem:[%s262 + $0xc8] sm:$0xff]
        %v335 = vld [vmem:[%s262 + $0xd0] sm:$0xff]
        %v336 = vld [vmem:[%s262 + $0xd8] sm:$0xff]
        %v337 = vld [vmem:[%s262 + $0xe0] sm:$0xff]
        %v338 = vld [vmem:[%s262 + $0xe8] sm:$0xff]
        %v339 = vld [vmem:[%s262 + $0xf0] sm:$0xff]
        %v340 = vld [vmem:[%s262 + $0xf8] sm:$0xff]
        %v341 = vld [vmem:[%s301] sm:$0xf]
        %v343 = vlaneseq
        %v344 = vshrl.u32 %v343, 7
        %v345 = vsub.s32 0, %v344
        %v346 = vrot.slane %v341, %v345
        %v347 = vlaneseq
        %v348 = vshrl.u32 %v347, 7
        %v349 = vsub.s32 1, %v348
        %v350 = vrot.slane %v341, %v349
        %v351 = vlaneseq
        %v352 = vshrl.u32 %v351, 7
        %v353 = vsub.s32 2, %v352
        %v354 = vrot.slane %v341, %v353
        %v355 = vlaneseq
        %v356 = vshrl.u32 %v355, 7
        %v357 = vsub.s32 3, %v356
        %v358 = vrot.slane %v341, %v357
        %v395 = vunpack.c.l.b16 %v309
        %v396 = vunpack.c.h.b16 %v309
        %v397 = vunpack.c.l.b16 %v310
        %v398 = vunpack.c.h.b16 %v310
        %v399 = vunpack.c.l.b16 %v311
        %v400 = vunpack.c.h.b16 %v311
        %v401 = vunpack.c.l.b16 %v312
        %v402 = vunpack.c.h.b16 %v312
        %v403 = vunpack.c.l.b16 %v313
        %v404 = vunpack.c.h.b16 %v313
        %v405 = vunpack.c.l.b16 %v314
        %v406 = vunpack.c.h.b16 %v314
        %v407 = vunpack.c.l.b16 %v315
        %v408 = vunpack.c.h.b16 %v315
        %v409 = vunpack.c.l.b16 %v316
        %v410 = vunpack.c.h.b16 %v316
        %v411 = vunpack.c.l.b16 %v317
        %v412 = vunpack.c.h.b16 %v317
        %v413 = vunpack.c.l.b16 %v318
        %v414 = vunpack.c.h.b16 %v318
        %v415 = vunpack.c.l.b16 %v319
        %v416 = vunpack.c.h.b16 %v319
        %v417 = vunpack.c.l.b16 %v320
        %v418 = vunpack.c.h.b16 %v320
        %v419 = vunpack.c.l.b16 %v321
        %v420 = vunpack.c.h.b16 %v321
        %v421 = vunpack.c.l.b16 %v322
        %v422 = vunpack.c.h.b16 %v322
        %v423 = vunpack.c.l.b16 %v323
        %v424 = vunpack.c.h.b16 %v323
        %v425 = vunpack.c.l.b16 %v324
        %v426 = vunpack.c.h.b16 %v324
        %v427 = vunpack.c.l.b16 %v325
        %v428 = vunpack.c.h.b16 %v325
        %v429 = vunpack.c.l.b16 %v326
        %v430 = vunpack.c.h.b16 %v326
        %v431 = vunpack.c.l.b16 %v327
        %v432 = vunpack.c.h.b16 %v327
        %v433 = vunpack.c.l.b16 %v328
        %v434 = vunpack.c.h.b16 %v328
        %v435 = vunpack.c.l.b16 %v329
        %v436 = vunpack.c.h.b16 %v329
        %v437 = vunpack.c.l.b16 %v330
        %v438 = vunpack.c.h.b16 %v330
        %v439 = vunpack.c.l.b16 %v331
        %v440 = vunpack.c.h.b16 %v331
        %v441 = vunpack.c.l.b16 %v332
        %v442 = vunpack.c.h.b16 %v332
        %v443 = vunpack.c.l.b16 %v333
        %v444 = vunpack.c.h.b16 %v333
        %v445 = vunpack.c.l.b16 %v334
        %v446 = vunpack.c.h.b16 %v334
        %v447 = vunpack.c.l.b16 %v335
        %v448 = vunpack.c.h.b16 %v335
        %v449 = vunpack.c.l.b16 %v336
        %v450 = vunpack.c.h.b16 %v336
        %v451 = vunpack.c.l.b16 %v337
        %v452 = vunpack.c.h.b16 %v337
        %v453 = vunpack.c.l.b16 %v338
        %v454 = vunpack.c.h.b16 %v338
        %v455 = vunpack.c.l.b16 %v339
        %v456 = vunpack.c.h.b16 %v339
        %v457 = vunpack.c.l.b16 %v340
        %v458 = vunpack.c.h.b16 %v340
        %v459 = vpack.c.b16 %v399, %v395
        %v460 = vpack.c.b16 %v400, %v396
        %v461 = vpack.c.b16 %v401, %v397
        %v462 = vpack.c.b16 %v402, %v398
        %v463 = vpack.c.b16 %v407, %v403
        %v464 = vpack.c.b16 %v408, %v404
        %v465 = vpack.c.b16 %v409, %v405
        %v466 = vpack.c.b16 %v410, %v406
        %v467 = vpack.c.b16 %v415, %v411
        %v468 = vpack.c.b16 %v416, %v412
        %v469 = vpack.c.b16 %v417, %v413
        %v470 = vpack.c.b16 %v418, %v414
        %v471 = vpack.c.b16 %v423, %v419
        %v472 = vpack.c.b16 %v424, %v420
        %v473 = vpack.c.b16 %v425, %v421
        %v474 = vpack.c.b16 %v426, %v422
        %v475 = vpack.c.b16 %v431, %v427
        %v476 = vpack.c.b16 %v432, %v428
        %v477 = vpack.c.b16 %v433, %v429
        %v478 = vpack.c.b16 %v434, %v430
        %v479 = vpack.c.b16 %v439, %v435
        %v480 = vpack.c.b16 %v440, %v436
        %v481 = vpack.c.b16 %v441, %v437
        %v482 = vpack.c.b16 %v442, %v438
        %v483 = vpack.c.b16 %v447, %v443
        %v484 = vpack.c.b16 %v448, %v444
        %v485 = vpack.c.b16 %v449, %v445
        %v486 = vpack.c.b16 %v450, %v446
        %v487 = vpack.c.b16 %v455, %v451
        %v488 = vpack.c.b16 %v456, %v452
        %v489 = vpack.c.b16 %v457, %v453
        %v490 = vpack.c.b16 %v458, %v454
        %523 = vmatprep.subr.bf16.mxu0 %v460
        %524 = vmatpush1.bf16.msra.mxu0 %v459
        %525 = vmatprep.subr.bf16.mxu0 %v464
        %526 = vmatpush1.bf16.msra.mxu0 %v463
        %527 = vmatprep.subr.bf16.mxu0 %v468
        %528 = vmatpush1.bf16.msra.mxu0 %v467
        %529 = vmatprep.subr.bf16.mxu0 %v472
        %530 = vmatpush1.bf16.msra.mxu0 %v471
        %531 = vmatprep.subr.bf16.mxu0 %v476
        %532 = vmatpush1.bf16.msra.mxu0 %v475
        %533 = vmatprep.subr.bf16.mxu0 %v480
        %534 = vmatpush1.bf16.msra.mxu0 %v479
        %535 = vmatprep.subr.bf16.mxu0 %v484
        %536 = vmatpush1.bf16.msra.mxu0 %v483
        %537 = vmatprep.subr.bf16.mxu0 %v488
        %538 = vmatpush1.bf16.msra.mxu0 %v487
        %539 = vmatprep.subr.bf16.mxu0 0
        %540 = vmatpush1.bf16.msra.mxu0 0
        %541 = vmatprep.subr.bf16.mxu0 0
        %542 = vmatpush1.bf16.msra.mxu0 0
        %543 = vmatprep.subr.bf16.mxu0 0
        %544 = vmatpush1.bf16.msra.mxu0 0
        %545 = vmatprep.subr.bf16.mxu0 0
        %546 = vmatpush1.bf16.msra.mxu0 0
        %547 = vmatprep.subr.bf16.mxu0 0
        %548 = vmatpush1.bf16.msra.mxu0 0
        %549 = vmatprep.subr.bf16.mxu0 0
        %550 = vmatpush1.bf16.msra.mxu0 0
        %551 = vmatprep.subr.bf16.mxu0 0
        %552 = vmatpush1.bf16.msra.mxu0 0
        %553 = vmatprep.subr.bf16.mxu0 0
        %554 = vmatpush1.bf16.msra.mxu0 0
        %555 = vmatprep.mubr.bf16.mxu0 0
        %556 = vmatmul.mubr.bf16.gmra.mrb[0].mxu0 %v308
        %v557 = vpop.f32.mrb[0].mxu0
        %v558 = vadd.f32 %v346, %v557
        %v559 = vpop.f32.mrb[0].mxu0
        %v560 = vadd.f32 %v350, %v559
        %v561 = vpop.f32.mrb[0].mxu0
        %v562 = vadd.f32 %v346, %v561
        %v563 = vpop.f32.mrb[0].mxu0
        %v564 = vadd.f32 %v350, %v563
        %565 = vdwg.mxu0
        %566 = vmatprep.subr.bf16.mxu0 %v462
        %567 = vmatpush1.bf16.msra.mxu0 %v461
        %568 = vmatprep.subr.bf16.mxu0 %v466
        %569 = vmatpush1.bf16.msra.mxu0 %v465
        %570 = vmatprep.subr.bf16.mxu0 %v470
        %571 = vmatpush1.bf16.msra.mxu0 %v469
        %572 = vmatprep.subr.bf16.mxu0 %v474
        %573 = vmatpush1.bf16.msra.mxu0 %v473
        %574 = vmatprep.subr.bf16.mxu0 %v478
        %575 = vmatpush1.bf16.msra.mxu0 %v477
        %576 = vmatprep.subr.bf16.mxu0 %v482
        %577 = vmatpush1.bf16.msra.mxu0 %v481
        %578 = vmatprep.subr.bf16.mxu0 %v486
        %579 = vmatpush1.bf16.msra.mxu0 %v485
        %580 = vmatprep.subr.bf16.mxu0 %v490
        %581 = vmatpush1.bf16.msra.mxu0 %v489
        %582 = vmatprep.subr.bf16.mxu0 0
        %583 = vmatpush1.bf16.msra.mxu0 0
        %584 = vmatprep.subr.bf16.mxu0 0
        %585 = vmatpush1.bf16.msra.mxu0 0
        %586 = vmatprep.subr.bf16.mxu0 0
        %587 = vmatpush1.bf16.msra.mxu0 0
        %588 = vmatprep.subr.bf16.mxu0 0
        %589 = vmatpush1.bf16.msra.mxu0 0
        %590 = vmatprep.subr.bf16.mxu0 0
        %591 = vmatpush1.bf16.msra.mxu0 0
        %592 = vmatprep.subr.bf16.mxu0 0
        %593 = vmatpush1.bf16.msra.mxu0 0
        %594 = vmatprep.subr.bf16.mxu0 0
        %595 = vmatpush1.bf16.msra.mxu0 0
        %596 = vmatprep.subr.bf16.mxu0 0
        %597 = vmatpush1.bf16.msra.mxu0 0
        %598 = vmatprep.mubr.bf16.mxu0 0
        %599 = vmatmul.mubr.bf16.gmra.mrb[0].mxu0 %v308
        %v600 = vpop.f32.mrb[0].mxu0
        %v601 = vadd.f32 %v354, %v600
        %v602 = vpop.f32.mrb[0].mxu0
        %v603 = vadd.f32 %v358, %v602
        %v604 = vpop.f32.mrb[0].mxu0
        %v605 = vadd.f32 %v354, %v604
        %v606 = vpop.f32.mrb[0].mxu0
        %v607 = vadd.f32 %v358, %v606
        %608 = vdwg.mxu0
        %609 = vst [vmem:[%s290] sm:$0xff] %v558
        %610 = vst [vmem:[%s290 + $0x8] sm:$0xff] %v560
        %611 = vst [vmem:[%s290 + $0x10] sm:$0xff] %v601
        %612 = vst [vmem:[%s290 + $0x18] sm:$0xff] %v603
        %613 = vst [vmem:[%s290 + $0x20] sm:$0xff] %v562
        %614 = vst [vmem:[%s290 + $0x28] sm:$0xff] %v564
        %615 = vst [vmem:[%s290 + $0x30] sm:$0xff] %v605
        %616 = vst [vmem:[%s290 + $0x38] sm:$0xff] %v607
        %s617 = sand.u32 %s114, 1
        %s618 = sand.u32 %s114, 1
        %s619 = smul.addr %s618, 64
        %s620 = scalar_lea.vmem [#allocation3], %s619
        // Predicated region
        $region56: #{transformer_forward.39} parent=50 // pred_check
          %p621 = pneg %p124
        $region57: #{transformer_forward.39} parent=50 // pred_check_branch
          %623 = sbr.rel (%p621) target = $region59
        $region58: #{transformer_forward.39} parent=50 // pred_region
          %s624 = smul.u32 2, %s18
          %s625 = smul.u32 4, %s19
          %s626 = smul.addr %s624, 8
          %s627 = sadd.s32 %s625, %s626
          %s628 = smul.addr %s627, 8
          %s629 = scalar_lea.vmem %s3, %s628
          // Predicated region
          $region60: #{transformer_forward.39} parent=58 // pred_check
            _
          $region61: #{transformer_forward.39} parent=58 // pred_check_branch
            %631 = sbr.rel (0) target = $region63
          $region62: #{transformer_forward.39} parent=58 // pred_region
            // Predicated region
            $region64: #{transformer_forward.39} parent=62 // pred_check
              _
            $region65: #{transformer_forward.39} parent=62 // pred_check_branch
              %633 = sbr.rel (0) target = $region67
            $region66: #{transformer_forward.39} parent=62 // pred_region
              loop: start=0, step=1, limit=1
              $region68: #{transformer_forward.39} parent=66 // loop_pre_header
                _
              $region69: #{transformer_forward.39} parent=66 // loop_header
                %s635 = sphi 0, %s639
                %p636 = scmp.ge.s32.totalorder %s635, 1
                %s640 = sphi %s620, %s620
                %s641 = sphi %s629, %s629
              $region70: #{transformer_forward.39} parent=66 // loop_header_branch
                %638 = sbr.rel (%p636) target = $region74
              $region71: #{transformer_forward.39} parent=66 // loop_body
                %v642 = vld [vmem:[%s640] sm:$0xff]
                %643 = vst [vmem:[%s641] sm:$0xff] %v642
                %v644 = vld [vmem:[%s640 + $0x8] sm:$0xff]
                %645 = vst [vmem:[%s641 + $0x8] sm:$0xff] %v644
                %v646 = vld [vmem:[%s640 + $0x10] sm:$0xff]
                %647 = vst [vmem:[%s641 + $0x10] sm:$0xff] %v646
                %v648 = vld [vmem:[%s640 + $0x18] sm:$0xff]
                %649 = vst [vmem:[%s641 + $0x18] sm:$0xff] %v648
                %v650 = vld [vmem:[%s640 + $0x20] sm:$0xff]
                %651 = vst [vmem:[%s641 + $0x40] sm:$0xff] %v650
                %v652 = vld [vmem:[%s640 + $0x28] sm:$0xff]
                %653 = vst [vmem:[%s641 + $0x48] sm:$0xff] %v652
                %v654 = vld [vmem:[%s640 + $0x30] sm:$0xff]
                %655 = vst [vmem:[%s641 + $0x50] sm:$0xff] %v654
                %v656 = vld [vmem:[%s640 + $0x38] sm:$0xff]
                %657 = vst [vmem:[%s641 + $0x58] sm:$0xff] %v656
              $region72: #{transformer_forward.39} parent=66 // loop_footer
                %s639 = sadd.s32 1, %s635
              $region73: #{transformer_forward.39} parent=66 // loop_footer_branch
                %634 = sbr.rel target = $region69
              $region74: #{transformer_forward.39} parent=66 // loop_exit
                _
            $region67: #{transformer_forward.39} parent=62 // pred_fallthru
              _
            // Predicated region
            $region75: #{transformer_forward.39} parent=62 // pred_check
              _
            $region76: #{transformer_forward.39} parent=62 // pred_check_branch
              %659 = sbr.rel target = $region78
            $region77: #{transformer_forward.39} parent=62 // pred_region
              _
            $region78: #{transformer_forward.39} parent=62 // pred_fallthru
              _
          $region63: #{transformer_forward.39} parent=58 // pred_fallthru
            _
          %660 = vnop
        $region59: #{transformer_forward.39} parent=50 // pred_fallthru
          _
      $region51: #{transformer_forward.39} parent=5 // pred_fallthru
        _
      %p661 = scmp.le.s32.totalorder 2, %s9
      // Predicated region
      $region79: #{transformer_forward.39} parent=5 // pred_check
        %p662 = pneg %p661
      $region80: #{transformer_forward.39} parent=5 // pred_check_branch
        %664 = sbr.rel (%p662) target = $region82
      $region81: #{transformer_forward.39} parent=5 // pred_region
        %s665 = ssub.s32 %s9, 2
        // Predicated region
        $region83: #{transformer_forward.39} parent=81 // pred_check
          %p666 = pneg %p130
        $region84: #{transformer_forward.39} parent=81 // pred_check_branch
          %668 = sbr.rel (%p666) target = $region86
        $region85: #{transformer_forward.39} parent=81 // pred_region
          %s669 = sand.u32 %s115, 1
          %s670 = sand.u32 %s115, 1
          %s671 = smul.addr %s670, 64
          %s672 = scalar_lea.vmem [#allocation3], %s671
        $region86: #{transformer_forward.39} parent=81 // pred_fallthru
          _
      $region82: #{transformer_forward.39} parent=5 // pred_fallthru
        _
    $region6: #{transformer_forward.39} parent=1 // loop_footer
      %s13 = sadd.s32 1, %s9
    $region7: #{transformer_forward.39} parent=1 // loop_footer_branch
      %8 = sbr.rel target = $region3
    $region8: #{transformer_forward.39} parent=1 // loop_exit
      _

// kernel: transformer_forward.29
$region0: #{transformer_forward.29}
  #allocation0 [shape = 'u32[]', space=smem, size = 0x4, offset = 0x4, fixed_abs, tag = 'smem constant byte address 0x4 - core index']
  #allocation1 [shape = 'u32[144,128]{1,0:T(1,128)}', space=vmem, size = 0x12000, scoped, tag = 'internal scratch']
  %s0 = inlined_call_operand.vmem [shape: f32[16,128], index: 0, kind: input, shape index: {}]
  %s1 = inlined_call_operand.vmem [shape: f32[1,128], index: 1, kind: input, shape index: {}]
  %s2 = inlined_call_operand.vmem [shape: f32[1,128], index: 2, kind: input, shape index: {}]
  %s3 = inlined_call_operand.vmem [shape: bf16[128,128], index: 3, kind: input, shape index: {}]
  %s4 = inlined_call_operand.vmem [shape: f32[1,128], index: 4, kind: input, shape index: {}]
  %s5 = inlined_call_operand.vmem [shape: bf16[128,128], index: 5, kind: input, shape index: {}]
  %s6 = inlined_call_operand.vmem [shape: f32[1,128], index: 6, kind: input, shape index: {}]
  %s7 = inlined_call_operand.vmem [shape: f32[16,128], index: 7, kind: output, shape index: {}]
  %s8 = sld [smem:[#allocation0]]
  $region38: #{transformer_forward.29} parent=0
    _
  %s10 = ssub.s32 1, %s8
  %s11 = scalar_select 0, %s10, %s8
  // Predicated region
  $region2: #{transformer_forward.29} parent=0 // pred_check
    _
  $region3: #{transformer_forward.29} parent=0 // pred_check_branch
    %13 = sbr.rel (0) target = $region5
  $region4: #{transformer_forward.29} parent=0 // pred_region
    _
  $region5: #{transformer_forward.29} parent=0 // pred_fallthru
    _
  // Predicated region
  $region6: #{transformer_forward.29} parent=0 // pred_check
    _
  $region7: #{transformer_forward.29} parent=0 // pred_check_branch
    %15 = sbr.rel (0) target = $region9
  $region8: #{transformer_forward.29} parent=0 // pred_region
    _
  $region9: #{transformer_forward.29} parent=0 // pred_fallthru
    _
  // Predicated region
  $region10: #{transformer_forward.29} parent=0 // pred_check
    _
  $region11: #{transformer_forward.29} parent=0 // pred_check_branch
    %17 = sbr.rel (0) target = $region13
  $region12: #{transformer_forward.29} parent=0 // pred_region
    _
  $region13: #{transformer_forward.29} parent=0 // pred_fallthru
    _
  // Predicated region
  $region14: #{transformer_forward.29} parent=0 // pred_check
    _
  $region15: #{transformer_forward.29} parent=0 // pred_check_branch
    %19 = sbr.rel (0) target = $region17
  $region16: #{transformer_forward.29} parent=0 // pred_region
    _
  $region17: #{transformer_forward.29} parent=0 // pred_fallthru
    _
  // Predicated region
  $region18: #{transformer_forward.29} parent=0 // pred_check
    _
  $region19: #{transformer_forward.29} parent=0 // pred_check_branch
    %21 = sbr.rel (0) target = $region21
  $region20: #{transformer_forward.29} parent=0 // pred_region
    _
  $region21: #{transformer_forward.29} parent=0 // pred_fallthru
    _
  // Predicated region
  $region22: #{transformer_forward.29} parent=0 // pred_check
    _
  $region23: #{transformer_forward.29} parent=0 // pred_check_branch
    %23 = sbr.rel (0) target = $region25
  $region24: #{transformer_forward.29} parent=0 // pred_region
    _
  $region25: #{transformer_forward.29} parent=0 // pred_fallthru
    _
  // Predicated region
  $region26: #{transformer_forward.29} parent=0 // pred_check
    _
  $region27: #{transformer_forward.29} parent=0 // pred_check_branch
    %25 = sbr.rel (0) target = $region29
  $region28: #{transformer_forward.29} parent=0 // pred_region
    _
  $region29: #{transformer_forward.29} parent=0 // pred_fallthru
    _
  %v27 = vld [vmem:[%s0] sm:$0xff]
  %v28 = vld [vmem:[%s0 + $0x8] sm:$0xff]
  %v29 = vlaneseq
  %v30 = vand.u32 %v29, 127
  %vm31 = vcmp.lt.s32.totalorder %v30, 32
  %v32 = vsel %vm31, %v27, 0.0
  %v33 = vsel %vm31, %v28, 0.0
  %34 = vadd.xlane.f32.xlu0 %v32
  %v35 = vpop.xlane.xlu0 %34
  %36 = vadd.xlane.f32.xlu0 %v33
  %v37 = vpop.xlane.xlu0 %36
  %v38 = vmul.f32 %v35, 0.03125
  %v39 = vmul.f32 %v37, 0.03125
  %v40 = vsub.f32 %v27, %v38
  %v41 = vsub.f32 %v28, %v39
  %v42 = vsel %vm31, %v40, 0.0
  %v43 = vsel %vm31, %v41, 0.0
  %v44 = vmul.f32 %v42, %v42
  %v45 = vmul.f32 %v43, %v43
  %46 = vadd.xlane.f32.xlu0 %v44
  %v47 = vpop.xlane.xlu0 %46
  %48 = vadd.xlane.f32.xlu0 %v45
  %v49 = vpop.xlane.xlu0 %48
  %v50 = vmul.f32 %v47, 0.032258064
  %v51 = vmul.f32 %v49, 0.032258064
  %v52 = vrsqrt.pop %v50
  %v53 = vmul.f32 %v50, %v52
  %vm54 = vcmp.eq.f32.partialorder %v50, inf
  %v55 = vsel %vm54, %v50, %v53
  %vm56 = vcmp.eq.f32.partialorder %v50, 0.0
  %v57 = vand.u32 %v50, 2147483648
  %v58 = vsel %vm56, %v57, %v55
  %v59 = vrsqrt.pop %v51
  %v60 = vmul.f32 %v51, %v59
  %vm61 = vcmp.eq.f32.partialorder %v51, inf
  %v62 = vsel %vm61, %v51, %v60
  %vm63 = vcmp.eq.f32.partialorder %v51, 0.0
  %v64 = vand.u32 %v51, 2147483648
  %v65 = vsel %vm63, %v64, %v62
  %v66 = vadd.f32 %v58, 1e-06
  %v67 = vadd.f32 %v65, 1e-06
  %v68 = vrcp.pop %v66
  %v69 = vrcp.pop %v67
  %v70 = vld [vmem:[%s1] sm:$0x1]
  %v72 = vlaneseq
  %v73 = vshrl.u32 %v72, 7
  %v74 = vsub.s32 0, %v73
  %v75 = vrot.slane %v70, %v74
  %v77 = vmul.f32 %v75, %v40
  %v78 = vmul.f32 %v75, %v41
  %v79 = vmul.f32 %v77, %v68
  %v80 = vmul.f32 %v78, %v69
  %v81 = vld [vmem:[%s2] sm:$0x1]
  %v83 = vlaneseq
  %v84 = vshrl.u32 %v83, 7
  %v85 = vsub.s32 0, %v84
  %v86 = vrot.slane %v81, %v85
  %v88 = vadd.f32 %v79, %v86
  %v89 = vadd.f32 %v80, %v86
  %v90 = vpack.c.bf16 %v89, %v88
  %v91 = vld [vmem:[%s3] sm:$0xf]
  %v92 = vld [vmem:[%s3 + $0x4] sm:$0xf]
  %v93 = vld [vmem:[%s3 + $0x8] sm:$0xf]
  %v94 = vld [vmem:[%s3 + $0xc] sm:$0xf]
  %v95 = vld [vmem:[%s3 + $0x10] sm:$0xf]
  %v96 = vld [vmem:[%s3 + $0x14] sm:$0xf]
  %v97 = vld [vmem:[%s3 + $0x18] sm:$0xf]
  %v98 = vld [vmem:[%s3 + $0x1c] sm:$0xf]
  %v99 = vld [vmem:[%s3 + $0x20] sm:$0xf]
  %v100 = vld [vmem:[%s3 + $0x24] sm:$0xf]
  %v101 = vld [vmem:[%s3 + $0x28] sm:$0xf]
  %v102 = vld [vmem:[%s3 + $0x2c] sm:$0xf]
  %v103 = vld [vmem:[%s3 + $0x30] sm:$0xf]
  %v104 = vld [vmem:[%s3 + $0x34] sm:$0xf]
  %v105 = vld [vmem:[%s3 + $0x38] sm:$0xf]
  %v106 = vld [vmem:[%s3 + $0x3c] sm:$0xf]
  %v107 = vld [vmem:[%s4] sm:$0x1]
  %v109 = vlaneseq
  %v110 = vshrl.u32 %v109, 7
  %v111 = vsub.s32 0, %v110
  %v112 = vrot.slane %v107, %v111
  %v130 = vunpack.c.l.b16 %v91
  %v131 = vunpack.c.l.b16 %v92
  %v132 = vunpack.c.l.b16 %v93
  %v133 = vunpack.c.l.b16 %v94
  %v134 = vunpack.c.l.b16 %v95
  %v135 = vunpack.c.l.b16 %v96
  %v136 = vunpack.c.l.b16 %v97
  %v137 = vunpack.c.l.b16 %v98
  %v138 = vunpack.c.l.b16 %v99
  %v139 = vunpack.c.l.b16 %v100
  %v140 = vunpack.c.l.b16 %v101
  %v141 = vunpack.c.l.b16 %v102
  %v142 = vunpack.c.l.b16 %v103
  %v143 = vunpack.c.l.b16 %v104
  %v144 = vunpack.c.l.b16 %v105
  %v145 = vunpack.c.l.b16 %v106
  %v146 = vpack.c.b16 %v131, %v130
  %v147 = vpack.c.b16 %v133, %v132
  %v148 = vpack.c.b16 %v135, %v134
  %v149 = vpack.c.b16 %v137, %v136
  %v150 = vpack.c.b16 %v139, %v138
  %v151 = vpack.c.b16 %v141, %v140
  %v152 = vpack.c.b16 %v143, %v142
  %v153 = vpack.c.b16 %v145, %v144
  %162 = vmatprep.subr.bf16.mxu0 0
  %163 = vmatpush1.bf16.msra.mxu0 %v146
  %164 = vmatprep.subr.bf16.mxu0 0
  %165 = vmatpush1.bf16.msra.mxu0 %v147
  %166 = vmatprep.subr.bf16.mxu0 0
  %167 = vmatpush1.bf16.msra.mxu0 %v148
  %168 = vmatprep.subr.bf16.mxu0 0
  %169 = vmatpush1.bf16.msra.mxu0 %v149
  %170 = vmatprep.subr.bf16.mxu0 0
  %171 = vmatpush1.bf16.msra.mxu0 %v150
  %172 = vmatprep.subr.bf16.mxu0 0
  %173 = vmatpush1.bf16.msra.mxu0 %v151
  %174 = vmatprep.subr.bf16.mxu0 0
  %175 = vmatpush1.bf16.msra.mxu0 %v152
  %176 = vmatprep.subr.bf16.mxu0 0
  %177 = vmatpush1.bf16.msra.mxu0 %v153
  %178 = vmatprep.subr.bf16.mxu0 0
  %179 = vmatpush1.bf16.msra.mxu0 0
  %180 = vmatprep.subr.bf16.mxu0 0
  %181 = vmatpush1.bf16.msra.mxu0 0
  %182 = vmatprep.subr.bf16.mxu0 0
  %183 = vmatpush1.bf16.msra.mxu0 0
  %184 = vmatprep.subr.bf16.mxu0 0
  %185 = vmatpush1.bf16.msra.mxu0 0
  %186 = vmatprep.subr.bf16.mxu0 0
  %187 = vmatpush1.bf16.msra.mxu0 0
  %188 = vmatprep.subr.bf16.mxu0 0
  %189 = vmatpush1.bf16.msra.mxu0 0
  %190 = vmatprep.subr.bf16.mxu0 0
  %191 = vmatpush1.bf16.msra.mxu0 0
  %192 = vmatprep.subr.bf16.mxu0 0
  %193 = vmatpush1.bf16.msra.mxu0 0
  %194 = vmatprep.mubr.bf16.mxu0 0
  %195 = vmatmul.mubr.bf16.gmra.mrb[0].mxu0 %v90
  %v196 = vpop.f32.mrb[0].mxu0
  %v197 = vadd.f32 %v112, %v196
  %v198 = vpop.f32.mrb[0].mxu0
  %v199 = vpop.f32.mrb[0].mxu0
  %v200 = vadd.f32 %v112, %v199
  %v201 = vpop.f32.mrb[0].mxu0
  %202 = vdwg.mxu0
  %v203 = vmax.f32 %v197, 0.0
  %v204 = vmax.f32 %v200, 0.0
  %v205 = vpack.c.bf16 %v204, %v203
  %v206 = vld [vmem:[%s5] sm:$0xf]
  %v207 = vld [vmem:[%s5 + $0x4] sm:$0xf]
  %v208 = vld [vmem:[%s5 + $0x8] sm:$0xf]
  %v209 = vld [vmem:[%s5 + $0xc] sm:$0xf]
  %v210 = vld [vmem:[%s5 + $0x10] sm:$0xf]
  %v211 = vld [vmem:[%s5 + $0x14] sm:$0xf]
  %v212 = vld [vmem:[%s5 + $0x18] sm:$0xf]
  %v213 = vld [vmem:[%s5 + $0x1c] sm:$0xf]
  %v214 = vld [vmem:[%s5 + $0x20] sm:$0xf]
  %v215 = vld [vmem:[%s5 + $0x24] sm:$0xf]
  %v216 = vld [vmem:[%s5 + $0x28] sm:$0xf]
  %v217 = vld [vmem:[%s5 + $0x2c] sm:$0xf]
  %v218 = vld [vmem:[%s5 + $0x30] sm:$0xf]
  %v219 = vld [vmem:[%s5 + $0x34] sm:$0xf]
  %v220 = vld [vmem:[%s5 + $0x38] sm:$0xf]
  %v221 = vld [vmem:[%s5 + $0x3c] sm:$0xf]
  %v222 = vld [vmem:[%s6] sm:$0x1]
  %v224 = vlaneseq
  %v225 = vshrl.u32 %v224, 7
  %v226 = vsub.s32 0, %v225
  %v227 = vrot.slane %v222, %v226
  %v245 = vunpack.c.l.b16 %v206
  %v246 = vunpack.c.l.b16 %v207
  %v247 = vunpack.c.l.b16 %v208
  %v248 = vunpack.c.l.b16 %v209
  %v249 = vunpack.c.l.b16 %v210
  %v250 = vunpack.c.l.b16 %v211
  %v251 = vunpack.c.l.b16 %v212
  %v252 = vunpack.c.l.b16 %v213
  %v253 = vunpack.c.l.b16 %v214
  %v254 = vunpack.c.l.b16 %v215
  %v255 = vunpack.c.l.b16 %v216
  %v256 = vunpack.c.l.b16 %v217
  %v257 = vunpack.c.l.b16 %v218
  %v258 = vunpack.c.l.b16 %v219
  %v259 = vunpack.c.l.b16 %v220
  %v260 = vunpack.c.l.b16 %v221
  %v261 = vpack.c.b16 %v246, %v245
  %v262 = vpack.c.b16 %v248, %v247
  %v263 = vpack.c.b16 %v250, %v249
  %v264 = vpack.c.b16 %v252, %v251
  %v265 = vpack.c.b16 %v254, %v253
  %v266 = vpack.c.b16 %v256, %v255
  %v267 = vpack.c.b16 %v258, %v257
  %v268 = vpack.c.b16 %v260, %v259
  %277 = vmatprep.subr.bf16.mxu0 0
  %278 = vmatpush1.bf16.msra.mxu0 %v261
  %279 = vmatprep.subr.bf16.mxu0 0
  %280 = vmatpush1.bf16.msra.mxu0 %v262
  %281 = vmatprep.subr.bf16.mxu0 0
  %282 = vmatpush1.bf16.msra.mxu0 %v263
  %283 = vmatprep.subr.bf16.mxu0 0
  %284 = vmatpush1.bf16.msra.mxu0 %v264
  %285 = vmatprep.subr.bf16.mxu0 0
  %286 = vmatpush1.bf16.msra.mxu0 %v265
  %287 = vmatprep.subr.bf16.mxu0 0
  %288 = vmatpush1.bf16.msra.mxu0 %v266
  %289 = vmatprep.subr.bf16.mxu0 0
  %290 = vmatpush1.bf16.msra.mxu0 %v267
  %291 = vmatprep.subr.bf16.mxu0 0
  %292 = vmatpush1.bf16.msra.mxu0 %v268
  %293 = vmatprep.subr.bf16.mxu0 0
  %294 = vmatpush1.bf16.msra.mxu0 0
  %295 = vmatprep.subr.bf16.mxu0 0
  %296 = vmatpush1.bf16.msra.mxu0 0
  %297 = vmatprep.subr.bf16.mxu0 0
  %298 = vmatpush1.bf16.msra.mxu0 0
  %299 = vmatprep.subr.bf16.mxu0 0
  %300 = vmatpush1.bf16.msra.mxu0 0
  %301 = vmatprep.subr.bf16.mxu0 0
  %302 = vmatpush1.bf16.msra.mxu0 0
  %303 = vmatprep.subr.bf16.mxu0 0
  %304 = vmatpush1.bf16.msra.mxu0 0
  %305 = vmatprep.subr.bf16.mxu0 0
  %306 = vmatpush1.bf16.msra.mxu0 0
  %307 = vmatprep.subr.bf16.mxu0 0
  %308 = vmatpush1.bf16.msra.mxu0 0
  %309 = vmatprep.mubr.bf16.mxu0 0
  %310 = vmatmul.mubr.bf16.gmra.mrb[0].mxu0 %v205
  %v311 = vpop.f32.mrb[0].mxu0
  %v312 = vadd.f32 %v227, %v311
  %v313 = vpop.f32.mrb[0].mxu0
  %v314 = vpop.f32.mrb[0].mxu0
  %v315 = vadd.f32 %v227, %v314
  %v316 = vpop.f32.mrb[0].mxu0
  %317 = vdwg.mxu0
  %v318 = vadd.f32 %v27, %v312
  %v319 = vadd.f32 %v28, %v315
  %320 = vst [vmem:[%s7] sm:$0xff] %v318
  %321 = vst [vmem:[%s7 + $0x8] sm:$0xff] %v319
  // Predicated region
  $region30: #{transformer_forward.29} parent=0 // pred_check
    _
  $region31: #{transformer_forward.29} parent=0 // pred_check_branch
    %323 = sbr.rel (0) target = $region33
  $region32: #{transformer_forward.29} parent=0 // pred_region
    _
  $region33: #{transformer_forward.29} parent=0 // pred_fallthru
    _
  // Predicated region
  $region34: #{transformer_forward.29} parent=0 // pred_check
    _
  $region35: #{transformer_forward.29} parent=0 // pred_check_branch
    %325 = sbr.rel (0) target = $region37
  $region36: #{transformer_forward.29} parent=0 // pred_region
    _
  $region37: #{transformer_forward.29} parent=0 // pred_fallthru
    _

// kernel: transformer_forward.51
$region0: #{transformer_forward.51}
  #allocation0 [shape = 'u32[]', space=smem, size = 0x4, offset = 0x4, fixed_abs, tag = 'smem constant byte address 0x4 - core index']
  #allocation1 [shape = 'u32[144,128]{1,0:T(1,128)}', space=vmem, size = 0x12000, scoped, tag = 'internal scratch']
  %s0 = inlined_call_operand.vmem [shape: f32[16,128], index: 0, kind: input, shape index: {}]
  %s1 = inlined_call_operand.vmem [shape: f32[1,128], index: 1, kind: input, shape index: {}]
  %s2 = inlined_call_operand.vmem [shape: f32[1,128], index: 2, kind: input, shape index: {}]
  %s3 = inlined_call_operand.vmem [shape: bf16[128,128], index: 3, kind: input, shape index: {}]
  %s4 = inlined_call_operand.vmem [shape: f32[1,128], index: 4, kind: input, shape index: {}]
  %s5 = inlined_call_operand.hbm [shape: f32[16,128], index: 5, kind: output, shape index: {}]
  %s6 = sld [smem:[#allocation0]]
  $region30: #{transformer_forward.51} parent=0
    _
  %s8 = ssub.s32 1, %s6
  %s9 = scalar_select 0, %s8, %s6
  $region1: #{transformer_forward.51} parent=0
    #allocation2 [shape = 'u8[8192]{0}', space=vmem, size = 0x2000, scoped, tag = 'output window, operand 0, single buffered']
    #allocation3 [shape = 's32[1]{0}', space=sflag, size = 0x4, scoped, tag = 'scoped memory for transformer_forward.51']
    %10 = vsyncpa [#allocation3], 0
    // Predicated region
    $region2: #{transformer_forward.51} parent=1 // pred_check
      _
    $region3: #{transformer_forward.51} parent=1 // pred_check_branch
      %12 = sbr.rel (0) target = $region5
    $region4: #{transformer_forward.51} parent=1 // pred_region
      _
    $region5: #{transformer_forward.51} parent=1 // pred_fallthru
      _
    // Predicated region
    $region6: #{transformer_forward.51} parent=1 // pred_check
      _
    $region7: #{transformer_forward.51} parent=1 // pred_check_branch
      %14 = sbr.rel (0) target = $region9
    $region8: #{transformer_forward.51} parent=1 // pred_region
      _
    $region9: #{transformer_forward.51} parent=1 // pred_fallthru
      _
    // Predicated region
    $region10: #{transformer_forward.51} parent=1 // pred_check
      _
    $region11: #{transformer_forward.51} parent=1 // pred_check_branch
      %16 = sbr.rel (0) target = $region13
    $region12: #{transformer_forward.51} parent=1 // pred_region
      _
    $region13: #{transformer_forward.51} parent=1 // pred_fallthru
      _
    // Predicated region
    $region14: #{transformer_forward.51} parent=1 // pred_check
      _
    $region15: #{transformer_forward.51} parent=1 // pred_check_branch
      %18 = sbr.rel (0) target = $region17
    $region16: #{transformer_forward.51} parent=1 // pred_region
      _
    $region17: #{transformer_forward.51} parent=1 // pred_fallthru
      _
    // Predicated region
    $region18: #{transformer_forward.51} parent=1 // pred_check
      _
    $region19: #{transformer_forward.51} parent=1 // pred_check_branch
      %20 = sbr.rel (0) target = $region21
    $region20: #{transformer_forward.51} parent=1 // pred_region
      _
    $region21: #{transformer_forward.51} parent=1 // pred_fallthru
      _
    %v22 = vld [vmem:[%s0] sm:$0xff]
    %v23 = vld [vmem:[%s0 + $0x8] sm:$0xff]
    %v24 = vlaneseq
    %v25 = vand.u32 %v24, 127
    %vm26 = vcmp.lt.s32.totalorder %v25, 32
    %v27 = vsel %vm26, %v22, 0.0
    %v28 = vsel %vm26, %v23, 0.0
    %29 = vadd.xlane.f32.xlu0 %v27
    %v30 = vpop.xlane.xlu0 %29
    %31 = vadd.xlane.f32.xlu0 %v28
    %v32 = vpop.xlane.xlu0 %31
    %v33 = vmul.f32 %v30, 0.03125
    %v34 = vmul.f32 %v32, 0.03125
    %v35 = vsub.f32 %v22, %v33
    %v36 = vsub.f32 %v23, %v34
    %v37 = vsel %vm26, %v35, 0.0
    %v38 = vsel %vm26, %v36, 0.0
    %v39 = vmul.f32 %v37, %v37
    %v40 = vmul.f32 %v38, %v38
    %41 = vadd.xlane.f32.xlu0 %v39
    %v42 = vpop.xlane.xlu0 %41
    %43 = vadd.xlane.f32.xlu0 %v40
    %v44 = vpop.xlane.xlu0 %43
    %v45 = vmul.f32 %v42, 0.032258064
    %v46 = vmul.f32 %v44, 0.032258064
    %v47 = vrsqrt.pop %v45
    %v48 = vmul.f32 %v45, %v47
    %vm49 = vcmp.eq.f32.partialorder %v45, inf
    %v50 = vsel %vm49, %v45, %v48
    %vm51 = vcmp.eq.f32.partialorder %v45, 0.0
    %v52 = vand.u32 %v45, 2147483648
    %v53 = vsel %vm51, %v52, %v50
    %v54 = vrsqrt.pop %v46
    %v55 = vmul.f32 %v46, %v54
    %vm56 = vcmp.eq.f32.partialorder %v46, inf
    %v57 = vsel %vm56, %v46, %v55
    %vm58 = vcmp.eq.f32.partialorder %v46, 0.0
    %v59 = vand.u32 %v46, 2147483648
    %v60 = vsel %vm58, %v59, %v57
    %v61 = vadd.f32 %v53, 1e-06
    %v62 = vadd.f32 %v60, 1e-06
    %v63 = vrcp.pop %v61
    %v64 = vrcp.pop %v62
    %v65 = vld [vmem:[%s1] sm:$0x1]
    %v67 = vlaneseq
    %v68 = vshrl.u32 %v67, 7
    %v69 = vsub.s32 0, %v68
    %v70 = vrot.slane %v65, %v69
    %v72 = vmul.f32 %v70, %v35
    %v73 = vmul.f32 %v70, %v36
    %v74 = vmul.f32 %v72, %v63
    %v75 = vmul.f32 %v73, %v64
    %v76 = vld [vmem:[%s2] sm:$0x1]
    %v78 = vlaneseq
    %v79 = vshrl.u32 %v78, 7
    %v80 = vsub.s32 0, %v79
    %v81 = vrot.slane %v76, %v80
    %v83 = vadd.f32 %v74, %v81
    %v84 = vadd.f32 %v75, %v81
    %v85 = vpack.c.bf16 %v84, %v83
    %v86 = vld [vmem:[%s3] sm:$0xf]
    %v87 = vld [vmem:[%s3 + $0x4] sm:$0xf]
    %v88 = vld [vmem:[%s3 + $0x8] sm:$0xf]
    %v89 = vld [vmem:[%s3 + $0xc] sm:$0xf]
    %v90 = vld [vmem:[%s3 + $0x10] sm:$0xf]
    %v91 = vld [vmem:[%s3 + $0x14] sm:$0xf]
    %v92 = vld [vmem:[%s3 + $0x18] sm:$0xf]
    %v93 = vld [vmem:[%s3 + $0x1c] sm:$0xf]
    %v94 = vld [vmem:[%s3 + $0x20] sm:$0xf]
    %v95 = vld [vmem:[%s3 + $0x24] sm:$0xf]
    %v96 = vld [vmem:[%s3 + $0x28] sm:$0xf]
    %v97 = vld [vmem:[%s3 + $0x2c] sm:$0xf]
    %v98 = vld [vmem:[%s3 + $0x30] sm:$0xf]
    %v99 = vld [vmem:[%s3 + $0x34] sm:$0xf]
    %v100 = vld [vmem:[%s3 + $0x38] sm:$0xf]
    %v101 = vld [vmem:[%s3 + $0x3c] sm:$0xf]
    %v102 = vld [vmem:[%s4] sm:$0x1]
    %v104 = vlaneseq
    %v105 = vshrl.u32 %v104, 7
    %v106 = vsub.s32 0, %v105
    %v107 = vrot.slane %v102, %v106
    %v125 = vunpack.c.l.b16 %v86
    %v126 = vunpack.c.l.b16 %v87
    %v127 = vunpack.c.l.b16 %v88
    %v128 = vunpack.c.l.b16 %v89
    %v129 = vunpack.c.l.b16 %v90
    %v130 = vunpack.c.l.b16 %v91
    %v131 = vunpack.c.l.b16 %v92
    %v132 = vunpack.c.l.b16 %v93
    %v133 = vunpack.c.l.b16 %v94
    %v134 = vunpack.c.l.b16 %v95
    %v135 = vunpack.c.l.b16 %v96
    %v136 = vunpack.c.l.b16 %v97
    %v137 = vunpack.c.l.b16 %v98
    %v138 = vunpack.c.l.b16 %v99
    %v139 = vunpack.c.l.b16 %v100
    %v140 = vunpack.c.l.b16 %v101
    %v141 = vpack.c.b16 %v126, %v125
    %v142 = vpack.c.b16 %v128, %v127
    %v143 = vpack.c.b16 %v130, %v129
    %v144 = vpack.c.b16 %v132, %v131
    %v145 = vpack.c.b16 %v134, %v133
    %v146 = vpack.c.b16 %v136, %v135
    %v147 = vpack.c.b16 %v138, %v137
    %v148 = vpack.c.b16 %v140, %v139
    %157 = vmatprep.subr.bf16.mxu0 0
    %158 = vmatpush1.bf16.msra.mxu0 %v141
    %159 = vmatprep.subr.bf16.mxu0 0
    %160 = vmatpush1.bf16.msra.mxu0 %v142
    %161 = vmatprep.subr.bf16.mxu0 0
    %162 = vmatpush1.bf16.msra.mxu0 %v143
    %163 = vmatprep.subr.bf16.mxu0 0
    %164 = vmatpush1.bf16.msra.mxu0 %v144
    %165 = vmatprep.subr.bf16.mxu0 0
    %166 = vmatpush1.bf16.msra.mxu0 %v145
    %167 = vmatprep.subr.bf16.mxu0 0
    %168 = vmatpush1.bf16.msra.mxu0 %v146
    %169 = vmatprep.subr.bf16.mxu0 0
    %170 = vmatpush1.bf16.msra.mxu0 %v147
    %171 = vmatprep.subr.bf16.mxu0 0
    %172 = vmatpush1.bf16.msra.mxu0 %v148
    %173 = vmatprep.subr.bf16.mxu0 0
    %174 = vmatpush1.bf16.msra.mxu0 0
    %175 = vmatprep.subr.bf16.mxu0 0
    %176 = vmatpush1.bf16.msra.mxu0 0
    %177 = vmatprep.subr.bf16.mxu0 0
    %178 = vmatpush1.bf16.msra.mxu0 0
    %179 = vmatprep.subr.bf16.mxu0 0
    %180 = vmatpush1.bf16.msra.mxu0 0
    %181 = vmatprep.subr.bf16.mxu0 0
    %182 = vmatpush1.bf16.msra.mxu0 0
    %183 = vmatprep.subr.bf16.mxu0 0
    %184 = vmatpush1.bf16.msra.mxu0 0
    %185 = vmatprep.subr.bf16.mxu0 0
    %186 = vmatpush1.bf16.msra.mxu0 0
    %187 = vmatprep.subr.bf16.mxu0 0
    %188 = vmatpush1.bf16.msra.mxu0 0
    %189 = vmatprep.mubr.bf16.mxu0 0
    %190 = vmatmul.mubr.bf16.gmra.mrb[0].mxu0 %v85
    %v191 = vpop.f32.mrb[0].mxu0
    %v192 = vadd.f32 %v107, %v191
    %v193 = vpop.f32.mrb[0].mxu0
    %v194 = vpop.f32.mrb[0].mxu0
    %v195 = vadd.f32 %v107, %v194
    %v196 = vpop.f32.mrb[0].mxu0
    %197 = vdwg.mxu0
    %198 = vst [vmem:[#allocation2] sm:$0xff] %v192
    %199 = vst [vmem:[#allocation2 + $0x8] sm:$0xff] %v195
    // Predicated region
    $region22: #{transformer_forward.51} parent=1 // pred_check
      _
    $region23: #{transformer_forward.51} parent=1 // pred_check_branch
      %201 = sbr.rel (0) target = $region25
    $region24: #{transformer_forward.51} parent=1 // pred_region
      %s203 = ssub.s32 256, 256
      %204 = vsyncadd [#allocation3], %s203
      %s205 = sshll.u32 [#allocation2], 4
      %s206 = int_to_ptr.vmem [resolvable:$true] %s205
      %211 = dma.vmem_to_hbm [thread:$0]  %s206, 256, %s5, [#allocation3], 128, 128, 8
    $region25: #{transformer_forward.51} parent=1 // pred_fallthru
      _
    // Predicated region
    $region26: #{transformer_forward.51} parent=1 // pred_check
      _
    $region27: #{transformer_forward.51} parent=1 // pred_check_branch
      %213 = sbr.rel (0) target = $region29
    $region28: #{transformer_forward.51} parent=1 // pred_region
      %214 = dma.done [#allocation3], 256
    $region29: #{transformer_forward.51} parent=1 // pred_fallthru
      _
    %215 = vsyncpa [#allocation3], 1

// kernel: transformer_forward.40
$region0: #{transformer_forward.40}
  #allocation0 [shape = 'u32[]', space=smem, size = 0x4, offset = 0x4, fixed_abs, tag = 'smem constant byte address 0x4 - core index']
  #allocation1 [shape = 'u32[144,128]{1,0:T(1,128)}', space=vmem, size = 0x12000, scoped, tag = 'internal scratch']
  #allocation2 [shape = 'f32[1,8,1]{2,1,0:T(8,128)}', space=vmem, size = 0x1000, scoped, tag = 'scratch operand']
  #allocation3 [shape = 'f32[1,8,1]{2,1,0:T(8,128)}', space=vmem, size = 0x1000, scoped, tag = 'scratch operand']
  #allocation4 [shape = 'f32[1,8,128]{2,1,0:T(8,128)}', space=vmem, size = 0x1000, scoped, tag = 'scratch operand']
  %s0 = inlined_call_operand.vmem [shape: f32[2,8,512], index: 0, kind: input, shape index: {}]
  %s1 = inlined_call_operand.vmem [shape: f32[2,8,1024], index: 1, kind: input, shape index: {}, may-alias: {1,2}]
  %s2 = inlined_call_operand.vmem [shape: f32[2,8,1024], index: 2, kind: input, shape index: {}, may-alias: {1,2}]
  %s3 = inlined_call_operand.vmem [shape: f32[2,1,8], index: 3, kind: input, shape index: {}]
  %s4 = inlined_call_operand.vmem [shape: f32[2,8,512], index: 4, kind: output, shape index: {}]
  %s5 = sld [smem:[#allocation0]]
  $region57: #{transformer_forward.40} parent=0
    _
  %s7 = ssub.s32 1, %s5
  %s8 = scalar_select 0, %s7, %s5
  loop: start=0, step=1, limit=10
  $region2: #{transformer_forward.40} parent=0 // loop_pre_header
    _
  $region3: #{transformer_forward.40} parent=0 // loop_header
    %s10 = sphi 0, %s14
    %p11 = scmp.ge.s32.totalorder %s10, 10
    %s17 = sphi 0, %s43
    %s18 = sphi 0, %s39
    %s19 = sphi 0, %s35
    %s20 = sphi 0, %s31
    %s21 = sphi 0, %s17
    %s22 = sphi 0, %s18
    %s23 = sphi 0, %s19
    %s24 = sphi 0, %s20
    %s25 = sphi 0, %s21
    %s26 = sphi 0, %s22
    %s27 = sphi 0, %s23
    %s28 = sphi 0, %s24
    %s50 = sphi 0, %s52
    %s53 = sphi 0, %s50
    %s54 = sphi 0, %s53
    %s70 = sphi 0, %s54
    %s80 = sphi 0, %s82
    %s83 = sphi 0, %s80
    %s84 = sphi 0, %s83
    %s100 = sphi 0, %s84
    %s112 = sphi 0, %s114
    %s115 = sphi 0, %s112
    %s116 = sphi 0, %s115
    %s132 = sphi 0, %s116
    %s140 = sphi 0, %s142
    %s143 = sphi 0, %s140
    %s144 = sphi 0, %s143
    %s160 = sphi 0, %s144
    %s170 = sphi 0, %s172
    %s173 = sphi 0, %s170
    %s174 = sphi 0, %s173
    %s190 = sphi 0, %s174
  $region4: #{transformer_forward.40} parent=0 // loop_header_branch
    %13 = sbr.rel (%p11) target = $region8
  $region5: #{transformer_forward.40} parent=0 // loop_body
    %s15 = ssub.s32 %s10, 1
    %s16 = ssub.s32 %s10, 2
    %s29 = sadd.s32 1, %s20
    %p30 = scmp.ge.s32.totalorder %s29, 1
    %s31 = scalar_select %p30, 0, %s29
    %s32 = sadd.s32 1, %s19
    %s33 = scalar_select %p30, %s32, %s19
    %p34 = scmp.ge.s32.totalorder %s33, 1
    %s35 = scalar_select %p34, 0, %s33
    %s36 = sadd.s32 1, %s18
    %s37 = scalar_select %p34, %s36, %s18
    %p38 = scmp.ge.s32.totalorder %s37, 4
    %s39 = scalar_select %p38, 0, %s37
    %s40 = sadd.s32 1, %s17
    %s41 = scalar_select %p38, %s40, %s17
    %p42 = scmp.ge.s32.totalorder %s41, 2
    %s43 = scalar_select %p42, 0, %s41
    %s44 = ssub.s32 %s17, %s43
    %s45 = ssub.s32 %s19, %s35
    %s46 = sor.u32 %s44, %s45
    %s47 = ssub.s32 %s18, %s39
    %s48 = sor.u32 %s46, %s47
    %p49 = scmp.eq.s32.totalorder %s48, 0
    %s51 = sadd.s32 %s50, 1
    %s52 = scalar_select %p49, %s50, %s51
    %p55 = pneg %p49
    %p56 = scmp.eq.s32.totalorder %s10, 7
    %p57 = por %p55, %p56
    %p58 = scmp.ne.s32.totalorder %s50, %s53
    %p59 = scmp.eq.s32.totalorder %s10, 0
    %p60 = por %p58, %p59
    %p61 = scmp.ne.s32.totalorder %s50, %s53
    %p62 = scmp.eq.s32.totalorder %s15, 7
    %p63 = por %p61, %p62
    %p64 = scmp.ne.s32.totalorder %s53, %s54
    %p65 = scmp.eq.s32.totalorder %s15, 0
    %p66 = por %p64, %p65
    %p67 = scmp.ne.s32.totalorder %s53, %s54
    %p68 = scmp.eq.s32.totalorder %s16, 7
    %p69 = por %p67, %p68
    %p71 = scmp.ne.s32.totalorder %s54, %s70
    %p72 = scmp.eq.s32.totalorder %s16, 0
    %p73 = por %p71, %p72
    %s74 = ssub.s32 %s17, %s43
    %s75 = ssub.s32 %s20, %s31
    %s76 = sor.u32 %s74, %s75
    %s77 = ssub.s32 %s18, %s39
    %s78 = sor.u32 %s76, %s77
    %p79 = scmp.eq.s32.totalorder %s78, 0
    %s81 = sadd.s32 %s80, 1
    %s82 = scalar_select %p79, %s80, %s81
    %p85 = pneg %p79
    %p86 = scmp.eq.s32.totalorder %s10, 7
    %p87 = por %p85, %p86
    %p88 = scmp.ne.s32.totalorder %s80, %s83
    %p89 = scmp.eq.s32.totalorder %s10, 0
    %p90 = por %p88, %p89
    %p91 = scmp.ne.s32.totalorder %s80, %s83
    %p92 = scmp.eq.s32.totalorder %s15, 7
    %p93 = por %p91, %p92
    %p94 = scmp.ne.s32.totalorder %s83, %s84
    %p95 = scmp.eq.s32.totalorder %s15, 0
    %p96 = por %p94, %p95
    %p97 = scmp.ne.s32.totalorder %s83, %s84
    %p98 = scmp.eq.s32.totalorder %s16, 7
    %p99 = por %p97, %p98
    %p101 = scmp.ne.s32.totalorder %s84, %s100
    %p102 = scmp.eq.s32.totalorder %s16, 0
    %p103 = por %p101, %p102
    %s104 = sadd.s32 %s18, 4
    %s105 = sadd.s32 %s39, 4
    %s106 = ssub.s32 %s17, %s43
    %s107 = ssub.s32 %s20, %s31
    %s108 = sor.u32 %s106, %s107
    %s109 = ssub.s32 %s104, %s105
    %s110 = sor.u32 %s108, %s109
    %p111 = scmp.eq.s32.totalorder %s110, 0
    %s113 = sadd.s32 %s112, 1
    %s114 = scalar_select %p111, %s112, %s113
    %p117 = pneg %p111
    %p118 = scmp.eq.s32.totalorder %s10, 7
    %p119 = por %p117, %p118
    %p120 = scmp.ne.s32.totalorder %s112, %s115
    %p121 = scmp.eq.s32.totalorder %s10, 0
    %p122 = por %p120, %p121
    %p123 = scmp.ne.s32.totalorder %s112, %s115
    %p124 = scmp.eq.s32.totalorder %s15, 7
    %p125 = por %p123, %p124
    %p126 = scmp.ne.s32.totalorder %s115, %s116
    %p127 = scmp.eq.s32.totalorder %s15, 0
    %p128 = por %p126, %p127
    %p129 = scmp.ne.s32.totalorder %s115, %s116
    %p130 = scmp.eq.s32.totalorder %s16, 7
    %p131 = por %p129, %p130
    %p133 = scmp.ne.s32.totalorder %s116, %s132
    %p134 = scmp.eq.s32.totalorder %s16, 0
    %p135 = por %p133, %p134
    %s136 = ssub.s32 %s17, %s43
    %s137 = ssub.s32 %s20, %s31
    %s138 = sor.u32 %s136, %s137
    %p139 = scmp.eq.s32.totalorder %s138, 0
    %s141 = sadd.s32 %s140, 1
    %s142 = scalar_select %p139, %s140, %s141
    %p145 = pneg %p139
    %p146 = scmp.eq.s32.totalorder %s10, 7
    %p147 = por %p145, %p146
    %p148 = scmp.ne.s32.totalorder %s140, %s143
    %p149 = scmp.eq.s32.totalorder %s10, 0
    %p150 = por %p148, %p149
    %p151 = scmp.ne.s32.totalorder %s140, %s143
    %p152 = scmp.eq.s32.totalorder %s15, 7
    %p153 = por %p151, %p152
    %p154 = scmp.ne.s32.totalorder %s143, %s144
    %p155 = scmp.eq.s32.totalorder %s15, 0
    %p156 = por %p154, %p155
    %p157 = scmp.ne.s32.totalorder %s143, %s144
    %p158 = scmp.eq.s32.totalorder %s16, 7
    %p159 = por %p157, %p158
    %p161 = scmp.ne.s32.totalorder %s144, %s160
    %p162 = scmp.eq.s32.totalorder %s16, 0
    %p163 = por %p161, %p162
    %s164 = ssub.s32 %s17, %s43
    %s165 = ssub.s32 %s19, %s35
    %s166 = sor.u32 %s164, %s165
    %s167 = ssub.s32 %s18, %s39
    %s168 = sor.u32 %s166, %s167
    %p169 = scmp.eq.s32.totalorder %s168, 0
    %s171 = sadd.s32 %s170, 1
    %s172 = scalar_select %p169, %s170, %s171
    %p175 = pneg %p169
    %p176 = scmp.eq.s32.totalorder %s10, 7
    %p177 = por %p175, %p176
    %p178 = scmp.ne.s32.totalorder %s170, %s173
    %p179 = scmp.eq.s32.totalorder %s10, 0
    %p180 = por %p178, %p179
    %p181 = scmp.ne.s32.totalorder %s170, %s173
    %p182 = scmp.eq.s32.totalorder %s15, 7
    %p183 = por %p181, %p182
    %p184 = scmp.ne.s32.totalorder %s173, %s174
    %p185 = scmp.eq.s32.totalorder %s15, 0
    %p186 = por %p184, %p185
    %p187 = scmp.ne.s32.totalorder %s173, %s174
    %p188 = scmp.eq.s32.totalorder %s16, 7
    %p189 = por %p187, %p188
    %p191 = scmp.ne.s32.totalorder %s174, %s190
    %p192 = scmp.eq.s32.totalorder %s16, 0
    %p193 = por %p191, %p192
    %p194 = scmp.le.s32.totalorder 1, %s10
    %p195 = scmp.lt.s32.totalorder %s10, 9
    %p196 = pnand %p194, %p195
    %p197 = pneg %p196
    // Predicated region
    $region9: #{transformer_forward.40} parent=5 // pred_check
      _
    $region10: #{transformer_forward.40} parent=5 // pred_check_branch
      %199 = sbr.rel (%p196) target = $region12
    $region11: #{transformer_forward.40} parent=5 // pred_region
      %s200 = ssub.s32 %s10, 1
    $region12: #{transformer_forward.40} parent=5 // pred_fallthru
      _
    %p201 = scmp.lt.s32.totalorder %s10, 8
    // Predicated region
    $region13: #{transformer_forward.40} parent=5 // pred_check
      %p202 = pneg %p201
    $region14: #{transformer_forward.40} parent=5 // pred_check_branch
      %204 = sbr.rel (%p202) target = $region16
    $region15: #{transformer_forward.40} parent=5 // pred_region
      // Predicated region
      $region17: #{transformer_forward.40} parent=15 // pred_check
        %p205 = pneg %p60
      $region18: #{transformer_forward.40} parent=15 // pred_check_branch
        %207 = sbr.rel (%p205) target = $region20
      $region19: #{transformer_forward.40} parent=15 // pred_region
        %p208 = scmp.lt.s32.totalorder %s17, 1
        %s209 = scalar_select %p208, %s17, 1
        %p210 = scmp.lt.s32.totalorder %s19, 0
        %s211 = scalar_select %p210, %s19, 0
        %p212 = scmp.lt.s32.totalorder %s18, 3
        %s213 = scalar_select %p212, %s18, 3
        %s214 = smul.addr %s211, 4
        %s215 = sadd.s32 %s213, %s214
        %s216 = smul.addr %s209, 4
        %s217 = sadd.s32 %s215, %s216
        %s218 = smul.addr %s217, 8
        %s219 = scalar_lea.vmem %s0, %s218
      $region20: #{transformer_forward.40} parent=15 // pred_fallthru
        _
      // Predicated region
      $region21: #{transformer_forward.40} parent=15 // pred_check
        %p220 = pneg %p90
      $region22: #{transformer_forward.40} parent=15 // pred_check_branch
        %222 = sbr.rel (%p220) target = $region24
      $region23: #{transformer_forward.40} parent=15 // pred_region
        %p223 = scmp.lt.s32.totalorder %s17, 1
        %s224 = scalar_select %p223, %s17, 1
        %p225 = scmp.lt.s32.totalorder %s20, 0
        %s226 = scalar_select %p225, %s20, 0
        %p227 = scmp.lt.s32.totalorder %s18, 7
        %s228 = scalar_select %p227, %s18, 7
        %s229 = smul.addr %s226, 8
        %s230 = sadd.s32 %s228, %s229
        %s231 = smul.addr %s224, 8
        %s232 = sadd.s32 %s230, %s231
        %s233 = smul.addr %s232, 8
        %s234 = scalar_lea.vmem %s1, %s233
      $region24: #{transformer_forward.40} parent=15 // pred_fallthru
        _
      // Predicated region
      $region25: #{transformer_forward.40} parent=15 // pred_check
        %p235 = pneg %p122
      $region26: #{transformer_forward.40} parent=15 // pred_check_branch
        %237 = sbr.rel (%p235) target = $region28
      $region27: #{transformer_forward.40} parent=15 // pred_region
        %s238 = sadd.s32 %s18, 4
        %p239 = scmp.lt.s32.totalorder %s17, 1
        %s240 = scalar_select %p239, %s17, 1
        %p241 = scmp.lt.s32.totalorder %s20, 0
        %s242 = scalar_select %p241, %s20, 0
        %p243 = scmp.lt.s32.totalorder %s238, 7
        %s244 = scalar_select %p243, %s238, 7
        %s245 = smul.addr %s242, 8
        %s246 = sadd.s32 %s244, %s245
        %s247 = smul.addr %s240, 8
        %s248 = sadd.s32 %s246, %s247
        %s249 = smul.addr %s248, 8
        %s250 = scalar_lea.vmem %s2, %s249
        %s251 = sadd.s32 %s18, 4
      $region28: #{transformer_forward.40} parent=15 // pred_fallthru
        _
      // Predicated region
      $region29: #{transformer_forward.40} parent=15 // pred_check
        %p252 = pneg %p150
      $region30: #{transformer_forward.40} parent=15 // pred_check_branch
        %254 = sbr.rel (%p252) target = $region32
      $region31: #{transformer_forward.40} parent=15 // pred_region
        %p255 = scmp.lt.s32.totalorder %s17, 1
        %s256 = scalar_select %p255, %s17, 1
        %p257 = scmp.lt.s32.totalorder %s20, 0
        %s258 = scalar_select %p257, %s20, 0
        %s259 = sadd.s32 %s258, %s256
        %s260 = scalar_lea.vmem %s3, %s259
      $region32: #{transformer_forward.40} parent=15 // pred_fallthru
        _
    $region16: #{transformer_forward.40} parent=5 // pred_fallthru
      _
    %p261 = scmp.le.s32.totalorder 1, %s10
    %p262 = scmp.lt.s32.totalorder %s10, 9
    %p263 = pnand %p261, %p262
    %p264 = pneg %p263
    // Predicated region
    $region33: #{transformer_forward.40} parent=5 // pred_check
      _
    $region34: #{transformer_forward.40} parent=5 // pred_check_branch
      %266 = sbr.rel (%p263) target = $region36
    $region35: #{transformer_forward.40} parent=5 // pred_region
      %s267 = ssub.s32 %s10, 1
      %p268 = scmp.lt.s32.totalorder %s21, 1
      %s269 = scalar_select %p268, %s21, 1
      %p270 = scmp.lt.s32.totalorder %s23, 0
      %s271 = scalar_select %p270, %s23, 0
      %p272 = scmp.lt.s32.totalorder %s22, 3
      %s273 = scalar_select %p272, %s22, 3
      %s274 = smul.addr %s271, 4
      %s275 = sadd.s32 %s273, %s274
      %s276 = smul.addr %s269, 4
      %s277 = sadd.s32 %s275, %s276
      %s278 = smul.addr %s277, 8
      %s279 = scalar_lea.vmem %s0, %s278
      %p280 = pneg %p66
      %p281 = pneg %p63
      %p282 = scmp.lt.s32.totalorder %s21, 1
      %s283 = scalar_select %p282, %s21, 1
      %p284 = scmp.lt.s32.totalorder %s24, 0
      %s285 = scalar_select %p284, %s24, 0
      %p286 = scmp.lt.s32.totalorder %s22, 7
      %s287 = scalar_select %p286, %s22, 7
      %s288 = smul.addr %s285, 8
      %s289 = sadd.s32 %s287, %s288
      %s290 = smul.addr %s283, 8
      %s291 = sadd.s32 %s289, %s290
      %s292 = smul.addr %s291, 8
      %s293 = scalar_lea.vmem %s1, %s292
      %p294 = pneg %p96
      %p295 = pneg %p93
      %s296 = sadd.s32 %s22, 4
      %p297 = scmp.lt.s32.totalorder %s21, 1
      %s298 = scalar_select %p297, %s21, 1
      %p299 = scmp.lt.s32.totalorder %s24, 0
      %s300 = scalar_select %p299, %s24, 0
      %p301 = scmp.lt.s32.totalorder %s296, 7
      %s302 = scalar_select %p301, %s296, 7
      %s303 = smul.addr %s300, 8
      %s304 = sadd.s32 %s302, %s303
      %s305 = smul.addr %s298, 8
      %s306 = sadd.s32 %s304, %s305
      %s307 = smul.addr %s306, 8
      %s308 = scalar_lea.vmem %s2, %s307
      %p309 = pneg %p128
      %p310 = pneg %p125
      %p311 = scmp.lt.s32.totalorder %s21, 1
      %s312 = scalar_select %p311, %s21, 1
      %p313 = scmp.lt.s32.totalorder %s24, 0
      %s314 = scalar_select %p313, %s24, 0
      %s315 = sadd.s32 %s314, %s312
      %s316 = scalar_lea.vmem %s3, %s315
      %p317 = pneg %p156
      %p318 = pneg %p153
      %p319 = pneg %p186
      %p320 = pneg %p183
      %p321 = scmp.lt.s32.totalorder %s21, 1
      %s322 = scalar_select %p321, %s21, 1
      %p323 = scmp.lt.s32.totalorder %s23, 0
      %s324 = scalar_select %p323, %s23, 0
      %p325 = scmp.lt.s32.totalorder %s22, 3
      %s326 = scalar_select %p325, %s22, 3
      %s327 = smul.addr %s324, 4
      %s328 = sadd.s32 %s326, %s327
      %s329 = smul.addr %s322, 4
      %s330 = sadd.s32 %s328, %s329
      %s331 = smul.addr %s330, 8
      %s332 = scalar_lea.vmem %s4, %s331
      %p333 = scmp.lt.s32.totalorder %s21, 1
      %s334 = scalar_select %p333, %s21, 1
      %p335 = scmp.lt.s32.totalorder %s23, 0
      %s336 = scalar_select %p335, %s23, 0
      %p337 = scmp.lt.s32.totalorder %s22, 3
      %s338 = scalar_select %p337, %s22, 3
      %s339 = smul.addr %s336, 4
      %s340 = sadd.s32 %s338, %s339
      %s341 = smul.addr %s334, 4
      %s342 = sadd.s32 %s340, %s341
      %s343 = smul.addr %s342, 8
      %s344 = scalar_lea.vmem %s0, %s343
      %p345 = scmp.lt.s32.totalorder %s21, 1
      %s346 = scalar_select %p345, %s21, 1
      %p347 = scmp.lt.s32.totalorder %s24, 0
      %s348 = scalar_select %p347, %s24, 0
      %p349 = scmp.lt.s32.totalorder %s22, 7
      %s350 = scalar_select %p349, %s22, 7
      %s351 = smul.addr %s348, 8
      %s352 = sadd.s32 %s350, %s351
      %s353 = smul.addr %s346, 8
      %s354 = sadd.s32 %s352, %s353
      %s355 = smul.addr %s354, 8
      %s356 = scalar_lea.vmem %s1, %s355
      %s357 = sadd.s32 %s22, 4
      %p358 = scmp.lt.s32.totalorder %s21, 1
      %s359 = scalar_select %p358, %s21, 1
      %p360 = scmp.lt.s32.totalorder %s24, 0
      %s361 = scalar_select %p360, %s24, 0
      %p362 = scmp.lt.s32.totalorder %s357, 7
      %s363 = scalar_select %p362, %s357, 7
      %s364 = smul.addr %s361, 8
      %s365 = sadd.s32 %s363, %s364
      %s366 = smul.addr %s359, 8
      %s367 = sadd.s32 %s365, %s366
      %s368 = smul.addr %s367, 8
      %s369 = scalar_lea.vmem %s2, %s368
      %s370 = sadd.s32 %s22, 4
      %p371 = scmp.lt.s32.totalorder %s21, 1
      %s372 = scalar_select %p371, %s21, 1
      %p373 = scmp.lt.s32.totalorder %s24, 0
      %s374 = scalar_select %p373, %s24, 0
      %s375 = sadd.s32 %s374, %s372
      %s376 = scalar_lea.vmem %s3, %s375
      %p377 = scmp.lt.s32.totalorder %s21, 1
      %s378 = scalar_select %p377, %s21, 1
      %p379 = scmp.lt.s32.totalorder %s23, 0
      %s380 = scalar_select %p379, %s23, 0
      %p381 = scmp.lt.s32.totalorder %s22, 3
      %s382 = scalar_select %p381, %s22, 3
      %s383 = smul.addr %s380, 4
      %s384 = sadd.s32 %s382, %s383
      %s385 = smul.addr %s378, 4
      %s386 = sadd.s32 %s384, %s385
      %s387 = smul.addr %s386, 8
      %s388 = scalar_lea.vmem %s4, %s387
      %p390 = scmp.eq.s32.totalorder %s24, 0
      // Predicated region
      $region37: #{transformer_forward.40} parent=35 // pred_check
        %p391 = pneg %p390
      $region38: #{transformer_forward.40} parent=35 // pred_check_branch
        %393 = sbr.rel (%p391) target = $region40
      $region39: #{transformer_forward.40} parent=35 // pred_region
        %vm394 = vcmask 7168
        %395 = vst.msk [vmem:[#allocation2] sm:$0xff] %vm394, -inf
        %396 = vst.msk [vmem:[#allocation3] sm:$0xff] %vm394, 0.0
        %397 = vst [vmem:[#allocation4] sm:$0xff] 0.0
      $region40: #{transformer_forward.40} parent=35 // pred_fallthru
        _
      %v398 = vld [vmem:[%s344] sm:$0xff]
      %v399 = vmul.f32 %v398, 0.35355338
      %v400 = vpack.c.bf16 %v399, %v399
      %v401 = vld [vmem:[%s356] sm:$0xff]
      %v402 = vpack.c.bf16 %v401, %v401
      %v403 = vld [vmem:[%s376] sm:$0x1]
      %v405 = vlaneseq
      %v406 = vshrl.u32 %v405, 7
      %v407 = vsub.s32 0, %v406
      %v408 = vrot.slane %v403, %v407
      %410 = vmatprep.subr.bf16.mxu0 0
      %411 = vmatpush1.bf16.xpose.msra.mxu0 %v402
      %412 = vmatprep.subr.bf16.mxu0 0
      %413 = vmatpush1.bf16.xpose.msra.mxu0 0
      %414 = vmatprep.subr.bf16.mxu0 0
      %415 = vmatpush1.bf16.xpose.msra.mxu0 0
      %416 = vmatprep.subr.bf16.mxu0 0
      %417 = vmatpush1.bf16.xpose.msra.mxu0 0
      %418 = vmatprep.subr.bf16.mxu0 0
      %419 = vmatpush1.bf16.xpose.msra.mxu0 0
      %420 = vmatprep.subr.bf16.mxu0 0
      %421 = vmatpush1.bf16.xpose.msra.mxu0 0
      %422 = vmatprep.subr.bf16.mxu0 0
      %423 = vmatpush1.bf16.xpose.msra.mxu0 0
      %424 = vmatprep.subr.bf16.mxu0 0
      %425 = vmatpush1.bf16.xpose.msra.mxu0 0
      %426 = vmatprep.subr.bf16.mxu0 0
      %427 = vmatpush1.bf16.xpose.msra.mxu0 0
      %428 = vmatprep.subr.bf16.mxu0 0
      %429 = vmatpush1.bf16.xpose.msra.mxu0 0
      %430 = vmatprep.subr.bf16.mxu0 0
      %431 = vmatpush1.bf16.xpose.msra.mxu0 0
      %432 = vmatprep.subr.bf16.mxu0 0
      %433 = vmatpush1.bf16.xpose.msra.mxu0 0
      %434 = vmatprep.subr.bf16.mxu0 0
      %435 = vmatpush1.bf16.xpose.msra.mxu0 0
      %436 = vmatprep.subr.bf16.mxu0 0
      %437 = vmatpush1.bf16.xpose.msra.mxu0 0
      %438 = vmatprep.subr.bf16.mxu0 0
      %439 = vmatpush1.bf16.xpose.msra.mxu0 0
      %440 = vmatprep.subr.bf16.mxu0 0
      %441 = vmatpush1.bf16.xpose.msra.mxu0 0
      %442 = vmatprep.mubr.bf16.mxu0 0
      %443 = vmatmul.mubr.bf16.gmra.mrb[0].mxu0 %v400
      %v444 = vpop.f32.mrb[0].mxu0
      %v445 = vadd.f32 %v408, %v444
      %v446 = vpop.f32.mrb[0].mxu0
      %v447 = vpop.f32.mrb[0].mxu0
      %v448 = vpop.f32.mrb[0].mxu0
      %449 = vdwg.mxu0
      %v450 = vld [vmem:[#allocation2] sm:$0xff]
      %vm451 = vcmask 64512
      %v452 = vsel %vm451, %v445, -inf
      %453 = vmax.xlane.f32.xlu0 %v452
      %v454 = vpop.xlane.xlu0 %453
      %v455 = vmax.f32 %v450, %v454
      %v456 = vsub.f32 %v450, %v455
      %v457 = vmul.f32 %v456, 1.442695
      %v458 = vpow.pop %v457
      %460 = vset.pattern.permute.xlu0 0
      %461 = vperm.xlu0 %460, %v455
      %v462 = vpop.permute.xlu0 %461
      %v464 = vsub.f32 %v445, %v462
      %v465 = vmul.f32 %v464, 1.442695
      %v466 = vpow.pop %v465
      %v467 = vld [vmem:[#allocation3] sm:$0xff]
      %v468 = vmul.f32 %v458, %v467
      %v469 = vsel %vm451, %v466, 0.0
      %470 = vadd.xlane.f32.xlu0 %v469
      %v471 = vpop.xlane.xlu0 %470
      %v472 = vadd.f32 %v468, %v471
      %vm473 = vcmask 7168
      %474 = vst.msk [vmem:[#allocation3] sm:$0xff] %vm473, %v472
      %v475 = vld [vmem:[#allocation4] sm:$0xff]
      %477 = vset.pattern.permute.xlu0 0
      %478 = vperm.xlu0 %477, %v458
      %v479 = vpop.permute.xlu0 %478
      %v481 = vmul.f32 %v479, %v475
      %v482 = vpack.c.bf16 %v466, %v466
      %v483 = vld [vmem:[%s369] sm:$0xff]
      %v484 = vpack.c.bf16 %v483, %v483
      %v486 = vsel %vm451, %v482, 0
      %vm488 = vcmask 1043456
      %v490 = vsel %vm488, %v484, 0
      %492 = vmatprep.subr.bf16.mxu0 0
      %493 = vmatpush1.bf16.msra.mxu0 %v490
      %494 = vmatprep.subr.bf16.mxu0 0
      %495 = vmatpush1.bf16.msra.mxu0 0
      %496 = vmatprep.subr.bf16.mxu0 0
      %497 = vmatpush1.bf16.msra.mxu0 0
      %498 = vmatprep.subr.bf16.mxu0 0
      %499 = vmatpush1.bf16.msra.mxu0 0
      %500 = vmatprep.subr.bf16.mxu0 0
      %501 = vmatpush1.bf16.msra.mxu0 0
      %502 = vmatprep.subr.bf16.mxu0 0
      %503 = vmatpush1.bf16.msra.mxu0 0
      %504 = vmatprep.subr.bf16.mxu0 0
      %505 = vmatpush1.bf16.msra.mxu0 0
      %506 = vmatprep.subr.bf16.mxu0 0
      %507 = vmatpush1.bf16.msra.mxu0 0
      %508 = vmatprep.subr.bf16.mxu0 0
      %509 = vmatpush1.bf16.msra.mxu0 0
      %510 = vmatprep.subr.bf16.mxu0 0
      %511 = vmatpush1.bf16.msra.mxu0 0
      %512 = vmatprep.subr.bf16.mxu0 0
      %513 = vmatpush1.bf16.msra.mxu0 0
      %514 = vmatprep.subr.bf16.mxu0 0
      %515 = vmatpush1.bf16.msra.mxu0 0
      %516 = vmatprep.subr.bf16.mxu0 0
      %517 = vmatpush1.bf16.msra.mxu0 0
      %518 = vmatprep.subr.bf16.mxu0 0
      %519 = vmatpush1.bf16.msra.mxu0 0
      %520 = vmatprep.subr.bf16.mxu0 0
      %521 = vmatpush1.bf16.msra.mxu0 0
      %522 = vmatprep.subr.bf16.mxu0 0
      %523 = vmatpush1.bf16.msra.mxu0 0
      %524 = vmatprep.mubr.bf16.mxu0 0
      %525 = vmatmul.mubr.bf16.gmra.mrb[0].mxu0 %v486
      %v526 = vpop.f32.mrb[0].mxu0
      %v527 = vadd.f32 0.0, %v526
      %v528 = vpop.f32.mrb[0].mxu0
      %v529 = vpop.f32.mrb[0].mxu0
      %v530 = vpop.f32.mrb[0].mxu0
      %531 = vdwg.mxu0
      %v532 = vadd.f32 %v481, %v527
      %533 = vst [vmem:[#allocation4] sm:$0xff] %v532
      %534 = vst.msk [vmem:[#allocation2] sm:$0xff] %vm473, %v455
      // Predicated region
      $region41: #{transformer_forward.40} parent=35 // pred_check
        %p535 = pneg %p390
      $region42: #{transformer_forward.40} parent=35 // pred_check_branch
        %537 = sbr.rel (%p535) target = $region44
      $region43: #{transformer_forward.40} parent=35 // pred_region
        %v538 = vld [vmem:[#allocation4] sm:$0xff]
        %v539 = vld [vmem:[#allocation3] sm:$0xff]
        %v540 = vrcp.pop %v539
        %542 = vset.pattern.permute.xlu0 0
        %543 = vperm.xlu0 %542, %v540
        %v544 = vpop.permute.xlu0 %543
        %v546 = vmul.f32 %v538, %v544
        %547 = vst [vmem:[%s388] sm:$0xff] %v546
      $region44: #{transformer_forward.40} parent=35 // pred_fallthru
        _
      %p548 = scmp.lt.s32.totalorder %s21, 1
      %s549 = scalar_select %p548, %s21, 1
      %p550 = scmp.lt.s32.totalorder %s23, 0
      %s551 = scalar_select %p550, %s23, 0
      %p552 = scmp.lt.s32.totalorder %s22, 3
      %s553 = scalar_select %p552, %s22, 3
      %s554 = smul.addr %s551, 4
      %s555 = sadd.s32 %s553, %s554
      %s556 = smul.addr %s549, 4
      %s557 = sadd.s32 %s555, %s556
      %s558 = smul.addr %s557, 8
      %s559 = scalar_lea.vmem %s4, %s558
      // Predicated region
      $region45: #{transformer_forward.40} parent=35 // pred_check
        %p560 = pneg %p183
      $region46: #{transformer_forward.40} parent=35 // pred_check_branch
        %562 = sbr.rel (%p560) target = $region48
      $region47: #{transformer_forward.40} parent=35 // pred_region
        _
      $region48: #{transformer_forward.40} parent=35 // pred_fallthru
        _
    $region36: #{transformer_forward.40} parent=5 // pred_fallthru
      _
    %p563 = scmp.le.s32.totalorder 2, %s10
    // Predicated region
    $region49: #{transformer_forward.40} parent=5 // pred_check
      %p564 = pneg %p563
    $region50: #{transformer_forward.40} parent=5 // pred_check_branch
      %566 = sbr.rel (%p564) target = $region52
    $region51: #{transformer_forward.40} parent=5 // pred_region
      %s567 = ssub.s32 %s10, 2
      // Predicated region
      $region53: #{transformer_forward.40} parent=51 // pred_check
        %p568 = pneg %p189
      $region54: #{transformer_forward.40} parent=51 // pred_check_branch
        %570 = sbr.rel (%p568) target = $region56
      $region55: #{transformer_forward.40} parent=51 // pred_region
        %p571 = scmp.lt.s32.totalorder %s25, 1
        %s572 = scalar_select %p571, %s25, 1
        %p573 = scmp.lt.s32.totalorder %s27, 0
        %s574 = scalar_select %p573, %s27, 0
        %p575 = scmp.lt.s32.totalorder %s26, 3
        %s576 = scalar_select %p575, %s26, 3
        %s577 = smul.addr %s574, 4
        %s578 = sadd.s32 %s576, %s577
        %s579 = smul.addr %s572, 4
        %s580 = sadd.s32 %s578, %s579
        %s581 = smul.addr %s580, 8
        %s582 = scalar_lea.vmem %s4, %s581
      $region56: #{transformer_forward.40} parent=51 // pred_fallthru
        _
    $region52: #{transformer_forward.40} parent=5 // pred_fallthru
      _
  $region6: #{transformer_forward.40} parent=0 // loop_footer
    %s14 = sadd.s32 1, %s10
  $region7: #{transformer_forward.40} parent=0 // loop_footer_branch
    %9 = sbr.rel target = $region3
  $region8: #{transformer_forward.40} parent=0 // loop_exit
    _

</llo_original>
